<compile_context>
chip_gen: v7x
topology: tpu7x:2x2x1
jax: 0.10.0
libtpu: 0.0.40
codegen_flags: <defaults>
</compile_context>

<pallas_src>
import functools
import numpy as np
import jax
import jax.numpy as jnp
from jax.experimental import pallas as pl
from jax.experimental.pallas import tpu as pltpu


# ---------------------------------------------------------------------------
# Host-side operator construction (plain numpy, deterministic)
# ---------------------------------------------------------------------------
def _cubic_filter(x, a=-0.5):
    x = abs(x)
    if x < 1.0:
        return ((a + 2.0) * x - (a + 3.0)) * x * x + 1.0
    if x < 2.0:
        return (((x - 5.0) * x + 8.0) * x - 4.0) * a
    return 0.0


def _resize_matrix(in_size, out_size):
    """[out_size, in_size] matrix matching F.interpolate(mode='bicubic',
    antialias=True, align_corners=False) along one axis (ATen aa algorithm)."""
    scale = in_size / out_size
    support = 2.0 * scale if scale >= 1.0 else 2.0
    invscale = 1.0 / scale if scale >= 1.0 else 1.0
    M = np.zeros((out_size, in_size), dtype=np.float64)
    for i in range(out_size):
        center = scale * (i + 0.5)
        xmin = max(int(center - support + 0.5), 0)
        xmax = min(int(center + support + 0.5), in_size)
        w = np.array([_cubic_filter((j - center + 0.5) * invscale)
                      for j in range(xmin, xmax)], dtype=np.float64)
        s = w.sum()
        if s != 0.0:
            w = w / s
        M[i, xmin:xmax] = w
    return M.astype(np.float32)


# ---------------------------------------------------------------------------
# Pallas kernel: conv1 -> up -> LeakyReLU -> down -> conv2 for one batch elem
# ---------------------------------------------------------------------------
def _lift_project_kernel(xs_ref, w1_ref, b1_ref, rup_ref, rdn_ref,
                         w2_ref, b2_ref, mask_ref, o_ref, *, flat_shifts):
    f32 = jnp.float32
    bf16 = jnp.bfloat16
    hw = xs_ref.shape[-1]
    kk = w2_ref.shape[0]
    cout = w2_ref.shape[1]

    # ---- conv1: single fused matmul over (tap, in_channel) ------------------
    # xs_ref: [9*Cin, HW] bf16 im2row slab; w1_ref: [Clat, 9*Cin] bf16
    y = jnp.dot(w1_ref[...], xs_ref[...], preferred_element_type=f32)   # [Clat, HW]
    y = y + b1_ref[...]

    # ---- bicubic antialias up x2 -> LeakyReLU(0.01) -> down back ------------
    u = jnp.dot(y.astype(bf16), rup_ref[...], preferred_element_type=f32)   # [Clat, 4HW]
    u = jnp.where(u >= 0, u, 0.01 * u)
    d = jnp.dot(u.astype(bf16), rdn_ref[...], preferred_element_type=f32)   # [Clat, HW]
    d_bf = d.astype(bf16)

    # ---- conv2: weight-then-shift (pltpu.roll + boundary mask per tap) ------
    z = jnp.zeros((cout, hw), f32)
    for t in range(kk):
        zt = jnp.dot(w2_ref[t], d_bf, preferred_element_type=f32)      # [Cout, HW]
        dflat = flat_shifts[t]
        if dflat == 0:
            z = z + zt                      # centre tap: mask is all ones
        else:
            # rolled[p] = zt[(p + dflat) mod HW]; mask zeroes wrapped positions
            zt = pltpu.roll(zt, shift=(-dflat) % hw, axis=1)
            z = z + zt * mask_ref[t]
    z = z + b2_ref[...]

    o_ref[...] = z.astype(o_ref.dtype)


# ---------------------------------------------------------------------------
# Wrapper
# ---------------------------------------------------------------------------
def lift_project_block(x, w1, b1, w2, b2):
    B, Cin, H, W = x.shape
    Clat = w1.shape[0]
    Cout = w2.shape[0]
    K = w1.shape[2]
    pad = K // 2
    KK = K * K
    HW = H * W
    HW4 = (2 * H) * (2 * W)

    # --- conv1 im2row slab: 9 zero-padded shifted copies of x (layout only) ---
    xp = jnp.pad(x, ((0, 0), (0, 0), (pad, pad), (pad, pad)))
    shifted = [xp[:, :, ki:ki + H, kj:kj + W]
               for ki in range(K) for kj in range(K)]        # each [B, Cin, H, W]
    x_stack = jnp.concatenate(shifted, axis=1)               # [B, 9*Cin, H, W]
    x_stack = x_stack.reshape(B, KK * Cin, HW).astype(jnp.bfloat16)

    # conv1 weight flattened to [Clat, 9*Cin], row order t*Cin + c, t = ki*K+kj
    w1_f = jnp.transpose(w1, (0, 2, 3, 1)).reshape(Clat, KK * Cin).astype(jnp.bfloat16)
    b1_r = b1.reshape(Clat, 1).astype(jnp.float32)

    # conv2 weights per tap: [K*K, Cout, Clat]
    w2_f = jnp.transpose(w2, (2, 3, 0, 1)).reshape(KK, Cout, Clat).astype(jnp.bfloat16)
    b2_r = b2.reshape(Cout, 1).astype(jnp.float32)

    # separable bicubic-antialias resize operators (pre-transposed, bf16)
    up = np.kron(_resize_matrix(H, 2 * H), _resize_matrix(W, 2 * W))   # [4HW, HW]
    dn = np.kron(_resize_matrix(2 * H, H), _resize_matrix(2 * W, W))   # [HW, 4HW]
    rup_t = jnp.asarray(up.T, dtype=jnp.bfloat16)                      # [HW, 4HW]
    rdn_t = jnp.asarray(dn.T, dtype=jnp.bfloat16)                      # [4HW, HW]

    # conv2 tap metadata: flattened roll offsets + boundary-validity masks
    flat_shifts = []
    masks = np.zeros((KK, 1, HW), np.float32)
    hh, ww = np.meshgrid(np.arange(H), np.arange(W), indexing="ij")
    for ki in range(K):
        for kj in range(K):
            di, dj = ki - pad, kj - pad
            t = ki * K + kj
            flat_shifts.append(di * W + dj)
            valid = (hh + di >= 0) & (hh + di < H) & (ww + dj >= 0) & (ww + dj < W)
            masks[t, 0] = valid.reshape(-1).astype(np.float32)
    masks_j = jnp.asarray(masks)                                       # [9, 1, HW]

    kernel = functools.partial(_lift_project_kernel,
                               flat_shifts=tuple(flat_shifts))

    out = pl.pallas_call(
        kernel,
        out_shape=jax.ShapeDtypeStruct((B, Cout, HW), jnp.float32),
        grid_spec=pltpu.PrefetchScalarGridSpec(
            num_scalar_prefetch=0,
            grid=(B,),
            in_specs=[
                pl.BlockSpec((None, KK * Cin, HW), lambda b: (b, 0, 0)),  # x im2row
                pl.BlockSpec((Clat, KK * Cin), lambda b: (0, 0)),         # w1
                pl.BlockSpec((Clat, 1), lambda b: (0, 0)),                # b1
                pl.BlockSpec((HW, HW4), lambda b: (0, 0)),                # up^T
                pl.BlockSpec((HW4, HW), lambda b: (0, 0)),                # down^T
                pl.BlockSpec((KK, Cout, Clat), lambda b: (0, 0, 0)),      # w2
                pl.BlockSpec((Cout, 1), lambda b: (0, 0)),                # b2
                pl.BlockSpec((KK, 1, HW), lambda b: (0, 0, 0)),           # tap masks
            ],
            out_specs=pl.BlockSpec((None, Cout, HW), lambda b: (b, 0, 0)),
        ),
        compiler_params=pltpu.CompilerParams(
            dimension_semantics=("parallel",),
        ),
    )(x_stack, w1_f, b1_r, rup_t, rdn_t, w2_f, b2_r, masks_j)

    return out.reshape(B, Cout, H, W).astype(x.dtype)


# ---------------------------------------------------------------------------
if __name__ == "__main__":
    key = jax.random.PRNGKey(0)
    B, Cin, Cout, H, W, Clat, K = 2, 4, 3, 16, 16, 64, 3

    kx, kw1, kb1, kw2, kb2 = jax.random.split(key, 5)
    fan1 = Cin * K * K
    fan2 = Clat * K * K
    x = jax.random.normal(kx, (B, Cin, H, W), jnp.float32)
    # deterministic params; scale mimics PyTorch Conv2d default U(-1/sqrt(fan_in), ...)
    w1 = jax.random.uniform(kw1, (Clat, Cin, K, K), jnp.float32, -1.0, 1.0) / np.sqrt(fan1)
    b1 = jax.random.uniform(kb1, (Clat,), jnp.float32, -1.0, 1.0) / np.sqrt(fan1)
    w2 = jax.random.uniform(kw2, (Cout, Clat, K, K), jnp.float32, -1.0, 1.0) / np.sqrt(fan2)
    b2 = jax.random.uniform(kb2, (Cout,), jnp.float32, -1.0, 1.0) / np.sqrt(fan2)

    out = jax.jit(lift_project_block)(x, w1, b1, w2, b2)
    jax.block_until_ready(out)
    assert out.shape == (B, Cout, H, W) and out.dtype == jnp.float32
    print("KERNEL_OK")
</pallas_src>

<mosaic_0001>
module attributes {stable_mosaic.version = 11 : i64} {
  func.func @_lift_project_kernel(%arg0: i32, %arg1: memref<1x36x256xbf16, #tpu.memory_space<vmem>>, %arg2: memref<64x36xbf16, #tpu.memory_space<vmem>>, %arg3: memref<64x1xf32, #tpu.memory_space<vmem>>, %arg4: memref<256x1024xbf16, #tpu.memory_space<vmem>>, %arg5: memref<1024x256xbf16, #tpu.memory_space<vmem>>, %arg6: memref<9x3x64xbf16, #tpu.memory_space<vmem>>, %arg7: memref<3x1xf32, #tpu.memory_space<vmem>>, %arg8: memref<9x1x256xf32, #tpu.memory_space<vmem>>, %arg9: memref<1x3x256xf32, #tpu.memory_space<vmem>>) attributes {dimension_semantics = [#tpu.dimension_semantics<parallel>], iteration_bounds = array<i64: 2>, scalar_prefetch = 0 : i64, scratch_operands = 0 : i64, tpu.core_type = #tpu.core_type<tc>, window_params = [{transform_indices = @transform_0, window_bounds = array<i64: 1, 36, 256>}, {pipeline_mode = #tpu.pipeline_mode<synchronous>, transform_indices = @transform_1, window_bounds = array<i64: 64, 36>}, {pipeline_mode = #tpu.pipeline_mode<synchronous>, transform_indices = @transform_2, window_bounds = array<i64: 64, 1>}, {pipeline_mode = #tpu.pipeline_mode<synchronous>, transform_indices = @transform_3, window_bounds = array<i64: 256, 1024>}, {pipeline_mode = #tpu.pipeline_mode<synchronous>, transform_indices = @transform_4, window_bounds = array<i64: 1024, 256>}, {pipeline_mode = #tpu.pipeline_mode<synchronous>, transform_indices = @transform_5, window_bounds = array<i64: 9, 3, 64>}, {pipeline_mode = #tpu.pipeline_mode<synchronous>, transform_indices = @transform_6, window_bounds = array<i64: 3, 1>}, {pipeline_mode = #tpu.pipeline_mode<synchronous>, transform_indices = @transform_7, window_bounds = array<i64: 9, 1, 256>}, {transform_indices = @transform_8, window_bounds = array<i64: 1, 3, 256>}]} {
    %c0 = arith.constant 0 : index
    %c0_0 = arith.constant 0 : index
    %0 = vector.load %arg2[%c0, %c0_0] : memref<64x36xbf16, #tpu.memory_space<vmem>>, vector<64x36xbf16>
    %c0_1 = arith.constant 0 : index
    %c0_2 = arith.constant 0 : index
    %c0_3 = arith.constant 0 : index
    %1 = vector.load %arg1[%c0_1, %c0_2, %c0_3] : memref<1x36x256xbf16, #tpu.memory_space<vmem>>, vector<1x36x256xbf16>
    %2 = vector.shape_cast %1 : vector<1x36x256xbf16> to vector<36x256xbf16>
    %cst = arith.constant dense<0.000000e+00> : vector<64x256xf32>
    %3 = tpu.matmul %0, %2, %cst {dimension_numbers = #tpu.dot_dimension_numbers<[1], [0], [0], [1], [0, 0, 1, 1], [], []>} : vector<64x36xbf16>, vector<36x256xbf16>, vector<64x256xf32> -> vector<64x256xf32>
    %c0_4 = arith.constant 0 : index
    %c0_5 = arith.constant 0 : index
    %4 = vector.load %arg3[%c0_4, %c0_5] : memref<64x1xf32, #tpu.memory_space<vmem>>, vector<64x1xf32>
    %5 = vector.broadcast %4 : vector<64x1xf32> to vector<64x256xf32>
    %6 = arith.addf %3, %5 : vector<64x256xf32>
    %7 = arith.truncf %6 : vector<64x256xf32> to vector<64x256xbf16>
    %c0_6 = arith.constant 0 : index
    %c0_7 = arith.constant 0 : index
    %8 = vector.load %arg4[%c0_6, %c0_7] : memref<256x1024xbf16, #tpu.memory_space<vmem>>, vector<256x1024xbf16>
    %cst_8 = arith.constant dense<0.000000e+00> : vector<64x1024xf32>
    %9 = tpu.matmul %7, %8, %cst_8 {dimension_numbers = #tpu.dot_dimension_numbers<[1], [0], [0], [1], [0, 0, 1, 1], [], []>} : vector<64x256xbf16>, vector<256x1024xbf16>, vector<64x1024xf32> -> vector<64x1024xf32>
    %cst_9 = arith.constant 0.000000e+00 : f32
    %10 = vector.broadcast %cst_9 : f32 to vector<64x1024xf32>
    %11 = arith.cmpf oge, %9, %10 : vector<64x1024xf32>
    %cst_10 = arith.constant 0.00999999977 : f32
    %12 = vector.broadcast %cst_10 : f32 to vector<64x1024xf32>
    %13 = arith.mulf %12, %9 : vector<64x1024xf32>
    %14 = arith.select %11, %9, %13 : vector<64x1024xi1>, vector<64x1024xf32>
    %15 = arith.truncf %14 : vector<64x1024xf32> to vector<64x1024xbf16>
    %c0_11 = arith.constant 0 : index
    %c0_12 = arith.constant 0 : index
    %16 = vector.load %arg5[%c0_11, %c0_12] : memref<1024x256xbf16, #tpu.memory_space<vmem>>, vector<1024x256xbf16>
    %cst_13 = arith.constant dense<0.000000e+00> : vector<64x256xf32>
    %17 = tpu.matmul %15, %16, %cst_13 {dimension_numbers = #tpu.dot_dimension_numbers<[1], [0], [0], [1], [0, 0, 1, 1], [], []>} : vector<64x1024xbf16>, vector<1024x256xbf16>, vector<64x256xf32> -> vector<64x256xf32>
    %18 = arith.truncf %17 : vector<64x256xf32> to vector<64x256xbf16>
    %cst_14 = arith.constant 0.000000e+00 : f32
    %19 = vector.broadcast %cst_14 : f32 to vector<3x256xf32>
    %c0_15 = arith.constant 0 : index
    %c0_16 = arith.constant 0 : index
    %c0_17 = arith.constant 0 : index
    %20 = vector.load %arg6[%c0_15, %c0_16, %c0_17] : memref<9x3x64xbf16, #tpu.memory_space<vmem>>, vector<1x3x64xbf16>
    %21 = vector.shape_cast %20 : vector<1x3x64xbf16> to vector<3x64xbf16>
    %cst_18 = arith.constant dense<0.000000e+00> : vector<3x256xf32>
    %22 = tpu.matmul %21, %18, %cst_18 {dimension_numbers = #tpu.dot_dimension_numbers<[1], [0], [0], [1], [0, 0, 1, 1], [], []>} : vector<3x64xbf16>, vector<64x256xbf16>, vector<3x256xf32> -> vector<3x256xf32>
    %c17_i32 = arith.constant 17 : i32
    %23 = tpu.dynamic_rotate %22 by %c17_i32 dim 1 : vector<3x256xf32>, i32 -> vector<3x256xf32>
    %c0_19 = arith.constant 0 : index
    %c0_20 = arith.constant 0 : index
    %c0_21 = arith.constant 0 : index
    %24 = vector.load %arg8[%c0_19, %c0_20, %c0_21] : memref<9x1x256xf32, #tpu.memory_space<vmem>>, vector<1x1x256xf32>
    %25 = vector.shape_cast %24 : vector<1x1x256xf32> to vector<1x256xf32>
    %26 = vector.broadcast %25 : vector<1x256xf32> to vector<3x256xf32>
    %27 = arith.mulf %23, %26 : vector<3x256xf32>
    %28 = arith.addf %19, %27 : vector<3x256xf32>
    %c1 = arith.constant 1 : index
    %c0_22 = arith.constant 0 : index
    %c0_23 = arith.constant 0 : index
    %29 = vector.load %arg6[%c1, %c0_22, %c0_23] : memref<9x3x64xbf16, #tpu.memory_space<vmem>>, vector<1x3x64xbf16>
    %30 = vector.shape_cast %29 : vector<1x3x64xbf16> to vector<3x64xbf16>
    %cst_24 = arith.constant dense<0.000000e+00> : vector<3x256xf32>
    %31 = tpu.matmul %30, %18, %cst_24 {dimension_numbers = #tpu.dot_dimension_numbers<[1], [0], [0], [1], [0, 0, 1, 1], [], []>} : vector<3x64xbf16>, vector<64x256xbf16>, vector<3x256xf32> -> vector<3x256xf32>
    %c16_i32 = arith.constant 16 : i32
    %32 = tpu.dynamic_rotate %31 by %c16_i32 dim 1 : vector<3x256xf32>, i32 -> vector<3x256xf32>
    %c1_25 = arith.constant 1 : index
    %c0_26 = arith.constant 0 : index
    %c0_27 = arith.constant 0 : index
    %33 = vector.load %arg8[%c1_25, %c0_26, %c0_27] : memref<9x1x256xf32, #tpu.memory_space<vmem>>, vector<1x1x256xf32>
    %34 = vector.shape_cast %33 : vector<1x1x256xf32> to vector<1x256xf32>
    %35 = vector.broadcast %34 : vector<1x256xf32> to vector<3x256xf32>
    %36 = arith.mulf %32, %35 : vector<3x256xf32>
    %37 = arith.addf %28, %36 : vector<3x256xf32>
    %c2 = arith.constant 2 : index
    %c0_28 = arith.constant 0 : index
    %c0_29 = arith.constant 0 : index
    %38 = vector.load %arg6[%c2, %c0_28, %c0_29] : memref<9x3x64xbf16, #tpu.memory_space<vmem>>, vector<1x3x64xbf16>
    %39 = vector.shape_cast %38 : vector<1x3x64xbf16> to vector<3x64xbf16>
    %cst_30 = arith.constant dense<0.000000e+00> : vector<3x256xf32>
    %40 = tpu.matmul %39, %18, %cst_30 {dimension_numbers = #tpu.dot_dimension_numbers<[1], [0], [0], [1], [0, 0, 1, 1], [], []>} : vector<3x64xbf16>, vector<64x256xbf16>, vector<3x256xf32> -> vector<3x256xf32>
    %c15_i32 = arith.constant 15 : i32
    %41 = tpu.dynamic_rotate %40 by %c15_i32 dim 1 : vector<3x256xf32>, i32 -> vector<3x256xf32>
    %c2_31 = arith.constant 2 : index
    %c0_32 = arith.constant 0 : index
    %c0_33 = arith.constant 0 : index
    %42 = vector.load %arg8[%c2_31, %c0_32, %c0_33] : memref<9x1x256xf32, #tpu.memory_space<vmem>>, vector<1x1x256xf32>
    %43 = vector.shape_cast %42 : vector<1x1x256xf32> to vector<1x256xf32>
    %44 = vector.broadcast %43 : vector<1x256xf32> to vector<3x256xf32>
    %45 = arith.mulf %41, %44 : vector<3x256xf32>
    %46 = arith.addf %37, %45 : vector<3x256xf32>
    %c3 = arith.constant 3 : index
    %c0_34 = arith.constant 0 : index
    %c0_35 = arith.constant 0 : index
    %47 = vector.load %arg6[%c3, %c0_34, %c0_35] : memref<9x3x64xbf16, #tpu.memory_space<vmem>>, vector<1x3x64xbf16>
    %48 = vector.shape_cast %47 : vector<1x3x64xbf16> to vector<3x64xbf16>
    %cst_36 = arith.constant dense<0.000000e+00> : vector<3x256xf32>
    %49 = tpu.matmul %48, %18, %cst_36 {dimension_numbers = #tpu.dot_dimension_numbers<[1], [0], [0], [1], [0, 0, 1, 1], [], []>} : vector<3x64xbf16>, vector<64x256xbf16>, vector<3x256xf32> -> vector<3x256xf32>
    %c1_i32 = arith.constant 1 : i32
    %50 = tpu.dynamic_rotate %49 by %c1_i32 dim 1 : vector<3x256xf32>, i32 -> vector<3x256xf32>
    %c3_37 = arith.constant 3 : index
    %c0_38 = arith.constant 0 : index
    %c0_39 = arith.constant 0 : index
    %51 = vector.load %arg8[%c3_37, %c0_38, %c0_39] : memref<9x1x256xf32, #tpu.memory_space<vmem>>, vector<1x1x256xf32>
    %52 = vector.shape_cast %51 : vector<1x1x256xf32> to vector<1x256xf32>
    %53 = vector.broadcast %52 : vector<1x256xf32> to vector<3x256xf32>
    %54 = arith.mulf %50, %53 : vector<3x256xf32>
    %55 = arith.addf %46, %54 : vector<3x256xf32>
    %c4 = arith.constant 4 : index
    %c0_40 = arith.constant 0 : index
    %c0_41 = arith.constant 0 : index
    %56 = vector.load %arg6[%c4, %c0_40, %c0_41] : memref<9x3x64xbf16, #tpu.memory_space<vmem>>, vector<1x3x64xbf16>
    %57 = vector.shape_cast %56 : vector<1x3x64xbf16> to vector<3x64xbf16>
    %cst_42 = arith.constant dense<0.000000e+00> : vector<3x256xf32>
    %58 = tpu.matmul %57, %18, %cst_42 {dimension_numbers = #tpu.dot_dimension_numbers<[1], [0], [0], [1], [0, 0, 1, 1], [], []>} : vector<3x64xbf16>, vector<64x256xbf16>, vector<3x256xf32> -> vector<3x256xf32>
    %59 = arith.addf %55, %58 : vector<3x256xf32>
    %c5 = arith.constant 5 : index
    %c0_43 = arith.constant 0 : index
    %c0_44 = arith.constant 0 : index
    %60 = vector.load %arg6[%c5, %c0_43, %c0_44] : memref<9x3x64xbf16, #tpu.memory_space<vmem>>, vector<1x3x64xbf16>
    %61 = vector.shape_cast %60 : vector<1x3x64xbf16> to vector<3x64xbf16>
    %cst_45 = arith.constant dense<0.000000e+00> : vector<3x256xf32>
    %62 = tpu.matmul %61, %18, %cst_45 {dimension_numbers = #tpu.dot_dimension_numbers<[1], [0], [0], [1], [0, 0, 1, 1], [], []>} : vector<3x64xbf16>, vector<64x256xbf16>, vector<3x256xf32> -> vector<3x256xf32>
    %c255_i32 = arith.constant 255 : i32
    %63 = tpu.dynamic_rotate %62 by %c255_i32 dim 1 : vector<3x256xf32>, i32 -> vector<3x256xf32>
    %c5_46 = arith.constant 5 : index
    %c0_47 = arith.constant 0 : index
    %c0_48 = arith.constant 0 : index
    %64 = vector.load %arg8[%c5_46, %c0_47, %c0_48] : memref<9x1x256xf32, #tpu.memory_space<vmem>>, vector<1x1x256xf32>
    %65 = vector.shape_cast %64 : vector<1x1x256xf32> to vector<1x256xf32>
    %66 = vector.broadcast %65 : vector<1x256xf32> to vector<3x256xf32>
    %67 = arith.mulf %63, %66 : vector<3x256xf32>
    %68 = arith.addf %59, %67 : vector<3x256xf32>
    %c6 = arith.constant 6 : index
    %c0_49 = arith.constant 0 : index
    %c0_50 = arith.constant 0 : index
    %69 = vector.load %arg6[%c6, %c0_49, %c0_50] : memref<9x3x64xbf16, #tpu.memory_space<vmem>>, vector<1x3x64xbf16>
    %70 = vector.shape_cast %69 : vector<1x3x64xbf16> to vector<3x64xbf16>
    %cst_51 = arith.constant dense<0.000000e+00> : vector<3x256xf32>
    %71 = tpu.matmul %70, %18, %cst_51 {dimension_numbers = #tpu.dot_dimension_numbers<[1], [0], [0], [1], [0, 0, 1, 1], [], []>} : vector<3x64xbf16>, vector<64x256xbf16>, vector<3x256xf32> -> vector<3x256xf32>
    %c241_i32 = arith.constant 241 : i32
    %72 = tpu.dynamic_rotate %71 by %c241_i32 dim 1 : vector<3x256xf32>, i32 -> vector<3x256xf32>
    %c6_52 = arith.constant 6 : index
    %c0_53 = arith.constant 0 : index
    %c0_54 = arith.constant 0 : index
    %73 = vector.load %arg8[%c6_52, %c0_53, %c0_54] : memref<9x1x256xf32, #tpu.memory_space<vmem>>, vector<1x1x256xf32>
    %74 = vector.shape_cast %73 : vector<1x1x256xf32> to vector<1x256xf32>
    %75 = vector.broadcast %74 : vector<1x256xf32> to vector<3x256xf32>
    %76 = arith.mulf %72, %75 : vector<3x256xf32>
    %77 = arith.addf %68, %76 : vector<3x256xf32>
    %c7 = arith.constant 7 : index
    %c0_55 = arith.constant 0 : index
    %c0_56 = arith.constant 0 : index
    %78 = vector.load %arg6[%c7, %c0_55, %c0_56] : memref<9x3x64xbf16, #tpu.memory_space<vmem>>, vector<1x3x64xbf16>
    %79 = vector.shape_cast %78 : vector<1x3x64xbf16> to vector<3x64xbf16>
    %cst_57 = arith.constant dense<0.000000e+00> : vector<3x256xf32>
    %80 = tpu.matmul %79, %18, %cst_57 {dimension_numbers = #tpu.dot_dimension_numbers<[1], [0], [0], [1], [0, 0, 1, 1], [], []>} : vector<3x64xbf16>, vector<64x256xbf16>, vector<3x256xf32> -> vector<3x256xf32>
    %c240_i32 = arith.constant 240 : i32
    %81 = tpu.dynamic_rotate %80 by %c240_i32 dim 1 : vector<3x256xf32>, i32 -> vector<3x256xf32>
    %c7_58 = arith.constant 7 : index
    %c0_59 = arith.constant 0 : index
    %c0_60 = arith.constant 0 : index
    %82 = vector.load %arg8[%c7_58, %c0_59, %c0_60] : memref<9x1x256xf32, #tpu.memory_space<vmem>>, vector<1x1x256xf32>
    %83 = vector.shape_cast %82 : vector<1x1x256xf32> to vector<1x256xf32>
    %84 = vector.broadcast %83 : vector<1x256xf32> to vector<3x256xf32>
    %85 = arith.mulf %81, %84 : vector<3x256xf32>
    %86 = arith.addf %77, %85 : vector<3x256xf32>
    %c8 = arith.constant 8 : index
    %c0_61 = arith.constant 0 : index
    %c0_62 = arith.constant 0 : index
    %87 = vector.load %arg6[%c8, %c0_61, %c0_62] : memref<9x3x64xbf16, #tpu.memory_space<vmem>>, vector<1x3x64xbf16>
    %88 = vector.shape_cast %87 : vector<1x3x64xbf16> to vector<3x64xbf16>
    %cst_63 = arith.constant dense<0.000000e+00> : vector<3x256xf32>
    %89 = tpu.matmul %88, %18, %cst_63 {dimension_numbers = #tpu.dot_dimension_numbers<[1], [0], [0], [1], [0, 0, 1, 1], [], []>} : vector<3x64xbf16>, vector<64x256xbf16>, vector<3x256xf32> -> vector<3x256xf32>
    %c239_i32 = arith.constant 239 : i32
    %90 = tpu.dynamic_rotate %89 by %c239_i32 dim 1 : vector<3x256xf32>, i32 -> vector<3x256xf32>
    %c8_64 = arith.constant 8 : index
    %c0_65 = arith.constant 0 : index
    %c0_66 = arith.constant 0 : index
    %91 = vector.load %arg8[%c8_64, %c0_65, %c0_66] : memref<9x1x256xf32, #tpu.memory_space<vmem>>, vector<1x1x256xf32>
    %92 = vector.shape_cast %91 : vector<1x1x256xf32> to vector<1x256xf32>
    %93 = vector.broadcast %92 : vector<1x256xf32> to vector<3x256xf32>
    %94 = arith.mulf %90, %93 : vector<3x256xf32>
    %95 = arith.addf %86, %94 : vector<3x256xf32>
    %c0_67 = arith.constant 0 : index
    %c0_68 = arith.constant 0 : index
    %96 = vector.load %arg7[%c0_67, %c0_68] : memref<3x1xf32, #tpu.memory_space<vmem>>, vector<3x1xf32>
    %97 = vector.broadcast %96 : vector<3x1xf32> to vector<3x256xf32>
    %98 = arith.addf %95, %97 : vector<3x256xf32>
    %c0_69 = arith.constant 0 : index
    %c0_70 = arith.constant 0 : index
    %c0_71 = arith.constant 0 : index
    %99 = vector.load %arg9[%c0_69, %c0_70, %c0_71] : memref<1x3x256xf32, #tpu.memory_space<vmem>>, vector<1x3x256xf32>
    %100 = vector.shape_cast %99 : vector<1x3x256xf32> to vector<3x256xf32>
    %101 = vector.shape_cast %98 : vector<3x256xf32> to vector<1x3x256xf32>
    tpu.vector_store %arg9[%c0_69, %c0_70, %c0_71], %101 {strides = array<i32>} : memref<1x3x256xf32, #tpu.memory_space<vmem>>, vector<1x3x256xf32>,
    return
  }
  func.func @transform_0(%arg0: i32) -> (i32, i32, i32) {
    %c0_i32 = arith.constant 0 : i32
    %c0_i32_0 = arith.constant 0 : i32
    %c0_i32_1 = arith.constant 0 : i32
    return %arg0, %c0_i32, %c0_i32_0 : i32, i32, i32
  }
  func.func @transform_1(%arg0: i32) -> (i32, i32) {
    %c0_i32 = arith.constant 0 : i32
    %c0_i32_0 = arith.constant 0 : i32
    %c0_i32_1 = arith.constant 0 : i32
    return %c0_i32, %c0_i32_0 : i32, i32
  }
  func.func @transform_2(%arg0: i32) -> (i32, i32) {
    %c0_i32 = arith.constant 0 : i32
    %c0_i32_0 = arith.constant 0 : i32
    %c0_i32_1 = arith.constant 0 : i32
    return %c0_i32, %c0_i32_0 : i32, i32
  }
  func.func @transform_3(%arg0: i32) -> (i32, i32) {
    %c0_i32 = arith.constant 0 : i32
    %c0_i32_0 = arith.constant 0 : i32
    %c0_i32_1 = arith.constant 0 : i32
    return %c0_i32, %c0_i32_0 : i32, i32
  }
  func.func @transform_4(%arg0: i32) -> (i32, i32) {
    %c0_i32 = arith.constant 0 : i32
    %c0_i32_0 = arith.constant 0 : i32
    %c0_i32_1 = arith.constant 0 : i32
    return %c0_i32, %c0_i32_0 : i32, i32
  }
  func.func @transform_5(%arg0: i32) -> (i32, i32, i32) {
    %c0_i32 = arith.constant 0 : i32
    %c0_i32_0 = arith.constant 0 : i32
    %c0_i32_1 = arith.constant 0 : i32
    %c0_i32_2 = arith.constant 0 : i32
    return %c0_i32, %c0_i32_0, %c0_i32_1 : i32, i32, i32
  }
  func.func @transform_6(%arg0: i32) -> (i32, i32) {
    %c0_i32 = arith.constant 0 : i32
    %c0_i32_0 = arith.constant 0 : i32
    %c0_i32_1 = arith.constant 0 : i32
    return %c0_i32, %c0_i32_0 : i32, i32
  }
  func.func @transform_7(%arg0: i32) -> (i32, i32, i32) {
    %c0_i32 = arith.constant 0 : i32
    %c0_i32_0 = arith.constant 0 : i32
    %c0_i32_1 = arith.constant 0 : i32
    %c0_i32_2 = arith.constant 0 : i32
    return %c0_i32, %c0_i32_0, %c0_i32_1 : i32, i32, i32
  }
  func.func @transform_8(%arg0: i32) -> (i32, i32, i32) {
    %c0_i32 = arith.constant 0 : i32
    %c0_i32_0 = arith.constant 0 : i32
    %c0_i32_1 = arith.constant 0 : i32
    return %arg0, %c0_i32, %c0_i32_0 : i32, i32, i32
  }
}

</mosaic_0001>

<llo_original>
// kernel: lift_project_block.1
$region0: #{lift_project_block.1}
  #allocation0 [shape = 'u32[]', space=smem, size = 0x4, offset = 0x4, fixed_abs, tag = 'smem constant byte address 0x4 - core index']
  #allocation1 [shape = 'u32[144,128]{1,0:T(1,128)}', space=vmem, size = 0x12000, scoped, tag = 'internal scratch']
  %s0 = inlined_call_operand.vmem [shape: bf16[2,36,256], index: 0, kind: input, shape index: {}]
  %s1 = inlined_call_operand.vmem [shape: bf16[64,36], index: 1, kind: input, shape index: {}]
  %s2 = inlined_call_operand.vmem [shape: f32[64,1], index: 2, kind: input, shape index: {}]
  %s3 = inlined_call_operand.vmem [shape: bf16[256,1024], index: 3, kind: input, shape index: {}]
  %s4 = inlined_call_operand.vmem [shape: bf16[1024,256], index: 4, kind: input, shape index: {}]
  %s5 = inlined_call_operand.vmem [shape: bf16[9,3,64], index: 5, kind: input, shape index: {}]
  %s6 = inlined_call_operand.vmem [shape: f32[3,1], index: 6, kind: input, shape index: {}]
  %s7 = inlined_call_operand.vmem [shape: f32[9,1,256], index: 7, kind: input, shape index: {}]
  %s8 = inlined_call_operand.vmem [shape: f32[2,3,256], index: 8, kind: output, shape index: {}]
  %s9 = sld [smem:[#allocation0]]
  $region65: #{lift_project_block.1} parent=0
    _
  %s11 = ssub.s32 1, %s9
  %s12 = scalar_select 0, %s11, %s9
  loop: start=0, step=1, limit=4
  $region2: #{lift_project_block.1} parent=0 // loop_pre_header
    _
  $region3: #{lift_project_block.1} parent=0 // loop_header
    %s14 = sphi 0, %s18
    %p15 = scmp.ge.s32.totalorder %s14, 4
    %s24 = sphi 0, %s26
    %s27 = sphi 0, %s24
    %s28 = sphi 0, %s27
    %s44 = sphi 0, %s28
    %s48 = sphi 0, %s48
    %s50 = sphi 0, %s48
    %s51 = sphi 0, %s50
    %s65 = sphi 0, %s51
    %s69 = sphi 0, %s69
    %s71 = sphi 0, %s69
    %s72 = sphi 0, %s71
    %s86 = sphi 0, %s72
    %s90 = sphi 0, %s90
    %s92 = sphi 0, %s90
    %s93 = sphi 0, %s92
    %s107 = sphi 0, %s93
    %s111 = sphi 0, %s111
    %s113 = sphi 0, %s111
    %s114 = sphi 0, %s113
    %s128 = sphi 0, %s114
    %s132 = sphi 0, %s132
    %s134 = sphi 0, %s132
    %s135 = sphi 0, %s134
    %s149 = sphi 0, %s135
    %s153 = sphi 0, %s153
    %s155 = sphi 0, %s153
    %s156 = sphi 0, %s155
    %s170 = sphi 0, %s156
    %s174 = sphi 0, %s174
    %s176 = sphi 0, %s174
    %s177 = sphi 0, %s176
    %s191 = sphi 0, %s177
    %s197 = sphi 0, %s199
    %s200 = sphi 0, %s197
    %s201 = sphi 0, %s200
    %s217 = sphi 0, %s201
  $region4: #{lift_project_block.1} parent=0 // loop_header_branch
    %17 = sbr.rel (%p15) target = $region8
  $region5: #{lift_project_block.1} parent=0 // loop_body
    %s19 = ssub.s32 %s14, 1
    %s20 = ssub.s32 %s14, 2
    %s21 = sadd.s32 %s14, 1
    %s22 = ssub.s32 %s14, %s21
    %p23 = scmp.eq.s32.totalorder %s22, 0
    %s25 = sadd.s32 %s24, 1
    %s26 = scalar_select %p23, %s24, %s25
    %p29 = pneg %p23
    %p30 = scmp.eq.s32.totalorder %s14, 1
    %p31 = por %p29, %p30
    %p32 = scmp.ne.s32.totalorder %s24, %s27
    %p33 = scmp.eq.s32.totalorder %s14, 0
    %p34 = por %p32, %p33
    %p35 = scmp.ne.s32.totalorder %s24, %s27
    %p36 = scmp.eq.s32.totalorder %s19, 1
    %p37 = por %p35, %p36
    %p38 = scmp.ne.s32.totalorder %s27, %s28
    %p39 = scmp.eq.s32.totalorder %s19, 0
    %p40 = por %p38, %p39
    %p41 = scmp.ne.s32.totalorder %s27, %s28
    %p42 = scmp.eq.s32.totalorder %s20, 1
    %p43 = por %p41, %p42
    %p45 = scmp.ne.s32.totalorder %s28, %s44
    %p46 = scmp.eq.s32.totalorder %s20, 0
    %p47 = por %p45, %p46
    %s49 = sadd.s32 %s48, 1
    %p52 = scmp.eq.s32.totalorder %s14, 1
    %p53 = scmp.ne.s32.totalorder %s48, %s50
    %p54 = scmp.eq.s32.totalorder %s14, 0
    %p55 = por %p53, %p54
    %p56 = scmp.ne.s32.totalorder %s48, %s50
    %p57 = scmp.eq.s32.totalorder %s19, 1
    %p58 = por %p56, %p57
    %p59 = scmp.ne.s32.totalorder %s50, %s51
    %p60 = scmp.eq.s32.totalorder %s19, 0
    %p61 = por %p59, %p60
    %p62 = scmp.ne.s32.totalorder %s50, %s51
    %p63 = scmp.eq.s32.totalorder %s20, 1
    %p64 = por %p62, %p63
    %p66 = scmp.ne.s32.totalorder %s51, %s65
    %p67 = scmp.eq.s32.totalorder %s20, 0
    %p68 = por %p66, %p67
    %s70 = sadd.s32 %s69, 1
    %p73 = scmp.eq.s32.totalorder %s14, 1
    %p74 = scmp.ne.s32.totalorder %s69, %s71
    %p75 = scmp.eq.s32.totalorder %s14, 0
    %p76 = por %p74, %p75
    %p77 = scmp.ne.s32.totalorder %s69, %s71
    %p78 = scmp.eq.s32.totalorder %s19, 1
    %p79 = por %p77, %p78
    %p80 = scmp.ne.s32.totalorder %s71, %s72
    %p81 = scmp.eq.s32.totalorder %s19, 0
    %p82 = por %p80, %p81
    %p83 = scmp.ne.s32.totalorder %s71, %s72
    %p84 = scmp.eq.s32.totalorder %s20, 1
    %p85 = por %p83, %p84
    %p87 = scmp.ne.s32.totalorder %s72, %s86
    %p88 = scmp.eq.s32.totalorder %s20, 0
    %p89 = por %p87, %p88
    %s91 = sadd.s32 %s90, 1
    %p94 = scmp.eq.s32.totalorder %s14, 1
    %p95 = scmp.ne.s32.totalorder %s90, %s92
    %p96 = scmp.eq.s32.totalorder %s14, 0
    %p97 = por %p95, %p96
    %p98 = scmp.ne.s32.totalorder %s90, %s92
    %p99 = scmp.eq.s32.totalorder %s19, 1
    %p100 = por %p98, %p99
    %p101 = scmp.ne.s32.totalorder %s92, %s93
    %p102 = scmp.eq.s32.totalorder %s19, 0
    %p103 = por %p101, %p102
    %p104 = scmp.ne.s32.totalorder %s92, %s93
    %p105 = scmp.eq.s32.totalorder %s20, 1
    %p106 = por %p104, %p105
    %p108 = scmp.ne.s32.totalorder %s93, %s107
    %p109 = scmp.eq.s32.totalorder %s20, 0
    %p110 = por %p108, %p109
    %s112 = sadd.s32 %s111, 1
    %p115 = scmp.eq.s32.totalorder %s14, 1
    %p116 = scmp.ne.s32.totalorder %s111, %s113
    %p117 = scmp.eq.s32.totalorder %s14, 0
    %p118 = por %p116, %p117
    %p119 = scmp.ne.s32.totalorder %s111, %s113
    %p120 = scmp.eq.s32.totalorder %s19, 1
    %p121 = por %p119, %p120
    %p122 = scmp.ne.s32.totalorder %s113, %s114
    %p123 = scmp.eq.s32.totalorder %s19, 0
    %p124 = por %p122, %p123
    %p125 = scmp.ne.s32.totalorder %s113, %s114
    %p126 = scmp.eq.s32.totalorder %s20, 1
    %p127 = por %p125, %p126
    %p129 = scmp.ne.s32.totalorder %s114, %s128
    %p130 = scmp.eq.s32.totalorder %s20, 0
    %p131 = por %p129, %p130
    %s133 = sadd.s32 %s132, 1
    %p136 = scmp.eq.s32.totalorder %s14, 1
    %p137 = scmp.ne.s32.totalorder %s132, %s134
    %p138 = scmp.eq.s32.totalorder %s14, 0
    %p139 = por %p137, %p138
    %p140 = scmp.ne.s32.totalorder %s132, %s134
    %p141 = scmp.eq.s32.totalorder %s19, 1
    %p142 = por %p140, %p141
    %p143 = scmp.ne.s32.totalorder %s134, %s135
    %p144 = scmp.eq.s32.totalorder %s19, 0
    %p145 = por %p143, %p144
    %p146 = scmp.ne.s32.totalorder %s134, %s135
    %p147 = scmp.eq.s32.totalorder %s20, 1
    %p148 = por %p146, %p147
    %p150 = scmp.ne.s32.totalorder %s135, %s149
    %p151 = scmp.eq.s32.totalorder %s20, 0
    %p152 = por %p150, %p151
    %s154 = sadd.s32 %s153, 1
    %p157 = scmp.eq.s32.totalorder %s14, 1
    %p158 = scmp.ne.s32.totalorder %s153, %s155
    %p159 = scmp.eq.s32.totalorder %s14, 0
    %p160 = por %p158, %p159
    %p161 = scmp.ne.s32.totalorder %s153, %s155
    %p162 = scmp.eq.s32.totalorder %s19, 1
    %p163 = por %p161, %p162
    %p164 = scmp.ne.s32.totalorder %s155, %s156
    %p165 = scmp.eq.s32.totalorder %s19, 0
    %p166 = por %p164, %p165
    %p167 = scmp.ne.s32.totalorder %s155, %s156
    %p168 = scmp.eq.s32.totalorder %s20, 1
    %p169 = por %p167, %p168
    %p171 = scmp.ne.s32.totalorder %s156, %s170
    %p172 = scmp.eq.s32.totalorder %s20, 0
    %p173 = por %p171, %p172
    %s175 = sadd.s32 %s174, 1
    %p178 = scmp.eq.s32.totalorder %s14, 1
    %p179 = scmp.ne.s32.totalorder %s174, %s176
    %p180 = scmp.eq.s32.totalorder %s14, 0
    %p181 = por %p179, %p180
    %p182 = scmp.ne.s32.totalorder %s174, %s176
    %p183 = scmp.eq.s32.totalorder %s19, 1
    %p184 = por %p182, %p183
    %p185 = scmp.ne.s32.totalorder %s176, %s177
    %p186 = scmp.eq.s32.totalorder %s19, 0
    %p187 = por %p185, %p186
    %p188 = scmp.ne.s32.totalorder %s176, %s177
    %p189 = scmp.eq.s32.totalorder %s20, 1
    %p190 = por %p188, %p189
    %p192 = scmp.ne.s32.totalorder %s177, %s191
    %p193 = scmp.eq.s32.totalorder %s20, 0
    %p194 = por %p192, %p193
    %s195 = ssub.s32 %s14, %s21
    %p196 = scmp.eq.s32.totalorder %s195, 0
    %s198 = sadd.s32 %s197, 1
    %s199 = scalar_select %p196, %s197, %s198
    %p202 = pneg %p196
    %p203 = scmp.eq.s32.totalorder %s14, 1
    %p204 = por %p202, %p203
    %p205 = scmp.ne.s32.totalorder %s197, %s200
    %p206 = scmp.eq.s32.totalorder %s14, 0
    %p207 = por %p205, %p206
    %p208 = scmp.ne.s32.totalorder %s197, %s200
    %p209 = scmp.eq.s32.totalorder %s19, 1
    %p210 = por %p208, %p209
    %p211 = scmp.ne.s32.totalorder %s200, %s201
    %p212 = scmp.eq.s32.totalorder %s19, 0
    %p213 = por %p211, %p212
    %p214 = scmp.ne.s32.totalorder %s200, %s201
    %p215 = scmp.eq.s32.totalorder %s20, 1
    %p216 = por %p214, %p215
    %p218 = scmp.ne.s32.totalorder %s201, %s217
    %p219 = scmp.eq.s32.totalorder %s20, 0
    %p220 = por %p218, %p219
    %p221 = scmp.le.s32.totalorder 1, %s14
    %p222 = scmp.lt.s32.totalorder %s14, 3
    %p223 = pnand %p221, %p222
    %p224 = pneg %p223
    // Predicated region
    $region9: #{lift_project_block.1} parent=5 // pred_check
      _
    $region10: #{lift_project_block.1} parent=5 // pred_check_branch
      %226 = sbr.rel (%p223) target = $region12
    $region11: #{lift_project_block.1} parent=5 // pred_region
      %s227 = ssub.s32 %s14, 1
      // Predicated region
      $region13: #{lift_project_block.1} parent=11 // pred_check
        %p228 = pneg %p61
      $region14: #{lift_project_block.1} parent=11 // pred_check_branch
        %230 = sbr.rel (%p228) target = $region16
      $region15: #{lift_project_block.1} parent=11 // pred_region
        _
      $region16: #{lift_project_block.1} parent=11 // pred_fallthru
        _
      // Predicated region
      $region17: #{lift_project_block.1} parent=11 // pred_check
        %p231 = pneg %p82
      $region18: #{lift_project_block.1} parent=11 // pred_check_branch
        %233 = sbr.rel (%p231) target = $region20
      $region19: #{lift_project_block.1} parent=11 // pred_region
        _
      $region20: #{lift_project_block.1} parent=11 // pred_fallthru
        _
      // Predicated region
      $region21: #{lift_project_block.1} parent=11 // pred_check
        %p234 = pneg %p103
      $region22: #{lift_project_block.1} parent=11 // pred_check_branch
        %236 = sbr.rel (%p234) target = $region24
      $region23: #{lift_project_block.1} parent=11 // pred_region
        _
      $region24: #{lift_project_block.1} parent=11 // pred_fallthru
        _
      // Predicated region
      $region25: #{lift_project_block.1} parent=11 // pred_check
        %p237 = pneg %p124
      $region26: #{lift_project_block.1} parent=11 // pred_check_branch
        %239 = sbr.rel (%p237) target = $region28
      $region27: #{lift_project_block.1} parent=11 // pred_region
        _
      $region28: #{lift_project_block.1} parent=11 // pred_fallthru
        _
      // Predicated region
      $region29: #{lift_project_block.1} parent=11 // pred_check
        %p240 = pneg %p145
      $region30: #{lift_project_block.1} parent=11 // pred_check_branch
        %242 = sbr.rel (%p240) target = $region32
      $region31: #{lift_project_block.1} parent=11 // pred_region
        _
      $region32: #{lift_project_block.1} parent=11 // pred_fallthru
        _
      // Predicated region
      $region33: #{lift_project_block.1} parent=11 // pred_check
        %p243 = pneg %p166
      $region34: #{lift_project_block.1} parent=11 // pred_check_branch
        %245 = sbr.rel (%p243) target = $region36
      $region35: #{lift_project_block.1} parent=11 // pred_region
        _
      $region36: #{lift_project_block.1} parent=11 // pred_fallthru
        _
      // Predicated region
      $region37: #{lift_project_block.1} parent=11 // pred_check
        %p246 = pneg %p187
      $region38: #{lift_project_block.1} parent=11 // pred_check_branch
        %248 = sbr.rel (%p246) target = $region40
      $region39: #{lift_project_block.1} parent=11 // pred_region
        _
      $region40: #{lift_project_block.1} parent=11 // pred_fallthru
        _
    $region12: #{lift_project_block.1} parent=5 // pred_fallthru
      _
    %p249 = scmp.lt.s32.totalorder %s14, 2
    // Predicated region
    $region41: #{lift_project_block.1} parent=5 // pred_check
      %p250 = pneg %p249
    $region42: #{lift_project_block.1} parent=5 // pred_check_branch
      %252 = sbr.rel (%p250) target = $region44
    $region43: #{lift_project_block.1} parent=5 // pred_region
      // Predicated region
      $region45: #{lift_project_block.1} parent=43 // pred_check
        %p253 = pneg %p34
      $region46: #{lift_project_block.1} parent=43 // pred_check_branch
        %255 = sbr.rel (%p253) target = $region48
      $region47: #{lift_project_block.1} parent=43 // pred_region
        %p256 = scmp.lt.s32.totalorder %s14, 1
        %s257 = scalar_select %p256, %s14, 1
        %s258 = smul.addr %s257, 10
        %s259 = smul.addr %s258, 4
        %s260 = scalar_lea.vmem %s0, %s259
      $region48: #{lift_project_block.1} parent=43 // pred_fallthru
        _
    $region44: #{lift_project_block.1} parent=5 // pred_fallthru
      _
    %p261 = scmp.le.s32.totalorder 1, %s14
    %p262 = scmp.lt.s32.totalorder %s14, 3
    %p263 = pnand %p261, %p262
    %p264 = pneg %p263
    // Predicated region
    $region49: #{lift_project_block.1} parent=5 // pred_check
      _
    $region50: #{lift_project_block.1} parent=5 // pred_check_branch
      %266 = sbr.rel (%p263) target = $region52
    $region51: #{lift_project_block.1} parent=5 // pred_region
      %s267 = ssub.s32 %s14, 1
      %p268 = scmp.lt.s32.totalorder %s19, 1
      %s269 = scalar_select %p268, %s19, 1
      %s270 = smul.addr %s269, 10
      %s271 = smul.addr %s270, 4
      %s272 = scalar_lea.vmem %s0, %s271
      %p273 = pneg %p40
      %p274 = pneg %p37
      %p275 = pneg %p61
      %p276 = pneg %p58
      %p277 = pneg %p82
      %p278 = pneg %p79
      %p279 = pneg %p103
      %p280 = pneg %p100
      %p281 = pneg %p124
      %p282 = pneg %p121
      %p283 = pneg %p145
      %p284 = pneg %p142
      %p285 = pneg %p166
      %p286 = pneg %p163
      %p287 = pneg %p187
      %p288 = pneg %p184
      %p289 = pneg %p213
      %p290 = pneg %p210
      %p291 = scmp.lt.s32.totalorder %s19, 1
      %s292 = scalar_select %p291, %s19, 1
      %s293 = smul.addr %s292, 2
      %s294 = smul.addr %s293, 4
      %s295 = scalar_lea.vmem %s8, %s294
      %p296 = scmp.lt.s32.totalorder %s19, 1
      %s297 = scalar_select %p296, %s19, 1
      %s298 = smul.addr %s297, 10
      %s299 = smul.addr %s298, 4
      %s300 = scalar_lea.vmem %s0, %s299
      %p301 = scmp.lt.s32.totalorder %s19, 1
      %s302 = scalar_select %p301, %s19, 1
      %s303 = smul.addr %s302, 2
      %s304 = smul.addr %s303, 4
      %s305 = scalar_lea.vmem %s8, %s304
      %v307 = vld [vmem:[%s1] sm:$0xf]
      %v308 = vld [vmem:[%s1 + $0x4] sm:$0xf]
      %v309 = vld [vmem:[%s1 + $0x8] sm:$0xf]
      %v310 = vld [vmem:[%s1 + $0xc] sm:$0xf]
      %v311 = vld [vmem:[%s1 + $0x10] sm:$0xf]
      %v312 = vld [vmem:[%s1 + $0x14] sm:$0xf]
      %v313 = vld [vmem:[%s1 + $0x18] sm:$0xf]
      %v314 = vld [vmem:[%s1 + $0x1c] sm:$0xf]
      %v315 = vld [vmem:[%s300] sm:$0xff]
      %v316 = vld [vmem:[%s300 + $0x8] sm:$0xff]
      %v317 = vld [vmem:[%s300 + $0x10] sm:$0xff]
      %v318 = vld [vmem:[%s300 + $0x18] sm:$0xff]
      %v319 = vld [vmem:[%s300 + $0x20] sm:$0x33]
      %v320 = vld [vmem:[%s2] sm:$0xff]
      %v321 = vld [vmem:[%s2 + $0x8] sm:$0xff]
      %v322 = vld [vmem:[%s2 + $0x10] sm:$0xff]
      %v323 = vld [vmem:[%s2 + $0x18] sm:$0xff]
      %v324 = vld [vmem:[%s2 + $0x20] sm:$0xff]
      %v325 = vld [vmem:[%s2 + $0x28] sm:$0xff]
      %v326 = vld [vmem:[%s2 + $0x30] sm:$0xff]
      %v327 = vld [vmem:[%s2 + $0x38] sm:$0xff]
      %329 = vset.pattern.permute.xlu0 0
      %330 = vperm.xlu0 %329, %v320
      %v331 = vpop.permute.xlu0 %330
      %334 = vset.pattern.permute.xlu0 0
      %335 = vperm.xlu0 %334, %v321
      %v336 = vpop.permute.xlu0 %335
      %339 = vset.pattern.permute.xlu0 0
      %340 = vperm.xlu0 %339, %v322
      %v341 = vpop.permute.xlu0 %340
      %344 = vset.pattern.permute.xlu0 0
      %345 = vperm.xlu0 %344, %v323
      %v346 = vpop.permute.xlu0 %345
      %349 = vset.pattern.permute.xlu0 0
      %350 = vperm.xlu0 %349, %v324
      %v351 = vpop.permute.xlu0 %350
      %354 = vset.pattern.permute.xlu0 0
      %355 = vperm.xlu0 %354, %v325
      %v356 = vpop.permute.xlu0 %355
      %359 = vset.pattern.permute.xlu0 0
      %360 = vperm.xlu0 %359, %v326
      %v361 = vpop.permute.xlu0 %360
      %364 = vset.pattern.permute.xlu0 0
      %365 = vperm.xlu0 %364, %v327
      %v366 = vpop.permute.xlu0 %365
      %v376 = vunpack.c.l.b16 %v307
      %v377 = vunpack.c.l.b16 %v308
      %v378 = vunpack.c.l.b16 %v309
      %v379 = vunpack.c.l.b16 %v310
      %v380 = vunpack.c.l.b16 %v311
      %v381 = vunpack.c.l.b16 %v312
      %v382 = vunpack.c.l.b16 %v313
      %v383 = vunpack.c.l.b16 %v314
      %v384 = vpack.c.b16 %v377, %v376
      %v385 = vpack.c.b16 %v379, %v378
      %v386 = vpack.c.b16 %v381, %v380
      %v387 = vpack.c.b16 %v383, %v382
      %v393 = vunpack.c.l.b16 %v315
      %v394 = vunpack.c.h.b16 %v315
      %v395 = vunpack.c.l.b16 %v316
      %v396 = vunpack.c.h.b16 %v316
      %v397 = vunpack.c.l.b16 %v317
      %v398 = vunpack.c.h.b16 %v317
      %v399 = vunpack.c.l.b16 %v318
      %v400 = vunpack.c.h.b16 %v318
      %v401 = vunpack.c.l.b16 %v319
      %v402 = vunpack.c.h.b16 %v319
      %v403 = vpack.c.b16 %v395, %v393
      %v404 = vpack.c.b16 %v396, %v394
      %v405 = vpack.c.b16 %v399, %v397
      %v406 = vpack.c.b16 %v400, %v398
      %v407 = vpack.c.b16 %v401, %v401
      %v408 = vpack.c.b16 %v402, %v402
      %vm413 = vcmask 293888
      %v415 = vsel %vm413, %v384, 0
      %v418 = vsel %vm413, %v385, 0
      %v421 = vsel %vm413, %v386, 0
      %v424 = vsel %vm413, %v387, 0
      %vm426 = vcmask 1041408
      %v428 = vsel %vm426, %v407, 0
      %v431 = vsel %vm426, %v408, 0
      %433 = vmatprep.subr.bf16.mxu0 %v404
      %434 = vmatpush1.bf16.msra.mxu0 %v403
      %435 = vmatprep.subr.bf16.mxu0 %v406
      %436 = vmatpush1.bf16.msra.mxu0 %v405
      %437 = vmatprep.subr.bf16.mxu0 %v431
      %438 = vmatpush1.bf16.msra.mxu0 %v428
      %439 = vmatprep.subr.bf16.mxu0 0
      %440 = vmatpush1.bf16.msra.mxu0 0
      %441 = vmatprep.subr.bf16.mxu0 0
      %442 = vmatpush1.bf16.msra.mxu0 0
      %443 = vmatprep.subr.bf16.mxu0 0
      %444 = vmatpush1.bf16.msra.mxu0 0
      %445 = vmatprep.subr.bf16.mxu0 0
      %446 = vmatpush1.bf16.msra.mxu0 0
      %447 = vmatprep.subr.bf16.mxu0 0
      %448 = vmatpush1.bf16.msra.mxu0 0
      %449 = vmatprep.subr.bf16.mxu0 0
      %450 = vmatpush1.bf16.msra.mxu0 0
      %451 = vmatprep.subr.bf16.mxu0 0
      %452 = vmatpush1.bf16.msra.mxu0 0
      %453 = vmatprep.subr.bf16.mxu0 0
      %454 = vmatpush1.bf16.msra.mxu0 0
      %455 = vmatprep.subr.bf16.mxu0 0
      %456 = vmatpush1.bf16.msra.mxu0 0
      %457 = vmatprep.subr.bf16.mxu0 0
      %458 = vmatpush1.bf16.msra.mxu0 0
      %459 = vmatprep.subr.bf16.mxu0 0
      %460 = vmatpush1.bf16.msra.mxu0 0
      %461 = vmatprep.subr.bf16.mxu0 0
      %462 = vmatpush1.bf16.msra.mxu0 0
      %463 = vmatprep.subr.bf16.mxu0 0
      %464 = vmatpush1.bf16.msra.mxu0 0
      %465 = vmatprep.mubr.bf16.mxu0 0
      %466 = vmatmul.mubr.bf16.gmra.mrb[0].mxu0 %v415
      %v467 = vpop.f32.mrb[0].mxu0
      %v468 = vadd.f32 %v331, %v467
      %v469 = vpop.f32.mrb[0].mxu0
      %v470 = vadd.f32 %v331, %v469
      %v471 = vpop.f32.mrb[0].mxu0
      %v472 = vadd.f32 %v336, %v471
      %v473 = vpop.f32.mrb[0].mxu0
      %v474 = vadd.f32 %v336, %v473
      %475 = vmatprep.mubr.bf16.mxu0 0
      %476 = vmatmul.mubr.bf16.gmra.mrb[0].mxu0 %v418
      %v477 = vpop.f32.mrb[0].mxu0
      %v478 = vadd.f32 %v341, %v477
      %v479 = vpop.f32.mrb[0].mxu0
      %v480 = vadd.f32 %v341, %v479
      %v481 = vpop.f32.mrb[0].mxu0
      %v482 = vadd.f32 %v346, %v481
      %v483 = vpop.f32.mrb[0].mxu0
      %v484 = vadd.f32 %v346, %v483
      %485 = vmatprep.mubr.bf16.mxu0 0
      %486 = vmatmul.mubr.bf16.gmra.mrb[0].mxu0 %v421
      %v487 = vpop.f32.mrb[0].mxu0
      %v488 = vadd.f32 %v351, %v487
      %v489 = vpop.f32.mrb[0].mxu0
      %v490 = vadd.f32 %v351, %v489
      %v491 = vpop.f32.mrb[0].mxu0
      %v492 = vadd.f32 %v356, %v491
      %v493 = vpop.f32.mrb[0].mxu0
      %v494 = vadd.f32 %v356, %v493
      %495 = vmatprep.mubr.bf16.mxu0 0
      %496 = vmatmul.mubr.bf16.gmra.mrb[0].mxu0 %v424
      %v497 = vpop.f32.mrb[0].mxu0
      %v498 = vadd.f32 %v361, %v497
      %v499 = vpop.f32.mrb[0].mxu0
      %v500 = vadd.f32 %v361, %v499
      %v501 = vpop.f32.mrb[0].mxu0
      %v502 = vadd.f32 %v366, %v501
      %v503 = vpop.f32.mrb[0].mxu0
      %v504 = vadd.f32 %v366, %v503
      %505 = vdwg.mxu0
      %v506 = vpack.c.bf16 %v472, %v468
      %v507 = vpack.c.bf16 %v474, %v470
      %v508 = vpack.c.bf16 %v482, %v478
      %v509 = vpack.c.bf16 %v484, %v480
      %v510 = vpack.c.bf16 %v492, %v488
      %v511 = vpack.c.bf16 %v494, %v490
      %v512 = vpack.c.bf16 %v502, %v498
      %v513 = vpack.c.bf16 %v504, %v500
      %v514 = vld [vmem:[%s3] sm:$0xff]
      %v515 = vld [vmem:[%s3 + $0x8] sm:$0xff]
      %v516 = vld [vmem:[%s3 + $0x10] sm:$0xff]
      %v517 = vld [vmem:[%s3 + $0x18] sm:$0xff]
      %v518 = vld [vmem:[%s3 + $0x20] sm:$0xff]
      %v519 = vld [vmem:[%s3 + $0x28] sm:$0xff]
      %v520 = vld [vmem:[%s3 + $0x30] sm:$0xff]
      %v521 = vld [vmem:[%s3 + $0x38] sm:$0xff]
      %v522 = vld [vmem:[%s3 + $0x40] sm:$0xff]
      %v523 = vld [vmem:[%s3 + $0x48] sm:$0xff]
      %v524 = vld [vmem:[%s3 + $0x50] sm:$0xff]
      %v525 = vld [vmem:[%s3 + $0x58] sm:$0xff]
      %v526 = vld [vmem:[%s3 + $0x60] sm:$0xff]
      %v527 = vld [vmem:[%s3 + $0x68] sm:$0xff]
      %v528 = vld [vmem:[%s3 + $0x70] sm:$0xff]
      %v529 = vld [vmem:[%s3 + $0x78] sm:$0xff]
      %v530 = vld [vmem:[%s3 + $0x80] sm:$0xff]
      %v531 = vld [vmem:[%s3 + $0x88] sm:$0xff]
      %v532 = vld [vmem:[%s3 + $0x90] sm:$0xff]
      %v533 = vld [vmem:[%s3 + $0x98] sm:$0xff]
      %v534 = vld [vmem:[%s3 + $0xa0] sm:$0xff]
      %v535 = vld [vmem:[%s3 + $0xa8] sm:$0xff]
      %v536 = vld [vmem:[%s3 + $0xb0] sm:$0xff]
      %v537 = vld [vmem:[%s3 + $0xb8] sm:$0xff]
      %v538 = vld [vmem:[%s3 + $0xc0] sm:$0xff]
      %v539 = vld [vmem:[%s3 + $0xc8] sm:$0xff]
      %v540 = vld [vmem:[%s3 + $0xd0] sm:$0xff]
      %v541 = vld [vmem:[%s3 + $0xd8] sm:$0xff]
      %v542 = vld [vmem:[%s3 + $0xe0] sm:$0xff]
      %v543 = vld [vmem:[%s3 + $0xe8] sm:$0xff]
      %v544 = vld [vmem:[%s3 + $0xf0] sm:$0xff]
      %v545 = vld [vmem:[%s3 + $0xf8] sm:$0xff]
      %v546 = vld [vmem:[%s3 + $0x100] sm:$0xff]
      %v547 = vld [vmem:[%s3 + $0x108] sm:$0xff]
      %v548 = vld [vmem:[%s3 + $0x110] sm:$0xff]
      %v549 = vld [vmem:[%s3 + $0x118] sm:$0xff]
      %v550 = vld [vmem:[%s3 + $0x120] sm:$0xff]
      %v551 = vld [vmem:[%s3 + $0x128] sm:$0xff]
      %v552 = vld [vmem:[%s3 + $0x130] sm:$0xff]
      %v553 = vld [vmem:[%s3 + $0x138] sm:$0xff]
      %v554 = vld [vmem:[%s3 + $0x140] sm:$0xff]
      %v555 = vld [vmem:[%s3 + $0x148] sm:$0xff]
      %v556 = vld [vmem:[%s3 + $0x150] sm:$0xff]
      %v557 = vld [vmem:[%s3 + $0x158] sm:$0xff]
      %v558 = vld [vmem:[%s3 + $0x160] sm:$0xff]
      %v559 = vld [vmem:[%s3 + $0x168] sm:$0xff]
      %v560 = vld [vmem:[%s3 + $0x170] sm:$0xff]
      %v561 = vld [vmem:[%s3 + $0x178] sm:$0xff]
      %v562 = vld [vmem:[%s3 + $0x180] sm:$0xff]
      %v563 = vld [vmem:[%s3 + $0x188] sm:$0xff]
      %v564 = vld [vmem:[%s3 + $0x190] sm:$0xff]
      %v565 = vld [vmem:[%s3 + $0x198] sm:$0xff]
      %v566 = vld [vmem:[%s3 + $0x1a0] sm:$0xff]
      %v567 = vld [vmem:[%s3 + $0x1a8] sm:$0xff]
      %v568 = vld [vmem:[%s3 + $0x1b0] sm:$0xff]
      %v569 = vld [vmem:[%s3 + $0x1b8] sm:$0xff]
      %v570 = vld [vmem:[%s3 + $0x1c0] sm:$0xff]
      %v571 = vld [vmem:[%s3 + $0x1c8] sm:$0xff]
      %v572 = vld [vmem:[%s3 + $0x1d0] sm:$0xff]
      %v573 = vld [vmem:[%s3 + $0x1d8] sm:$0xff]
      %v574 = vld [vmem:[%s3 + $0x1e0] sm:$0xff]
      %v575 = vld [vmem:[%s3 + $0x1e8] sm:$0xff]
      %v576 = vld [vmem:[%s3 + $0x1f0] sm:$0xff]
      %v577 = vld [vmem:[%s3 + $0x1f8] sm:$0xff]
      %v578 = vld [vmem:[%s3 + $0x200] sm:$0xff]
      %v579 = vld [vmem:[%s3 + $0x208] sm:$0xff]
      %v580 = vld [vmem:[%s3 + $0x210] sm:$0xff]
      %v581 = vld [vmem:[%s3 + $0x218] sm:$0xff]
      %v582 = vld [vmem:[%s3 + $0x220] sm:$0xff]
      %v583 = vld [vmem:[%s3 + $0x228] sm:$0xff]
      %v584 = vld [vmem:[%s3 + $0x230] sm:$0xff]
      %v585 = vld [vmem:[%s3 + $0x238] sm:$0xff]
      %v586 = vld [vmem:[%s3 + $0x240] sm:$0xff]
      %v587 = vld [vmem:[%s3 + $0x248] sm:$0xff]
      %v588 = vld [vmem:[%s3 + $0x250] sm:$0xff]
      %v589 = vld [vmem:[%s3 + $0x258] sm:$0xff]
      %v590 = vld [vmem:[%s3 + $0x260] sm:$0xff]
      %v591 = vld [vmem:[%s3 + $0x268] sm:$0xff]
      %v592 = vld [vmem:[%s3 + $0x270] sm:$0xff]
      %v593 = vld [vmem:[%s3 + $0x278] sm:$0xff]
      %v594 = vld [vmem:[%s3 + $0x280] sm:$0xff]
      %v595 = vld [vmem:[%s3 + $0x288] sm:$0xff]
      %v596 = vld [vmem:[%s3 + $0x290] sm:$0xff]
      %v597 = vld [vmem:[%s3 + $0x298] sm:$0xff]
      %v598 = vld [vmem:[%s3 + $0x2a0] sm:$0xff]
      %v599 = vld [vmem:[%s3 + $0x2a8] sm:$0xff]
      %v600 = vld [vmem:[%s3 + $0x2b0] sm:$0xff]
      %v601 = vld [vmem:[%s3 + $0x2b8] sm:$0xff]
      %v602 = vld [vmem:[%s3 + $0x2c0] sm:$0xff]
      %v603 = vld [vmem:[%s3 + $0x2c8] sm:$0xff]
      %v604 = vld [vmem:[%s3 + $0x2d0] sm:$0xff]
      %v605 = vld [vmem:[%s3 + $0x2d8] sm:$0xff]
      %v606 = vld [vmem:[%s3 + $0x2e0] sm:$0xff]
      %v607 = vld [vmem:[%s3 + $0x2e8] sm:$0xff]
      %v608 = vld [vmem:[%s3 + $0x2f0] sm:$0xff]
      %v609 = vld [vmem:[%s3 + $0x2f8] sm:$0xff]
      %v610 = vld [vmem:[%s3 + $0x300] sm:$0xff]
      %v611 = vld [vmem:[%s3 + $0x308] sm:$0xff]
      %v612 = vld [vmem:[%s3 + $0x310] sm:$0xff]
      %v613 = vld [vmem:[%s3 + $0x318] sm:$0xff]
      %v614 = vld [vmem:[%s3 + $0x320] sm:$0xff]
      %v615 = vld [vmem:[%s3 + $0x328] sm:$0xff]
      %v616 = vld [vmem:[%s3 + $0x330] sm:$0xff]
      %v617 = vld [vmem:[%s3 + $0x338] sm:$0xff]
      %v618 = vld [vmem:[%s3 + $0x340] sm:$0xff]
      %v619 = vld [vmem:[%s3 + $0x348] sm:$0xff]
      %v620 = vld [vmem:[%s3 + $0x350] sm:$0xff]
      %v621 = vld [vmem:[%s3 + $0x358] sm:$0xff]
      %v622 = vld [vmem:[%s3 + $0x360] sm:$0xff]
      %v623 = vld [vmem:[%s3 + $0x368] sm:$0xff]
      %v624 = vld [vmem:[%s3 + $0x370] sm:$0xff]
      %v625 = vld [vmem:[%s3 + $0x378] sm:$0xff]
      %v626 = vld [vmem:[%s3 + $0x380] sm:$0xff]
      %v627 = vld [vmem:[%s3 + $0x388] sm:$0xff]
      %v628 = vld [vmem:[%s3 + $0x390] sm:$0xff]
      %v629 = vld [vmem:[%s3 + $0x398] sm:$0xff]
      %v630 = vld [vmem:[%s3 + $0x3a0] sm:$0xff]
      %v631 = vld [vmem:[%s3 + $0x3a8] sm:$0xff]
      %v632 = vld [vmem:[%s3 + $0x3b0] sm:$0xff]
      %v633 = vld [vmem:[%s3 + $0x3b8] sm:$0xff]
      %v634 = vld [vmem:[%s3 + $0x3c0] sm:$0xff]
      %v635 = vld [vmem:[%s3 + $0x3c8] sm:$0xff]
      %v636 = vld [vmem:[%s3 + $0x3d0] sm:$0xff]
      %v637 = vld [vmem:[%s3 + $0x3d8] sm:$0xff]
      %v638 = vld [vmem:[%s3 + $0x3e0] sm:$0xff]
      %v639 = vld [vmem:[%s3 + $0x3e8] sm:$0xff]
      %v640 = vld [vmem:[%s3 + $0x3f0] sm:$0xff]
      %v641 = vld [vmem:[%s3 + $0x3f8] sm:$0xff]
      %v770 = vunpack.c.l.b16 %v514
      %v771 = vunpack.c.h.b16 %v514
      %v772 = vunpack.c.l.b16 %v515
      %v773 = vunpack.c.h.b16 %v515
      %v774 = vunpack.c.l.b16 %v516
      %v775 = vunpack.c.h.b16 %v516
      %v776 = vunpack.c.l.b16 %v517
      %v777 = vunpack.c.h.b16 %v517
      %v778 = vunpack.c.l.b16 %v518
      %v779 = vunpack.c.h.b16 %v518
      %v780 = vunpack.c.l.b16 %v519
      %v781 = vunpack.c.h.b16 %v519
      %v782 = vunpack.c.l.b16 %v520
      %v783 = vunpack.c.h.b16 %v520
      %v784 = vunpack.c.l.b16 %v521
      %v785 = vunpack.c.h.b16 %v521
      %v786 = vunpack.c.l.b16 %v522
      %v787 = vunpack.c.h.b16 %v522
      %v788 = vunpack.c.l.b16 %v523
      %v789 = vunpack.c.h.b16 %v523
      %v790 = vunpack.c.l.b16 %v524
      %v791 = vunpack.c.h.b16 %v524
      %v792 = vunpack.c.l.b16 %v525
      %v793 = vunpack.c.h.b16 %v525
      %v794 = vunpack.c.l.b16 %v526
      %v795 = vunpack.c.h.b16 %v526
      %v796 = vunpack.c.l.b16 %v527
      %v797 = vunpack.c.h.b16 %v527
      %v798 = vunpack.c.l.b16 %v528
      %v799 = vunpack.c.h.b16 %v528
      %v800 = vunpack.c.l.b16 %v529
      %v801 = vunpack.c.h.b16 %v529
      %v802 = vunpack.c.l.b16 %v530
      %v803 = vunpack.c.h.b16 %v530
      %v804 = vunpack.c.l.b16 %v531
      %v805 = vunpack.c.h.b16 %v531
      %v806 = vunpack.c.l.b16 %v532
      %v807 = vunpack.c.h.b16 %v532
      %v808 = vunpack.c.l.b16 %v533
      %v809 = vunpack.c.h.b16 %v533
      %v810 = vunpack.c.l.b16 %v534
      %v811 = vunpack.c.h.b16 %v534
      %v812 = vunpack.c.l.b16 %v535
      %v813 = vunpack.c.h.b16 %v535
      %v814 = vunpack.c.l.b16 %v536
      %v815 = vunpack.c.h.b16 %v536
      %v816 = vunpack.c.l.b16 %v537
      %v817 = vunpack.c.h.b16 %v537
      %v818 = vunpack.c.l.b16 %v538
      %v819 = vunpack.c.h.b16 %v538
      %v820 = vunpack.c.l.b16 %v539
      %v821 = vunpack.c.h.b16 %v539
      %v822 = vunpack.c.l.b16 %v540
      %v823 = vunpack.c.h.b16 %v540
      %v824 = vunpack.c.l.b16 %v541
      %v825 = vunpack.c.h.b16 %v541
      %v826 = vunpack.c.l.b16 %v542
      %v827 = vunpack.c.h.b16 %v542
      %v828 = vunpack.c.l.b16 %v543
      %v829 = vunpack.c.h.b16 %v543
      %v830 = vunpack.c.l.b16 %v544
      %v831 = vunpack.c.h.b16 %v544
      %v832 = vunpack.c.l.b16 %v545
      %v833 = vunpack.c.h.b16 %v545
      %v834 = vunpack.c.l.b16 %v546
      %v835 = vunpack.c.h.b16 %v546
      %v836 = vunpack.c.l.b16 %v547
      %v837 = vunpack.c.h.b16 %v547
      %v838 = vunpack.c.l.b16 %v548
      %v839 = vunpack.c.h.b16 %v548
      %v840 = vunpack.c.l.b16 %v549
      %v841 = vunpack.c.h.b16 %v549
      %v842 = vunpack.c.l.b16 %v550
      %v843 = vunpack.c.h.b16 %v550
      %v844 = vunpack.c.l.b16 %v551
      %v845 = vunpack.c.h.b16 %v551
      %v846 = vunpack.c.l.b16 %v552
      %v847 = vunpack.c.h.b16 %v552
      %v848 = vunpack.c.l.b16 %v553
      %v849 = vunpack.c.h.b16 %v553
      %v850 = vunpack.c.l.b16 %v554
      %v851 = vunpack.c.h.b16 %v554
      %v852 = vunpack.c.l.b16 %v555
      %v853 = vunpack.c.h.b16 %v555
      %v854 = vunpack.c.l.b16 %v556
      %v855 = vunpack.c.h.b16 %v556
      %v856 = vunpack.c.l.b16 %v557
      %v857 = vunpack.c.h.b16 %v557
      %v858 = vunpack.c.l.b16 %v558
      %v859 = vunpack.c.h.b16 %v558
      %v860 = vunpack.c.l.b16 %v559
      %v861 = vunpack.c.h.b16 %v559
      %v862 = vunpack.c.l.b16 %v560
      %v863 = vunpack.c.h.b16 %v560
      %v864 = vunpack.c.l.b16 %v561
      %v865 = vunpack.c.h.b16 %v561
      %v866 = vunpack.c.l.b16 %v562
      %v867 = vunpack.c.h.b16 %v562
      %v868 = vunpack.c.l.b16 %v563
      %v869 = vunpack.c.h.b16 %v563
      %v870 = vunpack.c.l.b16 %v564
      %v871 = vunpack.c.h.b16 %v564
      %v872 = vunpack.c.l.b16 %v565
      %v873 = vunpack.c.h.b16 %v565
      %v874 = vunpack.c.l.b16 %v566
      %v875 = vunpack.c.h.b16 %v566
      %v876 = vunpack.c.l.b16 %v567
      %v877 = vunpack.c.h.b16 %v567
      %v878 = vunpack.c.l.b16 %v568
      %v879 = vunpack.c.h.b16 %v568
      %v880 = vunpack.c.l.b16 %v569
      %v881 = vunpack.c.h.b16 %v569
      %v882 = vunpack.c.l.b16 %v570
      %v883 = vunpack.c.h.b16 %v570
      %v884 = vunpack.c.l.b16 %v571
      %v885 = vunpack.c.h.b16 %v571
      %v886 = vunpack.c.l.b16 %v572
      %v887 = vunpack.c.h.b16 %v572
      %v888 = vunpack.c.l.b16 %v573
      %v889 = vunpack.c.h.b16 %v573
      %v890 = vunpack.c.l.b16 %v574
      %v891 = vunpack.c.h.b16 %v574
      %v892 = vunpack.c.l.b16 %v575
      %v893 = vunpack.c.h.b16 %v575
      %v894 = vunpack.c.l.b16 %v576
      %v895 = vunpack.c.h.b16 %v576
      %v896 = vunpack.c.l.b16 %v577
      %v897 = vunpack.c.h.b16 %v577
      %v898 = vunpack.c.l.b16 %v578
      %v899 = vunpack.c.h.b16 %v578
      %v900 = vunpack.c.l.b16 %v579
      %v901 = vunpack.c.h.b16 %v579
      %v902 = vunpack.c.l.b16 %v580
      %v903 = vunpack.c.h.b16 %v580
      %v904 = vunpack.c.l.b16 %v581
      %v905 = vunpack.c.h.b16 %v581
      %v906 = vunpack.c.l.b16 %v582
      %v907 = vunpack.c.h.b16 %v582
      %v908 = vunpack.c.l.b16 %v583
      %v909 = vunpack.c.h.b16 %v583
      %v910 = vunpack.c.l.b16 %v584
      %v911 = vunpack.c.h.b16 %v584
      %v912 = vunpack.c.l.b16 %v585
      %v913 = vunpack.c.h.b16 %v585
      %v914 = vunpack.c.l.b16 %v586
      %v915 = vunpack.c.h.b16 %v586
      %v916 = vunpack.c.l.b16 %v587
      %v917 = vunpack.c.h.b16 %v587
      %v918 = vunpack.c.l.b16 %v588
      %v919 = vunpack.c.h.b16 %v588
      %v920 = vunpack.c.l.b16 %v589
      %v921 = vunpack.c.h.b16 %v589
      %v922 = vunpack.c.l.b16 %v590
      %v923 = vunpack.c.h.b16 %v590
      %v924 = vunpack.c.l.b16 %v591
      %v925 = vunpack.c.h.b16 %v591
      %v926 = vunpack.c.l.b16 %v592
      %v927 = vunpack.c.h.b16 %v592
      %v928 = vunpack.c.l.b16 %v593
      %v929 = vunpack.c.h.b16 %v593
      %v930 = vunpack.c.l.b16 %v594
      %v931 = vunpack.c.h.b16 %v594
      %v932 = vunpack.c.l.b16 %v595
      %v933 = vunpack.c.h.b16 %v595
      %v934 = vunpack.c.l.b16 %v596
      %v935 = vunpack.c.h.b16 %v596
      %v936 = vunpack.c.l.b16 %v597
      %v937 = vunpack.c.h.b16 %v597
      %v938 = vunpack.c.l.b16 %v598
      %v939 = vunpack.c.h.b16 %v598
      %v940 = vunpack.c.l.b16 %v599
      %v941 = vunpack.c.h.b16 %v599
      %v942 = vunpack.c.l.b16 %v600
      %v943 = vunpack.c.h.b16 %v600
      %v944 = vunpack.c.l.b16 %v601
      %v945 = vunpack.c.h.b16 %v601
      %v946 = vunpack.c.l.b16 %v602
      %v947 = vunpack.c.h.b16 %v602
      %v948 = vunpack.c.l.b16 %v603
      %v949 = vunpack.c.h.b16 %v603
      %v950 = vunpack.c.l.b16 %v604
      %v951 = vunpack.c.h.b16 %v604
      %v952 = vunpack.c.l.b16 %v605
      %v953 = vunpack.c.h.b16 %v605
      %v954 = vunpack.c.l.b16 %v606
      %v955 = vunpack.c.h.b16 %v606
      %v956 = vunpack.c.l.b16 %v607
      %v957 = vunpack.c.h.b16 %v607
      %v958 = vunpack.c.l.b16 %v608
      %v959 = vunpack.c.h.b16 %v608
      %v960 = vunpack.c.l.b16 %v609
      %v961 = vunpack.c.h.b16 %v609
      %v962 = vunpack.c.l.b16 %v610
      %v963 = vunpack.c.h.b16 %v610
      %v964 = vunpack.c.l.b16 %v611
      %v965 = vunpack.c.h.b16 %v611
      %v966 = vunpack.c.l.b16 %v612
      %v967 = vunpack.c.h.b16 %v612
      %v968 = vunpack.c.l.b16 %v613
      %v969 = vunpack.c.h.b16 %v613
      %v970 = vunpack.c.l.b16 %v614
      %v971 = vunpack.c.h.b16 %v614
      %v972 = vunpack.c.l.b16 %v615
      %v973 = vunpack.c.h.b16 %v615
      %v974 = vunpack.c.l.b16 %v616
      %v975 = vunpack.c.h.b16 %v616
      %v976 = vunpack.c.l.b16 %v617
      %v977 = vunpack.c.h.b16 %v617
      %v978 = vunpack.c.l.b16 %v618
      %v979 = vunpack.c.h.b16 %v618
      %v980 = vunpack.c.l.b16 %v619
      %v981 = vunpack.c.h.b16 %v619
      %v982 = vunpack.c.l.b16 %v620
      %v983 = vunpack.c.h.b16 %v620
      %v984 = vunpack.c.l.b16 %v621
      %v985 = vunpack.c.h.b16 %v621
      %v986 = vunpack.c.l.b16 %v622
      %v987 = vunpack.c.h.b16 %v622
      %v988 = vunpack.c.l.b16 %v623
      %v989 = vunpack.c.h.b16 %v623
      %v990 = vunpack.c.l.b16 %v624
      %v991 = vunpack.c.h.b16 %v624
      %v992 = vunpack.c.l.b16 %v625
      %v993 = vunpack.c.h.b16 %v625
      %v994 = vunpack.c.l.b16 %v626
      %v995 = vunpack.c.h.b16 %v626
      %v996 = vunpack.c.l.b16 %v627
      %v997 = vunpack.c.h.b16 %v627
      %v998 = vunpack.c.l.b16 %v628
      %v999 = vunpack.c.h.b16 %v628
      %v1000 = vunpack.c.l.b16 %v629
      %v1001 = vunpack.c.h.b16 %v629
      %v1002 = vunpack.c.l.b16 %v630
      %v1003 = vunpack.c.h.b16 %v630
      %v1004 = vunpack.c.l.b16 %v631
      %v1005 = vunpack.c.h.b16 %v631
      %v1006 = vunpack.c.l.b16 %v632
      %v1007 = vunpack.c.h.b16 %v632
      %v1008 = vunpack.c.l.b16 %v633
      %v1009 = vunpack.c.h.b16 %v633
      %v1010 = vunpack.c.l.b16 %v634
      %v1011 = vunpack.c.h.b16 %v634
      %v1012 = vunpack.c.l.b16 %v635
      %v1013 = vunpack.c.h.b16 %v635
      %v1014 = vunpack.c.l.b16 %v636
      %v1015 = vunpack.c.h.b16 %v636
      %v1016 = vunpack.c.l.b16 %v637
      %v1017 = vunpack.c.h.b16 %v637
      %v1018 = vunpack.c.l.b16 %v638
      %v1019 = vunpack.c.h.b16 %v638
      %v1020 = vunpack.c.l.b16 %v639
      %v1021 = vunpack.c.h.b16 %v639
      %v1022 = vunpack.c.l.b16 %v640
      %v1023 = vunpack.c.h.b16 %v640
      %v1024 = vunpack.c.l.b16 %v641
      %v1025 = vunpack.c.h.b16 %v641
      %v1026 = vpack.c.b16 %v778, %v770
      %v1027 = vpack.c.b16 %v779, %v771
      %v1028 = vpack.c.b16 %v780, %v772
      %v1029 = vpack.c.b16 %v781, %v773
      %v1030 = vpack.c.b16 %v782, %v774
      %v1031 = vpack.c.b16 %v783, %v775
      %v1032 = vpack.c.b16 %v784, %v776
      %v1033 = vpack.c.b16 %v785, %v777
      %v1034 = vpack.c.b16 %v794, %v786
      %v1035 = vpack.c.b16 %v795, %v787
      %v1036 = vpack.c.b16 %v796, %v788
      %v1037 = vpack.c.b16 %v797, %v789
      %v1038 = vpack.c.b16 %v798, %v790
      %v1039 = vpack.c.b16 %v799, %v791
      %v1040 = vpack.c.b16 %v800, %v792
      %v1041 = vpack.c.b16 %v801, %v793
      %v1042 = vpack.c.b16 %v810, %v802
      %v1043 = vpack.c.b16 %v811, %v803
      %v1044 = vpack.c.b16 %v812, %v804
      %v1045 = vpack.c.b16 %v813, %v805
      %v1046 = vpack.c.b16 %v814, %v806
      %v1047 = vpack.c.b16 %v815, %v807
      %v1048 = vpack.c.b16 %v816, %v808
      %v1049 = vpack.c.b16 %v817, %v809
      %v1050 = vpack.c.b16 %v826, %v818
      %v1051 = vpack.c.b16 %v827, %v819
      %v1052 = vpack.c.b16 %v828, %v820
      %v1053 = vpack.c.b16 %v829, %v821
      %v1054 = vpack.c.b16 %v830, %v822
      %v1055 = vpack.c.b16 %v831, %v823
      %v1056 = vpack.c.b16 %v832, %v824
      %v1057 = vpack.c.b16 %v833, %v825
      %v1058 = vpack.c.b16 %v842, %v834
      %v1059 = vpack.c.b16 %v843, %v835
      %v1060 = vpack.c.b16 %v844, %v836
      %v1061 = vpack.c.b16 %v845, %v837
      %v1062 = vpack.c.b16 %v846, %v838
      %v1063 = vpack.c.b16 %v847, %v839
      %v1064 = vpack.c.b16 %v848, %v840
      %v1065 = vpack.c.b16 %v849, %v841
      %v1066 = vpack.c.b16 %v858, %v850
      %v1067 = vpack.c.b16 %v859, %v851
      %v1068 = vpack.c.b16 %v860, %v852
      %v1069 = vpack.c.b16 %v861, %v853
      %v1070 = vpack.c.b16 %v862, %v854
      %v1071 = vpack.c.b16 %v863, %v855
      %v1072 = vpack.c.b16 %v864, %v856
      %v1073 = vpack.c.b16 %v865, %v857
      %v1074 = vpack.c.b16 %v874, %v866
      %v1075 = vpack.c.b16 %v875, %v867
      %v1076 = vpack.c.b16 %v876, %v868
      %v1077 = vpack.c.b16 %v877, %v869
      %v1078 = vpack.c.b16 %v878, %v870
      %v1079 = vpack.c.b16 %v879, %v871
      %v1080 = vpack.c.b16 %v880, %v872
      %v1081 = vpack.c.b16 %v881, %v873
      %v1082 = vpack.c.b16 %v890, %v882
      %v1083 = vpack.c.b16 %v891, %v883
      %v1084 = vpack.c.b16 %v892, %v884
      %v1085 = vpack.c.b16 %v893, %v885
      %v1086 = vpack.c.b16 %v894, %v886
      %v1087 = vpack.c.b16 %v895, %v887
      %v1088 = vpack.c.b16 %v896, %v888
      %v1089 = vpack.c.b16 %v897, %v889
      %v1090 = vpack.c.b16 %v906, %v898
      %v1091 = vpack.c.b16 %v907, %v899
      %v1092 = vpack.c.b16 %v908, %v900
      %v1093 = vpack.c.b16 %v909, %v901
      %v1094 = vpack.c.b16 %v910, %v902
      %v1095 = vpack.c.b16 %v911, %v903
      %v1096 = vpack.c.b16 %v912, %v904
      %v1097 = vpack.c.b16 %v913, %v905
      %v1098 = vpack.c.b16 %v922, %v914
      %v1099 = vpack.c.b16 %v923, %v915
      %v1100 = vpack.c.b16 %v924, %v916
      %v1101 = vpack.c.b16 %v925, %v917
      %v1102 = vpack.c.b16 %v926, %v918
      %v1103 = vpack.c.b16 %v927, %v919
      %v1104 = vpack.c.b16 %v928, %v920
      %v1105 = vpack.c.b16 %v929, %v921
      %v1106 = vpack.c.b16 %v938, %v930
      %v1107 = vpack.c.b16 %v939, %v931
      %v1108 = vpack.c.b16 %v940, %v932
      %v1109 = vpack.c.b16 %v941, %v933
      %v1110 = vpack.c.b16 %v942, %v934
      %v1111 = vpack.c.b16 %v943, %v935
      %v1112 = vpack.c.b16 %v944, %v936
      %v1113 = vpack.c.b16 %v945, %v937
      %v1114 = vpack.c.b16 %v954, %v946
      %v1115 = vpack.c.b16 %v955, %v947
      %v1116 = vpack.c.b16 %v956, %v948
      %v1117 = vpack.c.b16 %v957, %v949
      %v1118 = vpack.c.b16 %v958, %v950
      %v1119 = vpack.c.b16 %v959, %v951
      %v1120 = vpack.c.b16 %v960, %v952
      %v1121 = vpack.c.b16 %v961, %v953
      %v1122 = vpack.c.b16 %v970, %v962
      %v1123 = vpack.c.b16 %v971, %v963
      %v1124 = vpack.c.b16 %v972, %v964
      %v1125 = vpack.c.b16 %v973, %v965
      %v1126 = vpack.c.b16 %v974, %v966
      %v1127 = vpack.c.b16 %v975, %v967
      %v1128 = vpack.c.b16 %v976, %v968
      %v1129 = vpack.c.b16 %v977, %v969
      %v1130 = vpack.c.b16 %v986, %v978
      %v1131 = vpack.c.b16 %v987, %v979
      %v1132 = vpack.c.b16 %v988, %v980
      %v1133 = vpack.c.b16 %v989, %v981
      %v1134 = vpack.c.b16 %v990, %v982
      %v1135 = vpack.c.b16 %v991, %v983
      %v1136 = vpack.c.b16 %v992, %v984
      %v1137 = vpack.c.b16 %v993, %v985
      %v1138 = vpack.c.b16 %v1002, %v994
      %v1139 = vpack.c.b16 %v1003, %v995
      %v1140 = vpack.c.b16 %v1004, %v996
      %v1141 = vpack.c.b16 %v1005, %v997
      %v1142 = vpack.c.b16 %v1006, %v998
      %v1143 = vpack.c.b16 %v1007, %v999
      %v1144 = vpack.c.b16 %v1008, %v1000
      %v1145 = vpack.c.b16 %v1009, %v1001
      %v1146 = vpack.c.b16 %v1018, %v1010
      %v1147 = vpack.c.b16 %v1019, %v1011
      %v1148 = vpack.c.b16 %v1020, %v1012
      %v1149 = vpack.c.b16 %v1021, %v1013
      %v1150 = vpack.c.b16 %v1022, %v1014
      %v1151 = vpack.c.b16 %v1023, %v1015
      %v1152 = vpack.c.b16 %v1024, %v1016
      %v1153 = vpack.c.b16 %v1025, %v1017
      %1282 = vmatprep.subr.bf16.mxu0 %v1027
      %1283 = vmatpush1.bf16.msra.mxu0 %v1026
      %1284 = vmatprep.subr.bf16.mxu0 %v1035
      %1285 = vmatpush1.bf16.msra.mxu0 %v1034
      %1286 = vmatprep.subr.bf16.mxu0 %v1043
      %1287 = vmatpush1.bf16.msra.mxu0 %v1042
      %1288 = vmatprep.subr.bf16.mxu0 %v1051
      %1289 = vmatpush1.bf16.msra.mxu0 %v1050
      %1290 = vmatprep.subr.bf16.mxu0 %v1059
      %1291 = vmatpush1.bf16.msra.mxu0 %v1058
      %1292 = vmatprep.subr.bf16.mxu0 %v1067
      %1293 = vmatpush1.bf16.msra.mxu0 %v1066
      %1294 = vmatprep.subr.bf16.mxu0 %v1075
      %1295 = vmatpush1.bf16.msra.mxu0 %v1074
      %1296 = vmatprep.subr.bf16.mxu0 %v1083
      %1297 = vmatpush1.bf16.msra.mxu0 %v1082
      %1298 = vmatprep.subr.bf16.mxu0 %v1091
      %1299 = vmatpush1.bf16.msra.mxu0 %v1090
      %1300 = vmatprep.subr.bf16.mxu0 %v1099
      %1301 = vmatpush1.bf16.msra.mxu0 %v1098
      %1302 = vmatprep.subr.bf16.mxu0 %v1107
      %1303 = vmatpush1.bf16.msra.mxu0 %v1106
      %1304 = vmatprep.subr.bf16.mxu0 %v1115
      %1305 = vmatpush1.bf16.msra.mxu0 %v1114
      %1306 = vmatprep.subr.bf16.mxu0 %v1123
      %1307 = vmatpush1.bf16.msra.mxu0 %v1122
      %1308 = vmatprep.subr.bf16.mxu0 %v1131
      %1309 = vmatpush1.bf16.msra.mxu0 %v1130
      %1310 = vmatprep.subr.bf16.mxu0 %v1139
      %1311 = vmatpush1.bf16.msra.mxu0 %v1138
      %1312 = vmatprep.subr.bf16.mxu0 %v1147
      %1313 = vmatpush1.bf16.msra.mxu0 %v1146
      %1314 = vmatprep.mubr.bf16.mxu0 %v507
      %1315 = vmatmul.mubr.bf16.gmra.mrb[0].mxu0 %v506
      %v1316 = vpop.f32.mrb[0].mxu0
      %v1317 = vadd.f32 0.0, %v1316
      %v1318 = vpop.f32.mrb[0].mxu0
      %v1319 = vadd.f32 0.0, %v1318
      %v1320 = vpop.f32.mrb[0].mxu0
      %v1321 = vadd.f32 0.0, %v1320
      %v1322 = vpop.f32.mrb[0].mxu0
      %v1323 = vadd.f32 0.0, %v1322
      %1324 = vmatprep.mubr.bf16.mxu0 %v509
      %1325 = vmatmul.mubr.bf16.gmra.mrb[0].mxu0 %v508
      %v1326 = vpop.f32.mrb[0].mxu0
      %v1327 = vadd.f32 0.0, %v1326
      %v1328 = vpop.f32.mrb[0].mxu0
      %v1329 = vadd.f32 0.0, %v1328
      %v1330 = vpop.f32.mrb[0].mxu0
      %v1331 = vadd.f32 0.0, %v1330
      %v1332 = vpop.f32.mrb[0].mxu0
      %v1333 = vadd.f32 0.0, %v1332
      %1334 = vmatprep.mubr.bf16.mxu0 %v511
      %1335 = vmatmul.mubr.bf16.gmra.mrb[0].mxu0 %v510
      %v1336 = vpop.f32.mrb[0].mxu0
      %v1337 = vadd.f32 0.0, %v1336
      %v1338 = vpop.f32.mrb[0].mxu0
      %v1339 = vadd.f32 0.0, %v1338
      %v1340 = vpop.f32.mrb[0].mxu0
      %v1341 = vadd.f32 0.0, %v1340
      %v1342 = vpop.f32.mrb[0].mxu0
      %v1343 = vadd.f32 0.0, %v1342
      %1344 = vmatprep.mubr.bf16.mxu0 %v513
      %1345 = vmatmul.mubr.bf16.gmra.mrb[0].mxu0 %v512
      %v1346 = vpop.f32.mrb[0].mxu0
      %v1347 = vadd.f32 0.0, %v1346
      %v1348 = vpop.f32.mrb[0].mxu0
      %v1349 = vadd.f32 0.0, %v1348
      %v1350 = vpop.f32.mrb[0].mxu0
      %v1351 = vadd.f32 0.0, %v1350
      %v1352 = vpop.f32.mrb[0].mxu0
      %v1353 = vadd.f32 0.0, %v1352
      %1354 = vdwg.mxu0
      %1355 = vmatprep.subr.bf16.mxu0 %v1029
      %1356 = vmatpush1.bf16.msra.mxu0 %v1028
      %1357 = vmatprep.subr.bf16.mxu0 %v1037
      %1358 = vmatpush1.bf16.msra.mxu0 %v1036
      %1359 = vmatprep.subr.bf16.mxu0 %v1045
      %1360 = vmatpush1.bf16.msra.mxu0 %v1044
      %1361 = vmatprep.subr.bf16.mxu0 %v1053
      %1362 = vmatpush1.bf16.msra.mxu0 %v1052
      %1363 = vmatprep.subr.bf16.mxu0 %v1061
      %1364 = vmatpush1.bf16.msra.mxu0 %v1060
      %1365 = vmatprep.subr.bf16.mxu0 %v1069
      %1366 = vmatpush1.bf16.msra.mxu0 %v1068
      %1367 = vmatprep.subr.bf16.mxu0 %v1077
      %1368 = vmatpush1.bf16.msra.mxu0 %v1076
      %1369 = vmatprep.subr.bf16.mxu0 %v1085
      %1370 = vmatpush1.bf16.msra.mxu0 %v1084
      %1371 = vmatprep.subr.bf16.mxu0 %v1093
      %1372 = vmatpush1.bf16.msra.mxu0 %v1092
      %1373 = vmatprep.subr.bf16.mxu0 %v1101
      %1374 = vmatpush1.bf16.msra.mxu0 %v1100
      %1375 = vmatprep.subr.bf16.mxu0 %v1109
      %1376 = vmatpush1.bf16.msra.mxu0 %v1108
      %1377 = vmatprep.subr.bf16.mxu0 %v1117
      %1378 = vmatpush1.bf16.msra.mxu0 %v1116
      %1379 = vmatprep.subr.bf16.mxu0 %v1125
      %1380 = vmatpush1.bf16.msra.mxu0 %v1124
      %1381 = vmatprep.subr.bf16.mxu0 %v1133
      %1382 = vmatpush1.bf16.msra.mxu0 %v1132
      %1383 = vmatprep.subr.bf16.mxu0 %v1141
      %1384 = vmatpush1.bf16.msra.mxu0 %v1140
      %1385 = vmatprep.subr.bf16.mxu0 %v1149
      %1386 = vmatpush1.bf16.msra.mxu0 %v1148
      %1387 = vmatprep.mubr.bf16.mxu0 %v507
      %1388 = vmatmul.mubr.bf16.gmra.mrb[0].mxu0 %v506
      %v1389 = vpop.f32.mrb[0].mxu0
      %v1390 = vadd.f32 0.0, %v1389
      %v1391 = vpop.f32.mrb[0].mxu0
      %v1392 = vadd.f32 0.0, %v1391
      %v1393 = vpop.f32.mrb[0].mxu0
      %v1394 = vadd.f32 0.0, %v1393
      %v1395 = vpop.f32.mrb[0].mxu0
      %v1396 = vadd.f32 0.0, %v1395
      %1397 = vmatprep.mubr.bf16.mxu0 %v509
      %1398 = vmatmul.mubr.bf16.gmra.mrb[0].mxu0 %v508
      %v1399 = vpop.f32.mrb[0].mxu0
      %v1400 = vadd.f32 0.0, %v1399
      %v1401 = vpop.f32.mrb[0].mxu0
      %v1402 = vadd.f32 0.0, %v1401
      %v1403 = vpop.f32.mrb[0].mxu0
      %v1404 = vadd.f32 0.0, %v1403
      %v1405 = vpop.f32.mrb[0].mxu0
      %v1406 = vadd.f32 0.0, %v1405
      %1407 = vmatprep.mubr.bf16.mxu0 %v511
      %1408 = vmatmul.mubr.bf16.gmra.mrb[0].mxu0 %v510
      %v1409 = vpop.f32.mrb[0].mxu0
      %v1410 = vadd.f32 0.0, %v1409
      %v1411 = vpop.f32.mrb[0].mxu0
      %v1412 = vadd.f32 0.0, %v1411
      %v1413 = vpop.f32.mrb[0].mxu0
      %v1414 = vadd.f32 0.0, %v1413
      %v1415 = vpop.f32.mrb[0].mxu0
      %v1416 = vadd.f32 0.0, %v1415
      %1417 = vmatprep.mubr.bf16.mxu0 %v513
      %1418 = vmatmul.mubr.bf16.gmra.mrb[0].mxu0 %v512
      %v1419 = vpop.f32.mrb[0].mxu0
      %v1420 = vadd.f32 0.0, %v1419
      %v1421 = vpop.f32.mrb[0].mxu0
      %v1422 = vadd.f32 0.0, %v1421
      %v1423 = vpop.f32.mrb[0].mxu0
      %v1424 = vadd.f32 0.0, %v1423
      %v1425 = vpop.f32.mrb[0].mxu0
      %v1426 = vadd.f32 0.0, %v1425
      %1427 = vdwg.mxu0
      %1428 = vmatprep.subr.bf16.mxu0 %v1031
      %1429 = vmatpush1.bf16.msra.mxu0 %v1030
      %1430 = vmatprep.subr.bf16.mxu0 %v1039
      %1431 = vmatpush1.bf16.msra.mxu0 %v1038
      %1432 = vmatprep.subr.bf16.mxu0 %v1047
      %1433 = vmatpush1.bf16.msra.mxu0 %v1046
      %1434 = vmatprep.subr.bf16.mxu0 %v1055
      %1435 = vmatpush1.bf16.msra.mxu0 %v1054
      %1436 = vmatprep.subr.bf16.mxu0 %v1063
      %1437 = vmatpush1.bf16.msra.mxu0 %v1062
      %1438 = vmatprep.subr.bf16.mxu0 %v1071
      %1439 = vmatpush1.bf16.msra.mxu0 %v1070
      %1440 = vmatprep.subr.bf16.mxu0 %v1079
      %1441 = vmatpush1.bf16.msra.mxu0 %v1078
      %1442 = vmatprep.subr.bf16.mxu0 %v1087
      %1443 = vmatpush1.bf16.msra.mxu0 %v1086
      %1444 = vmatprep.subr.bf16.mxu0 %v1095
      %1445 = vmatpush1.bf16.msra.mxu0 %v1094
      %1446 = vmatprep.subr.bf16.mxu0 %v1103
      %1447 = vmatpush1.bf16.msra.mxu0 %v1102
      %1448 = vmatprep.subr.bf16.mxu0 %v1111
      %1449 = vmatpush1.bf16.msra.mxu0 %v1110
      %1450 = vmatprep.subr.bf16.mxu0 %v1119
      %1451 = vmatpush1.bf16.msra.mxu0 %v1118
      %1452 = vmatprep.subr.bf16.mxu0 %v1127
      %1453 = vmatpush1.bf16.msra.mxu0 %v1126
      %1454 = vmatprep.subr.bf16.mxu0 %v1135
      %1455 = vmatpush1.bf16.msra.mxu0 %v1134
      %1456 = vmatprep.subr.bf16.mxu0 %v1143
      %1457 = vmatpush1.bf16.msra.mxu0 %v1142
      %1458 = vmatprep.subr.bf16.mxu0 %v1151
      %1459 = vmatpush1.bf16.msra.mxu0 %v1150
      %1460 = vmatprep.mubr.bf16.mxu0 %v507
      %1461 = vmatmul.mubr.bf16.gmra.mrb[0].mxu0 %v506
      %v1462 = vpop.f32.mrb[0].mxu0
      %v1463 = vadd.f32 0.0, %v1462
      %v1464 = vpop.f32.mrb[0].mxu0
      %v1465 = vadd.f32 0.0, %v1464
      %v1466 = vpop.f32.mrb[0].mxu0
      %v1467 = vadd.f32 0.0, %v1466
      %v1468 = vpop.f32.mrb[0].mxu0
      %v1469 = vadd.f32 0.0, %v1468
      %1470 = vmatprep.mubr.bf16.mxu0 %v509
      %1471 = vmatmul.mubr.bf16.gmra.mrb[0].mxu0 %v508
      %v1472 = vpop.f32.mrb[0].mxu0
      %v1473 = vadd.f32 0.0, %v1472
      %v1474 = vpop.f32.mrb[0].mxu0
      %v1475 = vadd.f32 0.0, %v1474
      %v1476 = vpop.f32.mrb[0].mxu0
      %v1477 = vadd.f32 0.0, %v1476
      %v1478 = vpop.f32.mrb[0].mxu0
      %v1479 = vadd.f32 0.0, %v1478
      %1480 = vmatprep.mubr.bf16.mxu0 %v511
      %1481 = vmatmul.mubr.bf16.gmra.mrb[0].mxu0 %v510
      %v1482 = vpop.f32.mrb[0].mxu0
      %v1483 = vadd.f32 0.0, %v1482
      %v1484 = vpop.f32.mrb[0].mxu0
      %v1485 = vadd.f32 0.0, %v1484
      %v1486 = vpop.f32.mrb[0].mxu0
      %v1487 = vadd.f32 0.0, %v1486
      %v1488 = vpop.f32.mrb[0].mxu0
      %v1489 = vadd.f32 0.0, %v1488
      %1490 = vmatprep.mubr.bf16.mxu0 %v513
      %1491 = vmatmul.mubr.bf16.gmra.mrb[0].mxu0 %v512
      %v1492 = vpop.f32.mrb[0].mxu0
      %v1493 = vadd.f32 0.0, %v1492
      %v1494 = vpop.f32.mrb[0].mxu0
      %v1495 = vadd.f32 0.0, %v1494
      %v1496 = vpop.f32.mrb[0].mxu0
      %v1497 = vadd.f32 0.0, %v1496
      %v1498 = vpop.f32.mrb[0].mxu0
      %v1499 = vadd.f32 0.0, %v1498
      %1500 = vdwg.mxu0
      %1501 = vmatprep.subr.bf16.mxu0 %v1033
      %1502 = vmatpush1.bf16.msra.mxu0 %v1032
      %1503 = vmatprep.subr.bf16.mxu0 %v1041
      %1504 = vmatpush1.bf16.msra.mxu0 %v1040
      %1505 = vmatprep.subr.bf16.mxu0 %v1049
      %1506 = vmatpush1.bf16.msra.mxu0 %v1048
      %1507 = vmatprep.subr.bf16.mxu0 %v1057
      %1508 = vmatpush1.bf16.msra.mxu0 %v1056
      %1509 = vmatprep.subr.bf16.mxu0 %v1065
      %1510 = vmatpush1.bf16.msra.mxu0 %v1064
      %1511 = vmatprep.subr.bf16.mxu0 %v1073
      %1512 = vmatpush1.bf16.msra.mxu0 %v1072
      %1513 = vmatprep.subr.bf16.mxu0 %v1081
      %1514 = vmatpush1.bf16.msra.mxu0 %v1080
      %1515 = vmatprep.subr.bf16.mxu0 %v1089
      %1516 = vmatpush1.bf16.msra.mxu0 %v1088
      %1517 = vmatprep.subr.bf16.mxu0 %v1097
      %1518 = vmatpush1.bf16.msra.mxu0 %v1096
      %1519 = vmatprep.subr.bf16.mxu0 %v1105
      %1520 = vmatpush1.bf16.msra.mxu0 %v1104
      %1521 = vmatprep.subr.bf16.mxu0 %v1113
      %1522 = vmatpush1.bf16.msra.mxu0 %v1112
      %1523 = vmatprep.subr.bf16.mxu0 %v1121
      %1524 = vmatpush1.bf16.msra.mxu0 %v1120
      %1525 = vmatprep.subr.bf16.mxu0 %v1129
      %1526 = vmatpush1.bf16.msra.mxu0 %v1128
      %1527 = vmatprep.subr.bf16.mxu0 %v1137
      %1528 = vmatpush1.bf16.msra.mxu0 %v1136
      %1529 = vmatprep.subr.bf16.mxu0 %v1145
      %1530 = vmatpush1.bf16.msra.mxu0 %v1144
      %1531 = vmatprep.subr.bf16.mxu0 %v1153
      %1532 = vmatpush1.bf16.msra.mxu0 %v1152
      %1533 = vmatprep.mubr.bf16.mxu0 %v507
      %1534 = vmatmul.mubr.bf16.gmra.mrb[0].mxu0 %v506
      %v1535 = vpop.f32.mrb[0].mxu0
      %v1536 = vadd.f32 0.0, %v1535
      %v1537 = vpop.f32.mrb[0].mxu0
      %v1538 = vadd.f32 0.0, %v1537
      %v1539 = vpop.f32.mrb[0].mxu0
      %v1540 = vadd.f32 0.0, %v1539
      %v1541 = vpop.f32.mrb[0].mxu0
      %v1542 = vadd.f32 0.0, %v1541
      %1543 = vmatprep.mubr.bf16.mxu0 %v509
      %1544 = vmatmul.mubr.bf16.gmra.mrb[0].mxu0 %v508
      %v1545 = vpop.f32.mrb[0].mxu0
      %v1546 = vadd.f32 0.0, %v1545
      %v1547 = vpop.f32.mrb[0].mxu0
      %v1548 = vadd.f32 0.0, %v1547
      %v1549 = vpop.f32.mrb[0].mxu0
      %v1550 = vadd.f32 0.0, %v1549
      %v1551 = vpop.f32.mrb[0].mxu0
      %v1552 = vadd.f32 0.0, %v1551
      %1553 = vmatprep.mubr.bf16.mxu0 %v511
      %1554 = vmatmul.mubr.bf16.gmra.mrb[0].mxu0 %v510
      %v1555 = vpop.f32.mrb[0].mxu0
      %v1556 = vadd.f32 0.0, %v1555
      %v1557 = vpop.f32.mrb[0].mxu0
      %v1558 = vadd.f32 0.0, %v1557
      %v1559 = vpop.f32.mrb[0].mxu0
      %v1560 = vadd.f32 0.0, %v1559
      %v1561 = vpop.f32.mrb[0].mxu0
      %v1562 = vadd.f32 0.0, %v1561
      %1563 = vmatprep.mubr.bf16.mxu0 %v513
      %1564 = vmatmul.mubr.bf16.gmra.mrb[0].mxu0 %v512
      %v1565 = vpop.f32.mrb[0].mxu0
      %v1566 = vadd.f32 0.0, %v1565
      %v1567 = vpop.f32.mrb[0].mxu0
      %v1568 = vadd.f32 0.0, %v1567
      %v1569 = vpop.f32.mrb[0].mxu0
      %v1570 = vadd.f32 0.0, %v1569
      %v1571 = vpop.f32.mrb[0].mxu0
      %v1572 = vadd.f32 0.0, %v1571
      %1573 = vdwg.mxu0
      %vm1574 = vcmp.ge.f32.partialorder %v1317, 0.0
      %vm1575 = vcmp.ge.f32.partialorder %v1319, 0.0
      %vm1576 = vcmp.ge.f32.partialorder %v1390, 0.0
      %vm1577 = vcmp.ge.f32.partialorder %v1392, 0.0
      %vm1578 = vcmp.ge.f32.partialorder %v1463, 0.0
      %vm1579 = vcmp.ge.f32.partialorder %v1465, 0.0
      %vm1580 = vcmp.ge.f32.partialorder %v1536, 0.0
      %vm1581 = vcmp.ge.f32.partialorder %v1538, 0.0
      %vm1582 = vcmp.ge.f32.partialorder %v1321, 0.0
      %vm1583 = vcmp.ge.f32.partialorder %v1323, 0.0
      %vm1584 = vcmp.ge.f32.partialorder %v1394, 0.0
      %vm1585 = vcmp.ge.f32.partialorder %v1396, 0.0
      %vm1586 = vcmp.ge.f32.partialorder %v1467, 0.0
      %vm1587 = vcmp.ge.f32.partialorder %v1469, 0.0
      %vm1588 = vcmp.ge.f32.partialorder %v1540, 0.0
      %vm1589 = vcmp.ge.f32.partialorder %v1542, 0.0
      %vm1590 = vcmp.ge.f32.partialorder %v1327, 0.0
      %vm1591 = vcmp.ge.f32.partialorder %v1329, 0.0
      %vm1592 = vcmp.ge.f32.partialorder %v1400, 0.0
      %vm1593 = vcmp.ge.f32.partialorder %v1402, 0.0
      %vm1594 = vcmp.ge.f32.partialorder %v1473, 0.0
      %vm1595 = vcmp.ge.f32.partialorder %v1475, 0.0
      %vm1596 = vcmp.ge.f32.partialorder %v1546, 0.0
      %vm1597 = vcmp.ge.f32.partialorder %v1548, 0.0
      %vm1598 = vcmp.ge.f32.partialorder %v1331, 0.0
      %vm1599 = vcmp.ge.f32.partialorder %v1333, 0.0
      %vm1600 = vcmp.ge.f32.partialorder %v1404, 0.0
      %vm1601 = vcmp.ge.f32.partialorder %v1406, 0.0
      %vm1602 = vcmp.ge.f32.partialorder %v1477, 0.0
      %vm1603 = vcmp.ge.f32.partialorder %v1479, 0.0
      %vm1604 = vcmp.ge.f32.partialorder %v1550, 0.0
      %vm1605 = vcmp.ge.f32.partialorder %v1552, 0.0
      %vm1606 = vcmp.ge.f32.partialorder %v1337, 0.0
      %vm1607 = vcmp.ge.f32.partialorder %v1339, 0.0
      %vm1608 = vcmp.ge.f32.partialorder %v1410, 0.0
      %vm1609 = vcmp.ge.f32.partialorder %v1412, 0.0
      %vm1610 = vcmp.ge.f32.partialorder %v1483, 0.0
      %vm1611 = vcmp.ge.f32.partialorder %v1485, 0.0
      %vm1612 = vcmp.ge.f32.partialorder %v1556, 0.0
      %vm1613 = vcmp.ge.f32.partialorder %v1558, 0.0
      %vm1614 = vcmp.ge.f32.partialorder %v1341, 0.0
      %vm1615 = vcmp.ge.f32.partialorder %v1343, 0.0
      %vm1616 = vcmp.ge.f32.partialorder %v1414, 0.0
      %vm1617 = vcmp.ge.f32.partialorder %v1416, 0.0
      %vm1618 = vcmp.ge.f32.partialorder %v1487, 0.0
      %vm1619 = vcmp.ge.f32.partialorder %v1489, 0.0
      %vm1620 = vcmp.ge.f32.partialorder %v1560, 0.0
      %vm1621 = vcmp.ge.f32.partialorder %v1562, 0.0
      %vm1622 = vcmp.ge.f32.partialorder %v1347, 0.0
      %vm1623 = vcmp.ge.f32.partialorder %v1349, 0.0
      %vm1624 = vcmp.ge.f32.partialorder %v1420, 0.0
      %vm1625 = vcmp.ge.f32.partialorder %v1422, 0.0
      %vm1626 = vcmp.ge.f32.partialorder %v1493, 0.0
      %vm1627 = vcmp.ge.f32.partialorder %v1495, 0.0
      %vm1628 = vcmp.ge.f32.partialorder %v1566, 0.0
      %vm1629 = vcmp.ge.f32.partialorder %v1568, 0.0
      %vm1630 = vcmp.ge.f32.partialorder %v1351, 0.0
      %vm1631 = vcmp.ge.f32.partialorder %v1353, 0.0
      %vm1632 = vcmp.ge.f32.partialorder %v1424, 0.0
      %vm1633 = vcmp.ge.f32.partialorder %v1426, 0.0
      %vm1634 = vcmp.ge.f32.partialorder %v1497, 0.0
      %vm1635 = vcmp.ge.f32.partialorder %v1499, 0.0
      %vm1636 = vcmp.ge.f32.partialorder %v1570, 0.0
      %vm1637 = vcmp.ge.f32.partialorder %v1572, 0.0
      %v1638 = vmul.f32 %v1317, 0.01
      %v1639 = vmul.f32 %v1319, 0.01
      %v1640 = vmul.f32 %v1390, 0.01
      %v1641 = vmul.f32 %v1392, 0.01
      %v1642 = vmul.f32 %v1463, 0.01
      %v1643 = vmul.f32 %v1465, 0.01
      %v1644 = vmul.f32 %v1536, 0.01
      %v1645 = vmul.f32 %v1538, 0.01
      %v1646 = vmul.f32 %v1321, 0.01
      %v1647 = vmul.f32 %v1323, 0.01
      %v1648 = vmul.f32 %v1394, 0.01
      %v1649 = vmul.f32 %v1396, 0.01
      %v1650 = vmul.f32 %v1467, 0.01
      %v1651 = vmul.f32 %v1469, 0.01
      %v1652 = vmul.f32 %v1540, 0.01
      %v1653 = vmul.f32 %v1542, 0.01
      %v1654 = vmul.f32 %v1327, 0.01
      %v1655 = vmul.f32 %v1329, 0.01
      %v1656 = vmul.f32 %v1400, 0.01
      %v1657 = vmul.f32 %v1402, 0.01
      %v1658 = vmul.f32 %v1473, 0.01
      %v1659 = vmul.f32 %v1475, 0.01
      %v1660 = vmul.f32 %v1546, 0.01
      %v1661 = vmul.f32 %v1548, 0.01
      %v1662 = vmul.f32 %v1331, 0.01
      %v1663 = vmul.f32 %v1333, 0.01
      %v1664 = vmul.f32 %v1404, 0.01
      %v1665 = vmul.f32 %v1406, 0.01
      %v1666 = vmul.f32 %v1477, 0.01
      %v1667 = vmul.f32 %v1479, 0.01
      %v1668 = vmul.f32 %v1550, 0.01
      %v1669 = vmul.f32 %v1552, 0.01
      %v1670 = vmul.f32 %v1337, 0.01
      %v1671 = vmul.f32 %v1339, 0.01
      %v1672 = vmul.f32 %v1410, 0.01
      %v1673 = vmul.f32 %v1412, 0.01
      %v1674 = vmul.f32 %v1483, 0.01
      %v1675 = vmul.f32 %v1485, 0.01
      %v1676 = vmul.f32 %v1556, 0.01
      %v1677 = vmul.f32 %v1558, 0.01
      %v1678 = vmul.f32 %v1341, 0.01
      %v1679 = vmul.f32 %v1343, 0.01
      %v1680 = vmul.f32 %v1414, 0.01
      %v1681 = vmul.f32 %v1416, 0.01
      %v1682 = vmul.f32 %v1487, 0.01
      %v1683 = vmul.f32 %v1489, 0.01
      %v1684 = vmul.f32 %v1560, 0.01
      %v1685 = vmul.f32 %v1562, 0.01
      %v1686 = vmul.f32 %v1347, 0.01
      %v1687 = vmul.f32 %v1349, 0.01
      %v1688 = vmul.f32 %v1420, 0.01
      %v1689 = vmul.f32 %v1422, 0.01
      %v1690 = vmul.f32 %v1493, 0.01
      %v1691 = vmul.f32 %v1495, 0.01
      %v1692 = vmul.f32 %v1566, 0.01
      %v1693 = vmul.f32 %v1568, 0.01
      %v1694 = vmul.f32 %v1351, 0.01
      %v1695 = vmul.f32 %v1353, 0.01
      %v1696 = vmul.f32 %v1424, 0.01
      %v1697 = vmul.f32 %v1426, 0.01
      %v1698 = vmul.f32 %v1497, 0.01
      %v1699 = vmul.f32 %v1499, 0.01
      %v1700 = vmul.f32 %v1570, 0.01
      %v1701 = vmul.f32 %v1572, 0.01
      %v1702 = vsel %vm1574, %v1317, %v1638
      %v1703 = vsel %vm1575, %v1319, %v1639
      %v1704 = vsel %vm1576, %v1390, %v1640
      %v1705 = vsel %vm1577, %v1392, %v1641
      %v1706 = vsel %vm1578, %v1463, %v1642
      %v1707 = vsel %vm1579, %v1465, %v1643
      %v1708 = vsel %vm1580, %v1536, %v1644
      %v1709 = vsel %vm1581, %v1538, %v1645
      %v1710 = vsel %vm1582, %v1321, %v1646
      %v1711 = vsel %vm1583, %v1323, %v1647
      %v1712 = vsel %vm1584, %v1394, %v1648
      %v1713 = vsel %vm1585, %v1396, %v1649
      %v1714 = vsel %vm1586, %v1467, %v1650
      %v1715 = vsel %vm1587, %v1469, %v1651
      %v1716 = vsel %vm1588, %v1540, %v1652
      %v1717 = vsel %vm1589, %v1542, %v1653
      %v1718 = vsel %vm1590, %v1327, %v1654
      %v1719 = vsel %vm1591, %v1329, %v1655
      %v1720 = vsel %vm1592, %v1400, %v1656
      %v1721 = vsel %vm1593, %v1402, %v1657
      %v1722 = vsel %vm1594, %v1473, %v1658
      %v1723 = vsel %vm1595, %v1475, %v1659
      %v1724 = vsel %vm1596, %v1546, %v1660
      %v1725 = vsel %vm1597, %v1548, %v1661
      %v1726 = vsel %vm1598, %v1331, %v1662
      %v1727 = vsel %vm1599, %v1333, %v1663
      %v1728 = vsel %vm1600, %v1404, %v1664
      %v1729 = vsel %vm1601, %v1406, %v1665
      %v1730 = vsel %vm1602, %v1477, %v1666
      %v1731 = vsel %vm1603, %v1479, %v1667
      %v1732 = vsel %vm1604, %v1550, %v1668
      %v1733 = vsel %vm1605, %v1552, %v1669
      %v1734 = vsel %vm1606, %v1337, %v1670
      %v1735 = vsel %vm1607, %v1339, %v1671
      %v1736 = vsel %vm1608, %v1410, %v1672
      %v1737 = vsel %vm1609, %v1412, %v1673
      %v1738 = vsel %vm1610, %v1483, %v1674
      %v1739 = vsel %vm1611, %v1485, %v1675
      %v1740 = vsel %vm1612, %v1556, %v1676
      %v1741 = vsel %vm1613, %v1558, %v1677
      %v1742 = vsel %vm1614, %v1341, %v1678
      %v1743 = vsel %vm1615, %v1343, %v1679
      %v1744 = vsel %vm1616, %v1414, %v1680
      %v1745 = vsel %vm1617, %v1416, %v1681
      %v1746 = vsel %vm1618, %v1487, %v1682
      %v1747 = vsel %vm1619, %v1489, %v1683
      %v1748 = vsel %vm1620, %v1560, %v1684
      %v1749 = vsel %vm1621, %v1562, %v1685
      %v1750 = vsel %vm1622, %v1347, %v1686
      %v1751 = vsel %vm1623, %v1349, %v1687
      %v1752 = vsel %vm1624, %v1420, %v1688
      %v1753 = vsel %vm1625, %v1422, %v1689
      %v1754 = vsel %vm1626, %v1493, %v1690
      %v1755 = vsel %vm1627, %v1495, %v1691
      %v1756 = vsel %vm1628, %v1566, %v1692
      %v1757 = vsel %vm1629, %v1568, %v1693
      %v1758 = vsel %vm1630, %v1351, %v1694
      %v1759 = vsel %vm1631, %v1353, %v1695
      %v1760 = vsel %vm1632, %v1424, %v1696
      %v1761 = vsel %vm1633, %v1426, %v1697
      %v1762 = vsel %vm1634, %v1497, %v1698
      %v1763 = vsel %vm1635, %v1499, %v1699
      %v1764 = vsel %vm1636, %v1570, %v1700
      %v1765 = vsel %vm1637, %v1572, %v1701
      %v1766 = vpack.c.bf16 %v1710, %v1702
      %v1767 = vpack.c.bf16 %v1711, %v1703
      %v1768 = vpack.c.bf16 %v1712, %v1704
      %v1769 = vpack.c.bf16 %v1713, %v1705
      %v1770 = vpack.c.bf16 %v1714, %v1706
      %v1771 = vpack.c.bf16 %v1715, %v1707
      %v1772 = vpack.c.bf16 %v1716, %v1708
      %v1773 = vpack.c.bf16 %v1717, %v1709
      %v1774 = vpack.c.bf16 %v1726, %v1718
      %v1775 = vpack.c.bf16 %v1727, %v1719
      %v1776 = vpack.c.bf16 %v1728, %v1720
      %v1777 = vpack.c.bf16 %v1729, %v1721
      %v1778 = vpack.c.bf16 %v1730, %v1722
      %v1779 = vpack.c.bf16 %v1731, %v1723
      %v1780 = vpack.c.bf16 %v1732, %v1724
      %v1781 = vpack.c.bf16 %v1733, %v1725
      %v1782 = vpack.c.bf16 %v1742, %v1734
      %v1783 = vpack.c.bf16 %v1743, %v1735
      %v1784 = vpack.c.bf16 %v1744, %v1736
      %v1785 = vpack.c.bf16 %v1745, %v1737
      %v1786 = vpack.c.bf16 %v1746, %v1738
      %v1787 = vpack.c.bf16 %v1747, %v1739
      %v1788 = vpack.c.bf16 %v1748, %v1740
      %v1789 = vpack.c.bf16 %v1749, %v1741
      %v1790 = vpack.c.bf16 %v1758, %v1750
      %v1791 = vpack.c.bf16 %v1759, %v1751
      %v1792 = vpack.c.bf16 %v1760, %v1752
      %v1793 = vpack.c.bf16 %v1761, %v1753
      %v1794 = vpack.c.bf16 %v1762, %v1754
      %v1795 = vpack.c.bf16 %v1763, %v1755
      %v1796 = vpack.c.bf16 %v1764, %v1756
      %v1797 = vpack.c.bf16 %v1765, %v1757
      %v1798 = vld [vmem:[%s4] sm:$0xff]
      %v1799 = vld [vmem:[%s4 + $0x8] sm:$0xff]
      %v1800 = vld [vmem:[%s4 + $0x10] sm:$0xff]
      %v1801 = vld [vmem:[%s4 + $0x18] sm:$0xff]
      %v1802 = vld [vmem:[%s4 + $0x20] sm:$0xff]
      %v1803 = vld [vmem:[%s4 + $0x28] sm:$0xff]
      %v1804 = vld [vmem:[%s4 + $0x30] sm:$0xff]
      %v1805 = vld [vmem:[%s4 + $0x38] sm:$0xff]
      %v1806 = vld [vmem:[%s4 + $0x40] sm:$0xff]
      %v1807 = vld [vmem:[%s4 + $0x48] sm:$0xff]
      %v1808 = vld [vmem:[%s4 + $0x50] sm:$0xff]
      %v1809 = vld [vmem:[%s4 + $0x58] sm:$0xff]
      %v1810 = vld [vmem:[%s4 + $0x60] sm:$0xff]
      %v1811 = vld [vmem:[%s4 + $0x68] sm:$0xff]
      %v1812 = vld [vmem:[%s4 + $0x70] sm:$0xff]
      %v1813 = vld [vmem:[%s4 + $0x78] sm:$0xff]
      %v1814 = vld [vmem:[%s4 + $0x80] sm:$0xff]
      %v1815 = vld [vmem:[%s4 + $0x88] sm:$0xff]
      %v1816 = vld [vmem:[%s4 + $0x90] sm:$0xff]
      %v1817 = vld [vmem:[%s4 + $0x98] sm:$0xff]
      %v1818 = vld [vmem:[%s4 + $0xa0] sm:$0xff]
      %v1819 = vld [vmem:[%s4 + $0xa8] sm:$0xff]
      %v1820 = vld [vmem:[%s4 + $0xb0] sm:$0xff]
      %v1821 = vld [vmem:[%s4 + $0xb8] sm:$0xff]
      %v1822 = vld [vmem:[%s4 + $0xc0] sm:$0xff]
      %v1823 = vld [vmem:[%s4 + $0xc8] sm:$0xff]
      %v1824 = vld [vmem:[%s4 + $0xd0] sm:$0xff]
      %v1825 = vld [vmem:[%s4 + $0xd8] sm:$0xff]
      %v1826 = vld [vmem:[%s4 + $0xe0] sm:$0xff]
      %v1827 = vld [vmem:[%s4 + $0xe8] sm:$0xff]
      %v1828 = vld [vmem:[%s4 + $0xf0] sm:$0xff]
      %v1829 = vld [vmem:[%s4 + $0xf8] sm:$0xff]
      %v1830 = vld [vmem:[%s4 + $0x100] sm:$0xff]
      %v1831 = vld [vmem:[%s4 + $0x108] sm:$0xff]
      %v1832 = vld [vmem:[%s4 + $0x110] sm:$0xff]
      %v1833 = vld [vmem:[%s4 + $0x118] sm:$0xff]
      %v1834 = vld [vmem:[%s4 + $0x120] sm:$0xff]
      %v1835 = vld [vmem:[%s4 + $0x128] sm:$0xff]
      %v1836 = vld [vmem:[%s4 + $0x130] sm:$0xff]
      %v1837 = vld [vmem:[%s4 + $0x138] sm:$0xff]
      %v1838 = vld [vmem:[%s4 + $0x140] sm:$0xff]
      %v1839 = vld [vmem:[%s4 + $0x148] sm:$0xff]
      %v1840 = vld [vmem:[%s4 + $0x150] sm:$0xff]
      %v1841 = vld [vmem:[%s4 + $0x158] sm:$0xff]
      %v1842 = vld [vmem:[%s4 + $0x160] sm:$0xff]
      %v1843 = vld [vmem:[%s4 + $0x168] sm:$0xff]
      %v1844 = vld [vmem:[%s4 + $0x170] sm:$0xff]
      %v1845 = vld [vmem:[%s4 + $0x178] sm:$0xff]
      %v1846 = vld [vmem:[%s4 + $0x180] sm:$0xff]
      %v1847 = vld [vmem:[%s4 + $0x188] sm:$0xff]
      %v1848 = vld [vmem:[%s4 + $0x190] sm:$0xff]
      %v1849 = vld [vmem:[%s4 + $0x198] sm:$0xff]
      %v1850 = vld [vmem:[%s4 + $0x1a0] sm:$0xff]
      %v1851 = vld [vmem:[%s4 + $0x1a8] sm:$0xff]
      %v1852 = vld [vmem:[%s4 + $0x1b0] sm:$0xff]
      %v1853 = vld [vmem:[%s4 + $0x1b8] sm:$0xff]
      %v1854 = vld [vmem:[%s4 + $0x1c0] sm:$0xff]
      %v1855 = vld [vmem:[%s4 + $0x1c8] sm:$0xff]
      %v1856 = vld [vmem:[%s4 + $0x1d0] sm:$0xff]
      %v1857 = vld [vmem:[%s4 + $0x1d8] sm:$0xff]
      %v1858 = vld [vmem:[%s4 + $0x1e0] sm:$0xff]
      %v1859 = vld [vmem:[%s4 + $0x1e8] sm:$0xff]
      %v1860 = vld [vmem:[%s4 + $0x1f0] sm:$0xff]
      %v1861 = vld [vmem:[%s4 + $0x1f8] sm:$0xff]
      %v1862 = vld [vmem:[%s4 + $0x200] sm:$0xff]
      %v1863 = vld [vmem:[%s4 + $0x208] sm:$0xff]
      %v1864 = vld [vmem:[%s4 + $0x210] sm:$0xff]
      %v1865 = vld [vmem:[%s4 + $0x218] sm:$0xff]
      %v1866 = vld [vmem:[%s4 + $0x220] sm:$0xff]
      %v1867 = vld [vmem:[%s4 + $0x228] sm:$0xff]
      %v1868 = vld [vmem:[%s4 + $0x230] sm:$0xff]
      %v1869 = vld [vmem:[%s4 + $0x238] sm:$0xff]
      %v1870 = vld [vmem:[%s4 + $0x240] sm:$0xff]
      %v1871 = vld [vmem:[%s4 + $0x248] sm:$0xff]
      %v1872 = vld [vmem:[%s4 + $0x250] sm:$0xff]
      %v1873 = vld [vmem:[%s4 + $0x258] sm:$0xff]
      %v1874 = vld [vmem:[%s4 + $0x260] sm:$0xff]
      %v1875 = vld [vmem:[%s4 + $0x268] sm:$0xff]
      %v1876 = vld [vmem:[%s4 + $0x270] sm:$0xff]
      %v1877 = vld [vmem:[%s4 + $0x278] sm:$0xff]
      %v1878 = vld [vmem:[%s4 + $0x280] sm:$0xff]
      %v1879 = vld [vmem:[%s4 + $0x288] sm:$0xff]
      %v1880 = vld [vmem:[%s4 + $0x290] sm:$0xff]
      %v1881 = vld [vmem:[%s4 + $0x298] sm:$0xff]
      %v1882 = vld [vmem:[%s4 + $0x2a0] sm:$0xff]
      %v1883 = vld [vmem:[%s4 + $0x2a8] sm:$0xff]
      %v1884 = vld [vmem:[%s4 + $0x2b0] sm:$0xff]
      %v1885 = vld [vmem:[%s4 + $0x2b8] sm:$0xff]
      %v1886 = vld [vmem:[%s4 + $0x2c0] sm:$0xff]
      %v1887 = vld [vmem:[%s4 + $0x2c8] sm:$0xff]
      %v1888 = vld [vmem:[%s4 + $0x2d0] sm:$0xff]
      %v1889 = vld [vmem:[%s4 + $0x2d8] sm:$0xff]
      %v1890 = vld [vmem:[%s4 + $0x2e0] sm:$0xff]
      %v1891 = vld [vmem:[%s4 + $0x2e8] sm:$0xff]
      %v1892 = vld [vmem:[%s4 + $0x2f0] sm:$0xff]
      %v1893 = vld [vmem:[%s4 + $0x2f8] sm:$0xff]
      %v1894 = vld [vmem:[%s4 + $0x300] sm:$0xff]
      %v1895 = vld [vmem:[%s4 + $0x308] sm:$0xff]
      %v1896 = vld [vmem:[%s4 + $0x310] sm:$0xff]
      %v1897 = vld [vmem:[%s4 + $0x318] sm:$0xff]
      %v1898 = vld [vmem:[%s4 + $0x320] sm:$0xff]
      %v1899 = vld [vmem:[%s4 + $0x328] sm:$0xff]
      %v1900 = vld [vmem:[%s4 + $0x330] sm:$0xff]
      %v1901 = vld [vmem:[%s4 + $0x338] sm:$0xff]
      %v1902 = vld [vmem:[%s4 + $0x340] sm:$0xff]
      %v1903 = vld [vmem:[%s4 + $0x348] sm:$0xff]
      %v1904 = vld [vmem:[%s4 + $0x350] sm:$0xff]
      %v1905 = vld [vmem:[%s4 + $0x358] sm:$0xff]
      %v1906 = vld [vmem:[%s4 + $0x360] sm:$0xff]
      %v1907 = vld [vmem:[%s4 + $0x368] sm:$0xff]
      %v1908 = vld [vmem:[%s4 + $0x370] sm:$0xff]
      %v1909 = vld [vmem:[%s4 + $0x378] sm:$0xff]
      %v1910 = vld [vmem:[%s4 + $0x380] sm:$0xff]
      %v1911 = vld [vmem:[%s4 + $0x388] sm:$0xff]
      %v1912 = vld [vmem:[%s4 + $0x390] sm:$0xff]
      %v1913 = vld [vmem:[%s4 + $0x398] sm:$0xff]
      %v1914 = vld [vmem:[%s4 + $0x3a0] sm:$0xff]
      %v1915 = vld [vmem:[%s4 + $0x3a8] sm:$0xff]
      %v1916 = vld [vmem:[%s4 + $0x3b0] sm:$0xff]
      %v1917 = vld [vmem:[%s4 + $0x3b8] sm:$0xff]
      %v1918 = vld [vmem:[%s4 + $0x3c0] sm:$0xff]
      %v1919 = vld [vmem:[%s4 + $0x3c8] sm:$0xff]
      %v1920 = vld [vmem:[%s4 + $0x3d0] sm:$0xff]
      %v1921 = vld [vmem:[%s4 + $0x3d8] sm:$0xff]
      %v1922 = vld [vmem:[%s4 + $0x3e0] sm:$0xff]
      %v1923 = vld [vmem:[%s4 + $0x3e8] sm:$0xff]
      %v1924 = vld [vmem:[%s4 + $0x3f0] sm:$0xff]
      %v1925 = vld [vmem:[%s4 + $0x3f8] sm:$0xff]
      %v2054 = vunpack.c.l.b16 %v1798
      %v2055 = vunpack.c.h.b16 %v1798
      %v2056 = vunpack.c.l.b16 %v1799
      %v2057 = vunpack.c.h.b16 %v1799
      %v2058 = vunpack.c.l.b16 %v1800
      %v2059 = vunpack.c.h.b16 %v1800
      %v2060 = vunpack.c.l.b16 %v1801
      %v2061 = vunpack.c.h.b16 %v1801
      %v2062 = vunpack.c.l.b16 %v1802
      %v2063 = vunpack.c.h.b16 %v1802
      %v2064 = vunpack.c.l.b16 %v1803
      %v2065 = vunpack.c.h.b16 %v1803
      %v2066 = vunpack.c.l.b16 %v1804
      %v2067 = vunpack.c.h.b16 %v1804
      %v2068 = vunpack.c.l.b16 %v1805
      %v2069 = vunpack.c.h.b16 %v1805
      %v2070 = vunpack.c.l.b16 %v1806
      %v2071 = vunpack.c.h.b16 %v1806
      %v2072 = vunpack.c.l.b16 %v1807
      %v2073 = vunpack.c.h.b16 %v1807
      %v2074 = vunpack.c.l.b16 %v1808
      %v2075 = vunpack.c.h.b16 %v1808
      %v2076 = vunpack.c.l.b16 %v1809
      %v2077 = vunpack.c.h.b16 %v1809
      %v2078 = vunpack.c.l.b16 %v1810
      %v2079 = vunpack.c.h.b16 %v1810
      %v2080 = vunpack.c.l.b16 %v1811
      %v2081 = vunpack.c.h.b16 %v1811
      %v2082 = vunpack.c.l.b16 %v1812
      %v2083 = vunpack.c.h.b16 %v1812
      %v2084 = vunpack.c.l.b16 %v1813
      %v2085 = vunpack.c.h.b16 %v1813
      %v2086 = vunpack.c.l.b16 %v1814
      %v2087 = vunpack.c.h.b16 %v1814
      %v2088 = vunpack.c.l.b16 %v1815
      %v2089 = vunpack.c.h.b16 %v1815
      %v2090 = vunpack.c.l.b16 %v1816
      %v2091 = vunpack.c.h.b16 %v1816
      %v2092 = vunpack.c.l.b16 %v1817
      %v2093 = vunpack.c.h.b16 %v1817
      %v2094 = vunpack.c.l.b16 %v1818
      %v2095 = vunpack.c.h.b16 %v1818
      %v2096 = vunpack.c.l.b16 %v1819
      %v2097 = vunpack.c.h.b16 %v1819
      %v2098 = vunpack.c.l.b16 %v1820
      %v2099 = vunpack.c.h.b16 %v1820
      %v2100 = vunpack.c.l.b16 %v1821
      %v2101 = vunpack.c.h.b16 %v1821
      %v2102 = vunpack.c.l.b16 %v1822
      %v2103 = vunpack.c.h.b16 %v1822
      %v2104 = vunpack.c.l.b16 %v1823
      %v2105 = vunpack.c.h.b16 %v1823
      %v2106 = vunpack.c.l.b16 %v1824
      %v2107 = vunpack.c.h.b16 %v1824
      %v2108 = vunpack.c.l.b16 %v1825
      %v2109 = vunpack.c.h.b16 %v1825
      %v2110 = vunpack.c.l.b16 %v1826
      %v2111 = vunpack.c.h.b16 %v1826
      %v2112 = vunpack.c.l.b16 %v1827
      %v2113 = vunpack.c.h.b16 %v1827
      %v2114 = vunpack.c.l.b16 %v1828
      %v2115 = vunpack.c.h.b16 %v1828
      %v2116 = vunpack.c.l.b16 %v1829
      %v2117 = vunpack.c.h.b16 %v1829
      %v2118 = vunpack.c.l.b16 %v1830
      %v2119 = vunpack.c.h.b16 %v1830
      %v2120 = vunpack.c.l.b16 %v1831
      %v2121 = vunpack.c.h.b16 %v1831
      %v2122 = vunpack.c.l.b16 %v1832
      %v2123 = vunpack.c.h.b16 %v1832
      %v2124 = vunpack.c.l.b16 %v1833
      %v2125 = vunpack.c.h.b16 %v1833
      %v2126 = vunpack.c.l.b16 %v1834
      %v2127 = vunpack.c.h.b16 %v1834
      %v2128 = vunpack.c.l.b16 %v1835
      %v2129 = vunpack.c.h.b16 %v1835
      %v2130 = vunpack.c.l.b16 %v1836
      %v2131 = vunpack.c.h.b16 %v1836
      %v2132 = vunpack.c.l.b16 %v1837
      %v2133 = vunpack.c.h.b16 %v1837
      %v2134 = vunpack.c.l.b16 %v1838
      %v2135 = vunpack.c.h.b16 %v1838
      %v2136 = vunpack.c.l.b16 %v1839
      %v2137 = vunpack.c.h.b16 %v1839
      %v2138 = vunpack.c.l.b16 %v1840
      %v2139 = vunpack.c.h.b16 %v1840
      %v2140 = vunpack.c.l.b16 %v1841
      %v2141 = vunpack.c.h.b16 %v1841
      %v2142 = vunpack.c.l.b16 %v1842
      %v2143 = vunpack.c.h.b16 %v1842
      %v2144 = vunpack.c.l.b16 %v1843
      %v2145 = vunpack.c.h.b16 %v1843
      %v2146 = vunpack.c.l.b16 %v1844
      %v2147 = vunpack.c.h.b16 %v1844
      %v2148 = vunpack.c.l.b16 %v1845
      %v2149 = vunpack.c.h.b16 %v1845
      %v2150 = vunpack.c.l.b16 %v1846
      %v2151 = vunpack.c.h.b16 %v1846
      %v2152 = vunpack.c.l.b16 %v1847
      %v2153 = vunpack.c.h.b16 %v1847
      %v2154 = vunpack.c.l.b16 %v1848
      %v2155 = vunpack.c.h.b16 %v1848
      %v2156 = vunpack.c.l.b16 %v1849
      %v2157 = vunpack.c.h.b16 %v1849
      %v2158 = vunpack.c.l.b16 %v1850
      %v2159 = vunpack.c.h.b16 %v1850
      %v2160 = vunpack.c.l.b16 %v1851
      %v2161 = vunpack.c.h.b16 %v1851
      %v2162 = vunpack.c.l.b16 %v1852
      %v2163 = vunpack.c.h.b16 %v1852
      %v2164 = vunpack.c.l.b16 %v1853
      %v2165 = vunpack.c.h.b16 %v1853
      %v2166 = vunpack.c.l.b16 %v1854
      %v2167 = vunpack.c.h.b16 %v1854
      %v2168 = vunpack.c.l.b16 %v1855
      %v2169 = vunpack.c.h.b16 %v1855
      %v2170 = vunpack.c.l.b16 %v1856
      %v2171 = vunpack.c.h.b16 %v1856
      %v2172 = vunpack.c.l.b16 %v1857
      %v2173 = vunpack.c.h.b16 %v1857
      %v2174 = vunpack.c.l.b16 %v1858
      %v2175 = vunpack.c.h.b16 %v1858
      %v2176 = vunpack.c.l.b16 %v1859
      %v2177 = vunpack.c.h.b16 %v1859
      %v2178 = vunpack.c.l.b16 %v1860
      %v2179 = vunpack.c.h.b16 %v1860
      %v2180 = vunpack.c.l.b16 %v1861
      %v2181 = vunpack.c.h.b16 %v1861
      %v2182 = vunpack.c.l.b16 %v1862
      %v2183 = vunpack.c.h.b16 %v1862
      %v2184 = vunpack.c.l.b16 %v1863
      %v2185 = vunpack.c.h.b16 %v1863
      %v2186 = vunpack.c.l.b16 %v1864
      %v2187 = vunpack.c.h.b16 %v1864
      %v2188 = vunpack.c.l.b16 %v1865
      %v2189 = vunpack.c.h.b16 %v1865
      %v2190 = vunpack.c.l.b16 %v1866
      %v2191 = vunpack.c.h.b16 %v1866
      %v2192 = vunpack.c.l.b16 %v1867
      %v2193 = vunpack.c.h.b16 %v1867
      %v2194 = vunpack.c.l.b16 %v1868
      %v2195 = vunpack.c.h.b16 %v1868
      %v2196 = vunpack.c.l.b16 %v1869
      %v2197 = vunpack.c.h.b16 %v1869
      %v2198 = vunpack.c.l.b16 %v1870
      %v2199 = vunpack.c.h.b16 %v1870
      %v2200 = vunpack.c.l.b16 %v1871
      %v2201 = vunpack.c.h.b16 %v1871
      %v2202 = vunpack.c.l.b16 %v1872
      %v2203 = vunpack.c.h.b16 %v1872
      %v2204 = vunpack.c.l.b16 %v1873
      %v2205 = vunpack.c.h.b16 %v1873
      %v2206 = vunpack.c.l.b16 %v1874
      %v2207 = vunpack.c.h.b16 %v1874
      %v2208 = vunpack.c.l.b16 %v1875
      %v2209 = vunpack.c.h.b16 %v1875
      %v2210 = vunpack.c.l.b16 %v1876
      %v2211 = vunpack.c.h.b16 %v1876
      %v2212 = vunpack.c.l.b16 %v1877
      %v2213 = vunpack.c.h.b16 %v1877
      %v2214 = vunpack.c.l.b16 %v1878
      %v2215 = vunpack.c.h.b16 %v1878
      %v2216 = vunpack.c.l.b16 %v1879
      %v2217 = vunpack.c.h.b16 %v1879
      %v2218 = vunpack.c.l.b16 %v1880
      %v2219 = vunpack.c.h.b16 %v1880
      %v2220 = vunpack.c.l.b16 %v1881
      %v2221 = vunpack.c.h.b16 %v1881
      %v2222 = vunpack.c.l.b16 %v1882
      %v2223 = vunpack.c.h.b16 %v1882
      %v2224 = vunpack.c.l.b16 %v1883
      %v2225 = vunpack.c.h.b16 %v1883
      %v2226 = vunpack.c.l.b16 %v1884
      %v2227 = vunpack.c.h.b16 %v1884
      %v2228 = vunpack.c.l.b16 %v1885
      %v2229 = vunpack.c.h.b16 %v1885
      %v2230 = vunpack.c.l.b16 %v1886
      %v2231 = vunpack.c.h.b16 %v1886
      %v2232 = vunpack.c.l.b16 %v1887
      %v2233 = vunpack.c.h.b16 %v1887
      %v2234 = vunpack.c.l.b16 %v1888
      %v2235 = vunpack.c.h.b16 %v1888
      %v2236 = vunpack.c.l.b16 %v1889
      %v2237 = vunpack.c.h.b16 %v1889
      %v2238 = vunpack.c.l.b16 %v1890
      %v2239 = vunpack.c.h.b16 %v1890
      %v2240 = vunpack.c.l.b16 %v1891
      %v2241 = vunpack.c.h.b16 %v1891
      %v2242 = vunpack.c.l.b16 %v1892
      %v2243 = vunpack.c.h.b16 %v1892
      %v2244 = vunpack.c.l.b16 %v1893
      %v2245 = vunpack.c.h.b16 %v1893
      %v2246 = vunpack.c.l.b16 %v1894
      %v2247 = vunpack.c.h.b16 %v1894
      %v2248 = vunpack.c.l.b16 %v1895
      %v2249 = vunpack.c.h.b16 %v1895
      %v2250 = vunpack.c.l.b16 %v1896
      %v2251 = vunpack.c.h.b16 %v1896
      %v2252 = vunpack.c.l.b16 %v1897
      %v2253 = vunpack.c.h.b16 %v1897
      %v2254 = vunpack.c.l.b16 %v1898
      %v2255 = vunpack.c.h.b16 %v1898
      %v2256 = vunpack.c.l.b16 %v1899
      %v2257 = vunpack.c.h.b16 %v1899
      %v2258 = vunpack.c.l.b16 %v1900
      %v2259 = vunpack.c.h.b16 %v1900
      %v2260 = vunpack.c.l.b16 %v1901
      %v2261 = vunpack.c.h.b16 %v1901
      %v2262 = vunpack.c.l.b16 %v1902
      %v2263 = vunpack.c.h.b16 %v1902
      %v2264 = vunpack.c.l.b16 %v1903
      %v2265 = vunpack.c.h.b16 %v1903
      %v2266 = vunpack.c.l.b16 %v1904
      %v2267 = vunpack.c.h.b16 %v1904
      %v2268 = vunpack.c.l.b16 %v1905
      %v2269 = vunpack.c.h.b16 %v1905
      %v2270 = vunpack.c.l.b16 %v1906
      %v2271 = vunpack.c.h.b16 %v1906
      %v2272 = vunpack.c.l.b16 %v1907
      %v2273 = vunpack.c.h.b16 %v1907
      %v2274 = vunpack.c.l.b16 %v1908
      %v2275 = vunpack.c.h.b16 %v1908
      %v2276 = vunpack.c.l.b16 %v1909
      %v2277 = vunpack.c.h.b16 %v1909
      %v2278 = vunpack.c.l.b16 %v1910
      %v2279 = vunpack.c.h.b16 %v1910
      %v2280 = vunpack.c.l.b16 %v1911
      %v2281 = vunpack.c.h.b16 %v1911
      %v2282 = vunpack.c.l.b16 %v1912
      %v2283 = vunpack.c.h.b16 %v1912
      %v2284 = vunpack.c.l.b16 %v1913
      %v2285 = vunpack.c.h.b16 %v1913
      %v2286 = vunpack.c.l.b16 %v1914
      %v2287 = vunpack.c.h.b16 %v1914
      %v2288 = vunpack.c.l.b16 %v1915
      %v2289 = vunpack.c.h.b16 %v1915
      %v2290 = vunpack.c.l.b16 %v1916
      %v2291 = vunpack.c.h.b16 %v1916
      %v2292 = vunpack.c.l.b16 %v1917
      %v2293 = vunpack.c.h.b16 %v1917
      %v2294 = vunpack.c.l.b16 %v1918
      %v2295 = vunpack.c.h.b16 %v1918
      %v2296 = vunpack.c.l.b16 %v1919
      %v2297 = vunpack.c.h.b16 %v1919
      %v2298 = vunpack.c.l.b16 %v1920
      %v2299 = vunpack.c.h.b16 %v1920
      %v2300 = vunpack.c.l.b16 %v1921
      %v2301 = vunpack.c.h.b16 %v1921
      %v2302 = vunpack.c.l.b16 %v1922
      %v2303 = vunpack.c.h.b16 %v1922
      %v2304 = vunpack.c.l.b16 %v1923
      %v2305 = vunpack.c.h.b16 %v1923
      %v2306 = vunpack.c.l.b16 %v1924
      %v2307 = vunpack.c.h.b16 %v1924
      %v2308 = vunpack.c.l.b16 %v1925
      %v2309 = vunpack.c.h.b16 %v1925
      %v2310 = vpack.c.b16 %v2056, %v2054
      %v2311 = vpack.c.b16 %v2057, %v2055
      %v2312 = vpack.c.b16 %v2060, %v2058
      %v2313 = vpack.c.b16 %v2061, %v2059
      %v2314 = vpack.c.b16 %v2064, %v2062
      %v2315 = vpack.c.b16 %v2065, %v2063
      %v2316 = vpack.c.b16 %v2068, %v2066
      %v2317 = vpack.c.b16 %v2069, %v2067
      %v2318 = vpack.c.b16 %v2072, %v2070
      %v2319 = vpack.c.b16 %v2073, %v2071
      %v2320 = vpack.c.b16 %v2076, %v2074
      %v2321 = vpack.c.b16 %v2077, %v2075
      %v2322 = vpack.c.b16 %v2080, %v2078
      %v2323 = vpack.c.b16 %v2081, %v2079
      %v2324 = vpack.c.b16 %v2084, %v2082
      %v2325 = vpack.c.b16 %v2085, %v2083
      %v2326 = vpack.c.b16 %v2088, %v2086
      %v2327 = vpack.c.b16 %v2089, %v2087
      %v2328 = vpack.c.b16 %v2092, %v2090
      %v2329 = vpack.c.b16 %v2093, %v2091
      %v2330 = vpack.c.b16 %v2096, %v2094
      %v2331 = vpack.c.b16 %v2097, %v2095
      %v2332 = vpack.c.b16 %v2100, %v2098
      %v2333 = vpack.c.b16 %v2101, %v2099
      %v2334 = vpack.c.b16 %v2104, %v2102
      %v2335 = vpack.c.b16 %v2105, %v2103
      %v2336 = vpack.c.b16 %v2108, %v2106
      %v2337 = vpack.c.b16 %v2109, %v2107
      %v2338 = vpack.c.b16 %v2112, %v2110
      %v2339 = vpack.c.b16 %v2113, %v2111
      %v2340 = vpack.c.b16 %v2116, %v2114
      %v2341 = vpack.c.b16 %v2117, %v2115
      %v2342 = vpack.c.b16 %v2120, %v2118
      %v2343 = vpack.c.b16 %v2121, %v2119
      %v2344 = vpack.c.b16 %v2124, %v2122
      %v2345 = vpack.c.b16 %v2125, %v2123
      %v2346 = vpack.c.b16 %v2128, %v2126
      %v2347 = vpack.c.b16 %v2129, %v2127
      %v2348 = vpack.c.b16 %v2132, %v2130
      %v2349 = vpack.c.b16 %v2133, %v2131
      %v2350 = vpack.c.b16 %v2136, %v2134
      %v2351 = vpack.c.b16 %v2137, %v2135
      %v2352 = vpack.c.b16 %v2140, %v2138
      %v2353 = vpack.c.b16 %v2141, %v2139
      %v2354 = vpack.c.b16 %v2144, %v2142
      %v2355 = vpack.c.b16 %v2145, %v2143
      %v2356 = vpack.c.b16 %v2148, %v2146
      %v2357 = vpack.c.b16 %v2149, %v2147
      %v2358 = vpack.c.b16 %v2152, %v2150
      %v2359 = vpack.c.b16 %v2153, %v2151
      %v2360 = vpack.c.b16 %v2156, %v2154
      %v2361 = vpack.c.b16 %v2157, %v2155
      %v2362 = vpack.c.b16 %v2160, %v2158
      %v2363 = vpack.c.b16 %v2161, %v2159
      %v2364 = vpack.c.b16 %v2164, %v2162
      %v2365 = vpack.c.b16 %v2165, %v2163
      %v2366 = vpack.c.b16 %v2168, %v2166
      %v2367 = vpack.c.b16 %v2169, %v2167
      %v2368 = vpack.c.b16 %v2172, %v2170
      %v2369 = vpack.c.b16 %v2173, %v2171
      %v2370 = vpack.c.b16 %v2176, %v2174
      %v2371 = vpack.c.b16 %v2177, %v2175
      %v2372 = vpack.c.b16 %v2180, %v2178
      %v2373 = vpack.c.b16 %v2181, %v2179
      %v2374 = vpack.c.b16 %v2184, %v2182
      %v2375 = vpack.c.b16 %v2185, %v2183
      %v2376 = vpack.c.b16 %v2188, %v2186
      %v2377 = vpack.c.b16 %v2189, %v2187
      %v2378 = vpack.c.b16 %v2192, %v2190
      %v2379 = vpack.c.b16 %v2193, %v2191
      %v2380 = vpack.c.b16 %v2196, %v2194
      %v2381 = vpack.c.b16 %v2197, %v2195
      %v2382 = vpack.c.b16 %v2200, %v2198
      %v2383 = vpack.c.b16 %v2201, %v2199
      %v2384 = vpack.c.b16 %v2204, %v2202
      %v2385 = vpack.c.b16 %v2205, %v2203
      %v2386 = vpack.c.b16 %v2208, %v2206
      %v2387 = vpack.c.b16 %v2209, %v2207
      %v2388 = vpack.c.b16 %v2212, %v2210
      %v2389 = vpack.c.b16 %v2213, %v2211
      %v2390 = vpack.c.b16 %v2216, %v2214
      %v2391 = vpack.c.b16 %v2217, %v2215
      %v2392 = vpack.c.b16 %v2220, %v2218
      %v2393 = vpack.c.b16 %v2221, %v2219
      %v2394 = vpack.c.b16 %v2224, %v2222
      %v2395 = vpack.c.b16 %v2225, %v2223
      %v2396 = vpack.c.b16 %v2228, %v2226
      %v2397 = vpack.c.b16 %v2229, %v2227
      %v2398 = vpack.c.b16 %v2232, %v2230
      %v2399 = vpack.c.b16 %v2233, %v2231
      %v2400 = vpack.c.b16 %v2236, %v2234
      %v2401 = vpack.c.b16 %v2237, %v2235
      %v2402 = vpack.c.b16 %v2240, %v2238
      %v2403 = vpack.c.b16 %v2241, %v2239
      %v2404 = vpack.c.b16 %v2244, %v2242
      %v2405 = vpack.c.b16 %v2245, %v2243
      %v2406 = vpack.c.b16 %v2248, %v2246
      %v2407 = vpack.c.b16 %v2249, %v2247
      %v2408 = vpack.c.b16 %v2252, %v2250
      %v2409 = vpack.c.b16 %v2253, %v2251
      %v2410 = vpack.c.b16 %v2256, %v2254
      %v2411 = vpack.c.b16 %v2257, %v2255
      %v2412 = vpack.c.b16 %v2260, %v2258
      %v2413 = vpack.c.b16 %v2261, %v2259
      %v2414 = vpack.c.b16 %v2264, %v2262
      %v2415 = vpack.c.b16 %v2265, %v2263
      %v2416 = vpack.c.b16 %v2268, %v2266
      %v2417 = vpack.c.b16 %v2269, %v2267
      %v2418 = vpack.c.b16 %v2272, %v2270
      %v2419 = vpack.c.b16 %v2273, %v2271
      %v2420 = vpack.c.b16 %v2276, %v2274
      %v2421 = vpack.c.b16 %v2277, %v2275
      %v2422 = vpack.c.b16 %v2280, %v2278
      %v2423 = vpack.c.b16 %v2281, %v2279
      %v2424 = vpack.c.b16 %v2284, %v2282
      %v2425 = vpack.c.b16 %v2285, %v2283
      %v2426 = vpack.c.b16 %v2288, %v2286
      %v2427 = vpack.c.b16 %v2289, %v2287
      %v2428 = vpack.c.b16 %v2292, %v2290
      %v2429 = vpack.c.b16 %v2293, %v2291
      %v2430 = vpack.c.b16 %v2296, %v2294
      %v2431 = vpack.c.b16 %v2297, %v2295
      %v2432 = vpack.c.b16 %v2300, %v2298
      %v2433 = vpack.c.b16 %v2301, %v2299
      %v2434 = vpack.c.b16 %v2304, %v2302
      %v2435 = vpack.c.b16 %v2305, %v2303
      %v2436 = vpack.c.b16 %v2308, %v2306
      %v2437 = vpack.c.b16 %v2309, %v2307
      %2566 = vmatprep.subr.bf16.mxu0 %v2311
      %2567 = vmatpush1.bf16.msra.mxu0 %v2310
      %2568 = vmatprep.subr.bf16.mxu0 %v2313
      %2569 = vmatpush1.bf16.msra.mxu0 %v2312
      %2570 = vmatprep.subr.bf16.mxu0 %v2315
      %2571 = vmatpush1.bf16.msra.mxu0 %v2314
      %2572 = vmatprep.subr.bf16.mxu0 %v2317
      %2573 = vmatpush1.bf16.msra.mxu0 %v2316
      %2574 = vmatprep.subr.bf16.mxu0 %v2319
      %2575 = vmatpush1.bf16.msra.mxu0 %v2318
      %2576 = vmatprep.subr.bf16.mxu0 %v2321
      %2577 = vmatpush1.bf16.msra.mxu0 %v2320
      %2578 = vmatprep.subr.bf16.mxu0 %v2323
      %2579 = vmatpush1.bf16.msra.mxu0 %v2322
      %2580 = vmatprep.subr.bf16.mxu0 %v2325
      %2581 = vmatpush1.bf16.msra.mxu0 %v2324
      %2582 = vmatprep.subr.bf16.mxu0 %v2327
      %2583 = vmatpush1.bf16.msra.mxu0 %v2326
      %2584 = vmatprep.subr.bf16.mxu0 %v2329
      %2585 = vmatpush1.bf16.msra.mxu0 %v2328
      %2586 = vmatprep.subr.bf16.mxu0 %v2331
      %2587 = vmatpush1.bf16.msra.mxu0 %v2330
      %2588 = vmatprep.subr.bf16.mxu0 %v2333
      %2589 = vmatpush1.bf16.msra.mxu0 %v2332
      %2590 = vmatprep.subr.bf16.mxu0 %v2335
      %2591 = vmatpush1.bf16.msra.mxu0 %v2334
      %2592 = vmatprep.subr.bf16.mxu0 %v2337
      %2593 = vmatpush1.bf16.msra.mxu0 %v2336
      %2594 = vmatprep.subr.bf16.mxu0 %v2339
      %2595 = vmatpush1.bf16.msra.mxu0 %v2338
      %2596 = vmatprep.subr.bf16.mxu0 %v2341
      %2597 = vmatpush1.bf16.msra.mxu0 %v2340
      %2598 = vmatprep.mubr.bf16.mxu0 %v1767
      %2599 = vmatmul.mubr.bf16.gmra.mrb[0].mxu0 %v1766
      %v2600 = vpop.f32.mrb[0].mxu0
      %v2601 = vadd.f32 0.0, %v2600
      %v2602 = vpop.f32.mrb[0].mxu0
      %v2603 = vadd.f32 0.0, %v2602
      %v2604 = vpop.f32.mrb[0].mxu0
      %v2605 = vadd.f32 0.0, %v2604
      %v2606 = vpop.f32.mrb[0].mxu0
      %v2607 = vadd.f32 0.0, %v2606
      %2608 = vmatprep.mubr.bf16.mxu0 %v1775
      %2609 = vmatmul.mubr.bf16.gmra.mrb[0].mxu0 %v1774
      %v2610 = vpop.f32.mrb[0].mxu0
      %v2611 = vadd.f32 0.0, %v2610
      %v2612 = vpop.f32.mrb[0].mxu0
      %v2613 = vadd.f32 0.0, %v2612
      %v2614 = vpop.f32.mrb[0].mxu0
      %v2615 = vadd.f32 0.0, %v2614
      %v2616 = vpop.f32.mrb[0].mxu0
      %v2617 = vadd.f32 0.0, %v2616
      %2618 = vmatprep.mubr.bf16.mxu0 %v1783
      %2619 = vmatmul.mubr.bf16.gmra.mrb[0].mxu0 %v1782
      %v2620 = vpop.f32.mrb[0].mxu0
      %v2621 = vadd.f32 0.0, %v2620
      %v2622 = vpop.f32.mrb[0].mxu0
      %v2623 = vadd.f32 0.0, %v2622
      %v2624 = vpop.f32.mrb[0].mxu0
      %v2625 = vadd.f32 0.0, %v2624
      %v2626 = vpop.f32.mrb[0].mxu0
      %v2627 = vadd.f32 0.0, %v2626
      %2628 = vmatprep.mubr.bf16.mxu0 %v1791
      %2629 = vmatmul.mubr.bf16.gmra.mrb[0].mxu0 %v1790
      %v2630 = vpop.f32.mrb[0].mxu0
      %v2631 = vadd.f32 0.0, %v2630
      %v2632 = vpop.f32.mrb[0].mxu0
      %v2633 = vadd.f32 0.0, %v2632
      %v2634 = vpop.f32.mrb[0].mxu0
      %v2635 = vadd.f32 0.0, %v2634
      %v2636 = vpop.f32.mrb[0].mxu0
      %v2637 = vadd.f32 0.0, %v2636
      %2638 = vdwg.mxu0
      %2639 = vmatprep.subr.bf16.mxu0 %v2343
      %2640 = vmatpush1.bf16.msra.mxu0 %v2342
      %2641 = vmatprep.subr.bf16.mxu0 %v2345
      %2642 = vmatpush1.bf16.msra.mxu0 %v2344
      %2643 = vmatprep.subr.bf16.mxu0 %v2347
      %2644 = vmatpush1.bf16.msra.mxu0 %v2346
      %2645 = vmatprep.subr.bf16.mxu0 %v2349
      %2646 = vmatpush1.bf16.msra.mxu0 %v2348
      %2647 = vmatprep.subr.bf16.mxu0 %v2351
      %2648 = vmatpush1.bf16.msra.mxu0 %v2350
      %2649 = vmatprep.subr.bf16.mxu0 %v2353
      %2650 = vmatpush1.bf16.msra.mxu0 %v2352
      %2651 = vmatprep.subr.bf16.mxu0 %v2355
      %2652 = vmatpush1.bf16.msra.mxu0 %v2354
      %2653 = vmatprep.subr.bf16.mxu0 %v2357
      %2654 = vmatpush1.bf16.msra.mxu0 %v2356
      %2655 = vmatprep.subr.bf16.mxu0 %v2359
      %2656 = vmatpush1.bf16.msra.mxu0 %v2358
      %2657 = vmatprep.subr.bf16.mxu0 %v2361
      %2658 = vmatpush1.bf16.msra.mxu0 %v2360
      %2659 = vmatprep.subr.bf16.mxu0 %v2363
      %2660 = vmatpush1.bf16.msra.mxu0 %v2362
      %2661 = vmatprep.subr.bf16.mxu0 %v2365
      %2662 = vmatpush1.bf16.msra.mxu0 %v2364
      %2663 = vmatprep.subr.bf16.mxu0 %v2367
      %2664 = vmatpush1.bf16.msra.mxu0 %v2366
      %2665 = vmatprep.subr.bf16.mxu0 %v2369
      %2666 = vmatpush1.bf16.msra.mxu0 %v2368
      %2667 = vmatprep.subr.bf16.mxu0 %v2371
      %2668 = vmatpush1.bf16.msra.mxu0 %v2370
      %2669 = vmatprep.subr.bf16.mxu0 %v2373
      %2670 = vmatpush1.bf16.msra.mxu0 %v2372
      %2671 = vmatprep.mubr.bf16.mxu0 %v1769
      %2672 = vmatmul.mubr.bf16.gmra.mrb[0].mxu0 %v1768
      %v2673 = vpop.f32.mrb[0].mxu0
      %v2674 = vadd.f32 %v2601, %v2673
      %v2675 = vpop.f32.mrb[0].mxu0
      %v2676 = vadd.f32 %v2603, %v2675
      %v2677 = vpop.f32.mrb[0].mxu0
      %v2678 = vadd.f32 %v2605, %v2677
      %v2679 = vpop.f32.mrb[0].mxu0
      %v2680 = vadd.f32 %v2607, %v2679
      %2681 = vmatprep.mubr.bf16.mxu0 %v1777
      %2682 = vmatmul.mubr.bf16.gmra.mrb[0].mxu0 %v1776
      %v2683 = vpop.f32.mrb[0].mxu0
      %v2684 = vadd.f32 %v2611, %v2683
      %v2685 = vpop.f32.mrb[0].mxu0
      %v2686 = vadd.f32 %v2613, %v2685
      %v2687 = vpop.f32.mrb[0].mxu0
      %v2688 = vadd.f32 %v2615, %v2687
      %v2689 = vpop.f32.mrb[0].mxu0
      %v2690 = vadd.f32 %v2617, %v2689
      %2691 = vmatprep.mubr.bf16.mxu0 %v1785
      %2692 = vmatmul.mubr.bf16.gmra.mrb[0].mxu0 %v1784
      %v2693 = vpop.f32.mrb[0].mxu0
      %v2694 = vadd.f32 %v2621, %v2693
      %v2695 = vpop.f32.mrb[0].mxu0
      %v2696 = vadd.f32 %v2623, %v2695
      %v2697 = vpop.f32.mrb[0].mxu0
      %v2698 = vadd.f32 %v2625, %v2697
      %v2699 = vpop.f32.mrb[0].mxu0
      %v2700 = vadd.f32 %v2627, %v2699
      %2701 = vmatprep.mubr.bf16.mxu0 %v1793
      %2702 = vmatmul.mubr.bf16.gmra.mrb[0].mxu0 %v1792
      %v2703 = vpop.f32.mrb[0].mxu0
      %v2704 = vadd.f32 %v2631, %v2703
      %v2705 = vpop.f32.mrb[0].mxu0
      %v2706 = vadd.f32 %v2633, %v2705
      %v2707 = vpop.f32.mrb[0].mxu0
      %v2708 = vadd.f32 %v2635, %v2707
      %v2709 = vpop.f32.mrb[0].mxu0
      %v2710 = vadd.f32 %v2637, %v2709
      %2711 = vdwg.mxu0
      %2712 = vmatprep.subr.bf16.mxu0 %v2375
      %2713 = vmatpush1.bf16.msra.mxu0 %v2374
      %2714 = vmatprep.subr.bf16.mxu0 %v2377
      %2715 = vmatpush1.bf16.msra.mxu0 %v2376
      %2716 = vmatprep.subr.bf16.mxu0 %v2379
      %2717 = vmatpush1.bf16.msra.mxu0 %v2378
      %2718 = vmatprep.subr.bf16.mxu0 %v2381
      %2719 = vmatpush1.bf16.msra.mxu0 %v2380
      %2720 = vmatprep.subr.bf16.mxu0 %v2383
      %2721 = vmatpush1.bf16.msra.mxu0 %v2382
      %2722 = vmatprep.subr.bf16.mxu0 %v2385
      %2723 = vmatpush1.bf16.msra.mxu0 %v2384
      %2724 = vmatprep.subr.bf16.mxu0 %v2387
      %2725 = vmatpush1.bf16.msra.mxu0 %v2386
      %2726 = vmatprep.subr.bf16.mxu0 %v2389
      %2727 = vmatpush1.bf16.msra.mxu0 %v2388
      %2728 = vmatprep.subr.bf16.mxu0 %v2391
      %2729 = vmatpush1.bf16.msra.mxu0 %v2390
      %2730 = vmatprep.subr.bf16.mxu0 %v2393
      %2731 = vmatpush1.bf16.msra.mxu0 %v2392
      %2732 = vmatprep.subr.bf16.mxu0 %v2395
      %2733 = vmatpush1.bf16.msra.mxu0 %v2394
      %2734 = vmatprep.subr.bf16.mxu0 %v2397
      %2735 = vmatpush1.bf16.msra.mxu0 %v2396
      %2736 = vmatprep.subr.bf16.mxu0 %v2399
      %2737 = vmatpush1.bf16.msra.mxu0 %v2398
      %2738 = vmatprep.subr.bf16.mxu0 %v2401
      %2739 = vmatpush1.bf16.msra.mxu0 %v2400
      %2740 = vmatprep.subr.bf16.mxu0 %v2403
      %2741 = vmatpush1.bf16.msra.mxu0 %v2402
      %2742 = vmatprep.subr.bf16.mxu0 %v2405
      %2743 = vmatpush1.bf16.msra.mxu0 %v2404
      %2744 = vmatprep.mubr.bf16.mxu0 %v1771
      %2745 = vmatmul.mubr.bf16.gmra.mrb[0].mxu0 %v1770
      %v2746 = vpop.f32.mrb[0].mxu0
      %v2747 = vadd.f32 %v2674, %v2746
      %v2748 = vpop.f32.mrb[0].mxu0
      %v2749 = vadd.f32 %v2676, %v2748
      %v2750 = vpop.f32.mrb[0].mxu0
      %v2751 = vadd.f32 %v2678, %v2750
      %v2752 = vpop.f32.mrb[0].mxu0
      %v2753 = vadd.f32 %v2680, %v2752
      %2754 = vmatprep.mubr.bf16.mxu0 %v1779
      %2755 = vmatmul.mubr.bf16.gmra.mrb[0].mxu0 %v1778
      %v2756 = vpop.f32.mrb[0].mxu0
      %v2757 = vadd.f32 %v2684, %v2756
      %v2758 = vpop.f32.mrb[0].mxu0
      %v2759 = vadd.f32 %v2686, %v2758
      %v2760 = vpop.f32.mrb[0].mxu0
      %v2761 = vadd.f32 %v2688, %v2760
      %v2762 = vpop.f32.mrb[0].mxu0
      %v2763 = vadd.f32 %v2690, %v2762
      %2764 = vmatprep.mubr.bf16.mxu0 %v1787
      %2765 = vmatmul.mubr.bf16.gmra.mrb[0].mxu0 %v1786
      %v2766 = vpop.f32.mrb[0].mxu0
      %v2767 = vadd.f32 %v2694, %v2766
      %v2768 = vpop.f32.mrb[0].mxu0
      %v2769 = vadd.f32 %v2696, %v2768
      %v2770 = vpop.f32.mrb[0].mxu0
      %v2771 = vadd.f32 %v2698, %v2770
      %v2772 = vpop.f32.mrb[0].mxu0
      %v2773 = vadd.f32 %v2700, %v2772
      %2774 = vmatprep.mubr.bf16.mxu0 %v1795
      %2775 = vmatmul.mubr.bf16.gmra.mrb[0].mxu0 %v1794
      %v2776 = vpop.f32.mrb[0].mxu0
      %v2777 = vadd.f32 %v2704, %v2776
      %v2778 = vpop.f32.mrb[0].mxu0
      %v2779 = vadd.f32 %v2706, %v2778
      %v2780 = vpop.f32.mrb[0].mxu0
      %v2781 = vadd.f32 %v2708, %v2780
      %v2782 = vpop.f32.mrb[0].mxu0
      %v2783 = vadd.f32 %v2710, %v2782
      %2784 = vdwg.mxu0
      %2785 = vmatprep.subr.bf16.mxu0 %v2407
      %2786 = vmatpush1.bf16.msra.mxu0 %v2406
      %2787 = vmatprep.subr.bf16.mxu0 %v2409
      %2788 = vmatpush1.bf16.msra.mxu0 %v2408
      %2789 = vmatprep.subr.bf16.mxu0 %v2411
      %2790 = vmatpush1.bf16.msra.mxu0 %v2410
      %2791 = vmatprep.subr.bf16.mxu0 %v2413
      %2792 = vmatpush1.bf16.msra.mxu0 %v2412
      %2793 = vmatprep.subr.bf16.mxu0 %v2415
      %2794 = vmatpush1.bf16.msra.mxu0 %v2414
      %2795 = vmatprep.subr.bf16.mxu0 %v2417
      %2796 = vmatpush1.bf16.msra.mxu0 %v2416
      %2797 = vmatprep.subr.bf16.mxu0 %v2419
      %2798 = vmatpush1.bf16.msra.mxu0 %v2418
      %2799 = vmatprep.subr.bf16.mxu0 %v2421
      %2800 = vmatpush1.bf16.msra.mxu0 %v2420
      %2801 = vmatprep.subr.bf16.mxu0 %v2423
      %2802 = vmatpush1.bf16.msra.mxu0 %v2422
      %2803 = vmatprep.subr.bf16.mxu0 %v2425
      %2804 = vmatpush1.bf16.msra.mxu0 %v2424
      %2805 = vmatprep.subr.bf16.mxu0 %v2427
      %2806 = vmatpush1.bf16.msra.mxu0 %v2426
      %2807 = vmatprep.subr.bf16.mxu0 %v2429
      %2808 = vmatpush1.bf16.msra.mxu0 %v2428
      %2809 = vmatprep.subr.bf16.mxu0 %v2431
      %2810 = vmatpush1.bf16.msra.mxu0 %v2430
      %2811 = vmatprep.subr.bf16.mxu0 %v2433
      %2812 = vmatpush1.bf16.msra.mxu0 %v2432
      %2813 = vmatprep.subr.bf16.mxu0 %v2435
      %2814 = vmatpush1.bf16.msra.mxu0 %v2434
      %2815 = vmatprep.subr.bf16.mxu0 %v2437
      %2816 = vmatpush1.bf16.msra.mxu0 %v2436
      %2817 = vmatprep.mubr.bf16.mxu0 %v1773
      %2818 = vmatmul.mubr.bf16.gmra.mrb[0].mxu0 %v1772
      %v2819 = vpop.f32.mrb[0].mxu0
      %v2820 = vadd.f32 %v2747, %v2819
      %v2821 = vpop.f32.mrb[0].mxu0
      %v2822 = vadd.f32 %v2749, %v2821
      %v2823 = vpop.f32.mrb[0].mxu0
      %v2824 = vadd.f32 %v2751, %v2823
      %v2825 = vpop.f32.mrb[0].mxu0
      %v2826 = vadd.f32 %v2753, %v2825
      %2827 = vmatprep.mubr.bf16.mxu0 %v1781
      %2828 = vmatmul.mubr.bf16.gmra.mrb[0].mxu0 %v1780
      %v2829 = vpop.f32.mrb[0].mxu0
      %v2830 = vadd.f32 %v2757, %v2829
      %v2831 = vpop.f32.mrb[0].mxu0
      %v2832 = vadd.f32 %v2759, %v2831
      %v2833 = vpop.f32.mrb[0].mxu0
      %v2834 = vadd.f32 %v2761, %v2833
      %v2835 = vpop.f32.mrb[0].mxu0
      %v2836 = vadd.f32 %v2763, %v2835
      %2837 = vmatprep.mubr.bf16.mxu0 %v1789
      %2838 = vmatmul.mubr.bf16.gmra.mrb[0].mxu0 %v1788
      %v2839 = vpop.f32.mrb[0].mxu0
      %v2840 = vadd.f32 %v2767, %v2839
      %v2841 = vpop.f32.mrb[0].mxu0
      %v2842 = vadd.f32 %v2769, %v2841
      %v2843 = vpop.f32.mrb[0].mxu0
      %v2844 = vadd.f32 %v2771, %v2843
      %v2845 = vpop.f32.mrb[0].mxu0
      %v2846 = vadd.f32 %v2773, %v2845
      %2847 = vmatprep.mubr.bf16.mxu0 %v1797
      %2848 = vmatmul.mubr.bf16.gmra.mrb[0].mxu0 %v1796
      %v2849 = vpop.f32.mrb[0].mxu0
      %v2850 = vadd.f32 %v2777, %v2849
      %v2851 = vpop.f32.mrb[0].mxu0
      %v2852 = vadd.f32 %v2779, %v2851
      %v2853 = vpop.f32.mrb[0].mxu0
      %v2854 = vadd.f32 %v2781, %v2853
      %v2855 = vpop.f32.mrb[0].mxu0
      %v2856 = vadd.f32 %v2783, %v2855
      %2857 = vdwg.mxu0
      %v2858 = vpack.c.bf16 %v2824, %v2820
      %v2859 = vpack.c.bf16 %v2826, %v2822
      %v2860 = vpack.c.bf16 %v2834, %v2830
      %v2861 = vpack.c.bf16 %v2836, %v2832
      %v2862 = vpack.c.bf16 %v2844, %v2840
      %v2863 = vpack.c.bf16 %v2846, %v2842
      %v2864 = vpack.c.bf16 %v2854, %v2850
      %v2865 = vpack.c.bf16 %v2856, %v2852
      %v2866 = vld [vmem:[%s5] sm:$0x3]
      %vm2867 = vcmask 523264
      %v2869 = vsel %vm2867, %v2866, 0
      %2871 = vmatprep.subr.bf16.mxu0 %v2859
      %2872 = vmatpush1.bf16.msra.mxu0 %v2858
      %2873 = vmatprep.subr.bf16.mxu0 %v2861
      %2874 = vmatpush1.bf16.msra.mxu0 %v2860
      %2875 = vmatprep.subr.bf16.mxu0 %v2863
      %2876 = vmatpush1.bf16.msra.mxu0 %v2862
      %2877 = vmatprep.subr.bf16.mxu0 %v2865
      %2878 = vmatpush1.bf16.msra.mxu0 %v2864
      %2879 = vmatprep.subr.bf16.mxu0 0
      %2880 = vmatpush1.bf16.msra.mxu0 0
      %2881 = vmatprep.subr.bf16.mxu0 0
      %2882 = vmatpush1.bf16.msra.mxu0 0
      %2883 = vmatprep.subr.bf16.mxu0 0
      %2884 = vmatpush1.bf16.msra.mxu0 0
      %2885 = vmatprep.subr.bf16.mxu0 0
      %2886 = vmatpush1.bf16.msra.mxu0 0
      %2887 = vmatprep.subr.bf16.mxu0 0
      %2888 = vmatpush1.bf16.msra.mxu0 0
      %2889 = vmatprep.subr.bf16.mxu0 0
      %2890 = vmatpush1.bf16.msra.mxu0 0
      %2891 = vmatprep.subr.bf16.mxu0 0
      %2892 = vmatpush1.bf16.msra.mxu0 0
      %2893 = vmatprep.subr.bf16.mxu0 0
      %2894 = vmatpush1.bf16.msra.mxu0 0
      %2895 = vmatprep.subr.bf16.mxu0 0
      %2896 = vmatpush1.bf16.msra.mxu0 0
      %2897 = vmatprep.subr.bf16.mxu0 0
      %2898 = vmatpush1.bf16.msra.mxu0 0
      %2899 = vmatprep.subr.bf16.mxu0 0
      %2900 = vmatpush1.bf16.msra.mxu0 0
      %2901 = vmatprep.subr.bf16.mxu0 0
      %2902 = vmatpush1.bf16.msra.mxu0 0
      %2903 = vmatprep.mubr.bf16.mxu0 0
      %2904 = vmatmul.mubr.bf16.gmra.mrb[0].mxu0 %v2869
      %v2905 = vpop.f32.mrb[0].mxu0
      %v2906 = vadd.f32 0.0, %v2905
      %v2907 = vpop.f32.mrb[0].mxu0
      %v2908 = vadd.f32 0.0, %v2907
      %v2909 = vpop.f32.mrb[0].mxu0
      %v2910 = vpop.f32.mrb[0].mxu0
      %2911 = vdwg.mxu0
      %2912 = vrot.lane.b32.xlu0 %v2906, 17
      %v2913 = vpop.permute.xlu0 %2912
      %2914 = vrot.lane.b32.xlu0 %v2908, 17
      %v2915 = vpop.permute.xlu0 %2914
      %v2916 = vlaneseq
      %v2917 = vand.u32 %v2916, 127
      %vm2918 = vcmp.lt.s32.totalorder %v2917, 17
      %v2919 = vsel %vm2918, %v2913, %v2915
      %v2920 = vsel %vm2918, %v2915, %v2913
      %v2921 = vld [vmem:[%s7] sm:$0x3]
      %v2923 = vlaneseq
      %v2924 = vshrl.u32 %v2923, 7
      %v2925 = vsub.s32 0, %v2924
      %v2926 = vrot.slane %v2921, %v2925
      %v2927 = vlaneseq
      %v2928 = vshrl.u32 %v2927, 7
      %v2929 = vsub.s32 1, %v2928
      %v2930 = vrot.slane %v2921, %v2929
      %v2933 = vmul.f32 %v2920, %v2926
      %v2934 = vmul.f32 %v2919, %v2930
      %v2935 = vadd.f32 %v2933, 0.0
      %v2936 = vadd.f32 %v2934, 0.0
      %s2937 = scalar_lea.vmem %s5, 2
      %v2938 = vld [vmem:[%s2937] sm:$0x3]
      %v2940 = vsel %vm2867, %v2938, 0
      %2942 = vmatprep.subr.bf16.mxu0 %v2859
      %2943 = vmatpush1.bf16.msra.mxu0 %v2858
      %2944 = vmatprep.subr.bf16.mxu0 %v2861
      %2945 = vmatpush1.bf16.msra.mxu0 %v2860
      %2946 = vmatprep.subr.bf16.mxu0 %v2863
      %2947 = vmatpush1.bf16.msra.mxu0 %v2862
      %2948 = vmatprep.subr.bf16.mxu0 %v2865
      %2949 = vmatpush1.bf16.msra.mxu0 %v2864
      %2950 = vmatprep.subr.bf16.mxu0 0
      %2951 = vmatpush1.bf16.msra.mxu0 0
      %2952 = vmatprep.subr.bf16.mxu0 0
      %2953 = vmatpush1.bf16.msra.mxu0 0
      %2954 = vmatprep.subr.bf16.mxu0 0
      %2955 = vmatpush1.bf16.msra.mxu0 0
      %2956 = vmatprep.subr.bf16.mxu0 0
      %2957 = vmatpush1.bf16.msra.mxu0 0
      %2958 = vmatprep.subr.bf16.mxu0 0
      %2959 = vmatpush1.bf16.msra.mxu0 0
      %2960 = vmatprep.subr.bf16.mxu0 0
      %2961 = vmatpush1.bf16.msra.mxu0 0
      %2962 = vmatprep.subr.bf16.mxu0 0
      %2963 = vmatpush1.bf16.msra.mxu0 0
      %2964 = vmatprep.subr.bf16.mxu0 0
      %2965 = vmatpush1.bf16.msra.mxu0 0
      %2966 = vmatprep.subr.bf16.mxu0 0
      %2967 = vmatpush1.bf16.msra.mxu0 0
      %2968 = vmatprep.subr.bf16.mxu0 0
      %2969 = vmatpush1.bf16.msra.mxu0 0
      %2970 = vmatprep.subr.bf16.mxu0 0
      %2971 = vmatpush1.bf16.msra.mxu0 0
      %2972 = vmatprep.subr.bf16.mxu0 0
      %2973 = vmatpush1.bf16.msra.mxu0 0
      %2974 = vmatprep.mubr.bf16.mxu0 0
      %2975 = vmatmul.mubr.bf16.gmra.mrb[0].mxu0 %v2940
      %v2976 = vpop.f32.mrb[0].mxu0
      %v2977 = vadd.f32 0.0, %v2976
      %v2978 = vpop.f32.mrb[0].mxu0
      %v2979 = vadd.f32 0.0, %v2978
      %v2980 = vpop.f32.mrb[0].mxu0
      %v2981 = vpop.f32.mrb[0].mxu0
      %2982 = vdwg.mxu0
      %2983 = vrot.lane.b32.xlu0 %v2977, 16
      %v2984 = vpop.permute.xlu0 %2983
      %2985 = vrot.lane.b32.xlu0 %v2979, 16
      %v2986 = vpop.permute.xlu0 %2985
      %vm2987 = vcmp.lt.s32.totalorder %v2917, 16
      %v2988 = vsel %vm2987, %v2984, %v2986
      %v2989 = vsel %vm2987, %v2986, %v2984
      %s2990 = scalar_lea.vmem %s7, 2
      %v2991 = vld [vmem:[%s2990] sm:$0x3]
      %v2993 = vlaneseq
      %v2994 = vshrl.u32 %v2993, 7
      %v2995 = vsub.s32 0, %v2994
      %v2996 = vrot.slane %v2991, %v2995
      %v2997 = vlaneseq
      %v2998 = vshrl.u32 %v2997, 7
      %v2999 = vsub.s32 1, %v2998
      %v3000 = vrot.slane %v2991, %v2999
      %v3003 = vmul.f32 %v2989, %v2996
      %v3004 = vmul.f32 %v2988, %v3000
      %v3005 = vadd.f32 %v2935, %v3003
      %v3006 = vadd.f32 %v2936, %v3004
      %s3007 = scalar_lea.vmem %s5, 4
      %v3008 = vld [vmem:[%s3007] sm:$0x3]
      %v3010 = vsel %vm2867, %v3008, 0
      %3012 = vmatprep.subr.bf16.mxu0 %v2859
      %3013 = vmatpush1.bf16.msra.mxu0 %v2858
      %3014 = vmatprep.subr.bf16.mxu0 %v2861
      %3015 = vmatpush1.bf16.msra.mxu0 %v2860
      %3016 = vmatprep.subr.bf16.mxu0 %v2863
      %3017 = vmatpush1.bf16.msra.mxu0 %v2862
      %3018 = vmatprep.subr.bf16.mxu0 %v2865
      %3019 = vmatpush1.bf16.msra.mxu0 %v2864
      %3020 = vmatprep.subr.bf16.mxu0 0
      %3021 = vmatpush1.bf16.msra.mxu0 0
      %3022 = vmatprep.subr.bf16.mxu0 0
      %3023 = vmatpush1.bf16.msra.mxu0 0
      %3024 = vmatprep.subr.bf16.mxu0 0
      %3025 = vmatpush1.bf16.msra.mxu0 0
      %3026 = vmatprep.subr.bf16.mxu0 0
      %3027 = vmatpush1.bf16.msra.mxu0 0
      %3028 = vmatprep.subr.bf16.mxu0 0
      %3029 = vmatpush1.bf16.msra.mxu0 0
      %3030 = vmatprep.subr.bf16.mxu0 0
      %3031 = vmatpush1.bf16.msra.mxu0 0
      %3032 = vmatprep.subr.bf16.mxu0 0
      %3033 = vmatpush1.bf16.msra.mxu0 0
      %3034 = vmatprep.subr.bf16.mxu0 0
      %3035 = vmatpush1.bf16.msra.mxu0 0
      %3036 = vmatprep.subr.bf16.mxu0 0
      %3037 = vmatpush1.bf16.msra.mxu0 0
      %3038 = vmatprep.subr.bf16.mxu0 0
      %3039 = vmatpush1.bf16.msra.mxu0 0
      %3040 = vmatprep.subr.bf16.mxu0 0
      %3041 = vmatpush1.bf16.msra.mxu0 0
      %3042 = vmatprep.subr.bf16.mxu0 0
      %3043 = vmatpush1.bf16.msra.mxu0 0
      %3044 = vmatprep.mubr.bf16.mxu0 0
      %3045 = vmatmul.mubr.bf16.gmra.mrb[0].mxu0 %v3010
      %v3046 = vpop.f32.mrb[0].mxu0
      %v3047 = vadd.f32 0.0, %v3046
      %v3048 = vpop.f32.mrb[0].mxu0
      %v3049 = vadd.f32 0.0, %v3048
      %v3050 = vpop.f32.mrb[0].mxu0
      %v3051 = vpop.f32.mrb[0].mxu0
      %3052 = vdwg.mxu0
      %3053 = vrot.lane.b32.xlu0 %v3047, 15
      %v3054 = vpop.permute.xlu0 %3053
      %3055 = vrot.lane.b32.xlu0 %v3049, 15
      %v3056 = vpop.permute.xlu0 %3055
      %vm3057 = vcmp.lt.s32.totalorder %v2917, 15
      %v3058 = vsel %vm3057, %v3054, %v3056
      %v3059 = vsel %vm3057, %v3056, %v3054
      %s3060 = scalar_lea.vmem %s7, 4
      %v3061 = vld [vmem:[%s3060] sm:$0x3]
      %v3063 = vlaneseq
      %v3064 = vshrl.u32 %v3063, 7
      %v3065 = vsub.s32 0, %v3064
      %v3066 = vrot.slane %v3061, %v3065
      %v3067 = vlaneseq
      %v3068 = vshrl.u32 %v3067, 7
      %v3069 = vsub.s32 1, %v3068
      %v3070 = vrot.slane %v3061, %v3069
      %v3073 = vmul.f32 %v3059, %v3066
      %v3074 = vmul.f32 %v3058, %v3070
      %v3075 = vadd.f32 %v3005, %v3073
      %v3076 = vadd.f32 %v3006, %v3074
      %s3077 = scalar_lea.vmem %s5, 6
      %v3078 = vld [vmem:[%s3077] sm:$0x3]
      %v3080 = vsel %vm2867, %v3078, 0
      %3082 = vmatprep.subr.bf16.mxu0 %v2859
      %3083 = vmatpush1.bf16.msra.mxu0 %v2858
      %3084 = vmatprep.subr.bf16.mxu0 %v2861
      %3085 = vmatpush1.bf16.msra.mxu0 %v2860
      %3086 = vmatprep.subr.bf16.mxu0 %v2863
      %3087 = vmatpush1.bf16.msra.mxu0 %v2862
      %3088 = vmatprep.subr.bf16.mxu0 %v2865
      %3089 = vmatpush1.bf16.msra.mxu0 %v2864
      %3090 = vmatprep.subr.bf16.mxu0 0
      %3091 = vmatpush1.bf16.msra.mxu0 0
      %3092 = vmatprep.subr.bf16.mxu0 0
      %3093 = vmatpush1.bf16.msra.mxu0 0
      %3094 = vmatprep.subr.bf16.mxu0 0
      %3095 = vmatpush1.bf16.msra.mxu0 0
      %3096 = vmatprep.subr.bf16.mxu0 0
      %3097 = vmatpush1.bf16.msra.mxu0 0
      %3098 = vmatprep.subr.bf16.mxu0 0
      %3099 = vmatpush1.bf16.msra.mxu0 0
      %3100 = vmatprep.subr.bf16.mxu0 0
      %3101 = vmatpush1.bf16.msra.mxu0 0
      %3102 = vmatprep.subr.bf16.mxu0 0
      %3103 = vmatpush1.bf16.msra.mxu0 0
      %3104 = vmatprep.subr.bf16.mxu0 0
      %3105 = vmatpush1.bf16.msra.mxu0 0
      %3106 = vmatprep.subr.bf16.mxu0 0
      %3107 = vmatpush1.bf16.msra.mxu0 0
      %3108 = vmatprep.subr.bf16.mxu0 0
      %3109 = vmatpush1.bf16.msra.mxu0 0
      %3110 = vmatprep.subr.bf16.mxu0 0
      %3111 = vmatpush1.bf16.msra.mxu0 0
      %3112 = vmatprep.subr.bf16.mxu0 0
      %3113 = vmatpush1.bf16.msra.mxu0 0
      %3114 = vmatprep.mubr.bf16.mxu0 0
      %3115 = vmatmul.mubr.bf16.gmra.mrb[0].mxu0 %v3080
      %v3116 = vpop.f32.mrb[0].mxu0
      %v3117 = vadd.f32 0.0, %v3116
      %v3118 = vpop.f32.mrb[0].mxu0
      %v3119 = vadd.f32 0.0, %v3118
      %v3120 = vpop.f32.mrb[0].mxu0
      %v3121 = vpop.f32.mrb[0].mxu0
      %3122 = vdwg.mxu0
      %3123 = vrot.lane.b32.xlu0 %v3117, 1
      %v3124 = vpop.permute.xlu0 %3123
      %3125 = vrot.lane.b32.xlu0 %v3119, 1
      %v3126 = vpop.permute.xlu0 %3125
      %vm3127 = vcmp.lt.s32.totalorder %v2917, 1
      %v3128 = vsel %vm3127, %v3124, %v3126
      %v3129 = vsel %vm3127, %v3126, %v3124
      %s3130 = scalar_lea.vmem %s7, 6
      %v3131 = vld [vmem:[%s3130] sm:$0x3]
      %v3133 = vlaneseq
      %v3134 = vshrl.u32 %v3133, 7
      %v3135 = vsub.s32 0, %v3134
      %v3136 = vrot.slane %v3131, %v3135
      %v3137 = vlaneseq
      %v3138 = vshrl.u32 %v3137, 7
      %v3139 = vsub.s32 1, %v3138
      %v3140 = vrot.slane %v3131, %v3139
      %v3143 = vmul.f32 %v3129, %v3136
      %v3144 = vmul.f32 %v3128, %v3140
      %v3145 = vadd.f32 %v3075, %v3143
      %v3146 = vadd.f32 %v3076, %v3144
      %s3147 = scalar_lea.vmem %s5, 8
      %v3148 = vld [vmem:[%s3147] sm:$0x3]
      %v3150 = vsel %vm2867, %v3148, 0
      %3152 = vmatprep.subr.bf16.mxu0 %v2859
      %3153 = vmatpush1.bf16.msra.mxu0 %v2858
      %3154 = vmatprep.subr.bf16.mxu0 %v2861
      %3155 = vmatpush1.bf16.msra.mxu0 %v2860
      %3156 = vmatprep.subr.bf16.mxu0 %v2863
      %3157 = vmatpush1.bf16.msra.mxu0 %v2862
      %3158 = vmatprep.subr.bf16.mxu0 %v2865
      %3159 = vmatpush1.bf16.msra.mxu0 %v2864
      %3160 = vmatprep.subr.bf16.mxu0 0
      %3161 = vmatpush1.bf16.msra.mxu0 0
      %3162 = vmatprep.subr.bf16.mxu0 0
      %3163 = vmatpush1.bf16.msra.mxu0 0
      %3164 = vmatprep.subr.bf16.mxu0 0
      %3165 = vmatpush1.bf16.msra.mxu0 0
      %3166 = vmatprep.subr.bf16.mxu0 0
      %3167 = vmatpush1.bf16.msra.mxu0 0
      %3168 = vmatprep.subr.bf16.mxu0 0
      %3169 = vmatpush1.bf16.msra.mxu0 0
      %3170 = vmatprep.subr.bf16.mxu0 0
      %3171 = vmatpush1.bf16.msra.mxu0 0
      %3172 = vmatprep.subr.bf16.mxu0 0
      %3173 = vmatpush1.bf16.msra.mxu0 0
      %3174 = vmatprep.subr.bf16.mxu0 0
      %3175 = vmatpush1.bf16.msra.mxu0 0
      %3176 = vmatprep.subr.bf16.mxu0 0
      %3177 = vmatpush1.bf16.msra.mxu0 0
      %3178 = vmatprep.subr.bf16.mxu0 0
      %3179 = vmatpush1.bf16.msra.mxu0 0
      %3180 = vmatprep.subr.bf16.mxu0 0
      %3181 = vmatpush1.bf16.msra.mxu0 0
      %3182 = vmatprep.subr.bf16.mxu0 0
      %3183 = vmatpush1.bf16.msra.mxu0 0
      %3184 = vmatprep.mubr.bf16.mxu0 0
      %3185 = vmatmul.mubr.bf16.gmra.mrb[0].mxu0 %v3150
      %v3186 = vpop.f32.mrb[0].mxu0
      %v3187 = vadd.f32 0.0, %v3186
      %v3188 = vpop.f32.mrb[0].mxu0
      %v3189 = vadd.f32 0.0, %v3188
      %v3190 = vpop.f32.mrb[0].mxu0
      %v3191 = vpop.f32.mrb[0].mxu0
      %3192 = vdwg.mxu0
      %v3193 = vadd.f32 %v3145, %v3187
      %v3194 = vadd.f32 %v3146, %v3189
      %s3195 = scalar_lea.vmem %s5, 10
      %v3196 = vld [vmem:[%s3195] sm:$0x3]
      %v3198 = vsel %vm2867, %v3196, 0
      %3200 = vmatprep.subr.bf16.mxu0 %v2859
      %3201 = vmatpush1.bf16.msra.mxu0 %v2858
      %3202 = vmatprep.subr.bf16.mxu0 %v2861
      %3203 = vmatpush1.bf16.msra.mxu0 %v2860
      %3204 = vmatprep.subr.bf16.mxu0 %v2863
      %3205 = vmatpush1.bf16.msra.mxu0 %v2862
      %3206 = vmatprep.subr.bf16.mxu0 %v2865
      %3207 = vmatpush1.bf16.msra.mxu0 %v2864
      %3208 = vmatprep.subr.bf16.mxu0 0
      %3209 = vmatpush1.bf16.msra.mxu0 0
      %3210 = vmatprep.subr.bf16.mxu0 0
      %3211 = vmatpush1.bf16.msra.mxu0 0
      %3212 = vmatprep.subr.bf16.mxu0 0
      %3213 = vmatpush1.bf16.msra.mxu0 0
      %3214 = vmatprep.subr.bf16.mxu0 0
      %3215 = vmatpush1.bf16.msra.mxu0 0
      %3216 = vmatprep.subr.bf16.mxu0 0
      %3217 = vmatpush1.bf16.msra.mxu0 0
      %3218 = vmatprep.subr.bf16.mxu0 0
      %3219 = vmatpush1.bf16.msra.mxu0 0
      %3220 = vmatprep.subr.bf16.mxu0 0
      %3221 = vmatpush1.bf16.msra.mxu0 0
      %3222 = vmatprep.subr.bf16.mxu0 0
      %3223 = vmatpush1.bf16.msra.mxu0 0
      %3224 = vmatprep.subr.bf16.mxu0 0
      %3225 = vmatpush1.bf16.msra.mxu0 0
      %3226 = vmatprep.subr.bf16.mxu0 0
      %3227 = vmatpush1.bf16.msra.mxu0 0
      %3228 = vmatprep.subr.bf16.mxu0 0
      %3229 = vmatpush1.bf16.msra.mxu0 0
      %3230 = vmatprep.subr.bf16.mxu0 0
      %3231 = vmatpush1.bf16.msra.mxu0 0
      %3232 = vmatprep.mubr.bf16.mxu0 0
      %3233 = vmatmul.mubr.bf16.gmra.mrb[0].mxu0 %v3198
      %v3234 = vpop.f32.mrb[0].mxu0
      %v3235 = vadd.f32 0.0, %v3234
      %v3236 = vpop.f32.mrb[0].mxu0
      %v3237 = vadd.f32 0.0, %v3236
      %v3238 = vpop.f32.mrb[0].mxu0
      %v3239 = vpop.f32.mrb[0].mxu0
      %3240 = vdwg.mxu0
      %3241 = vrot.lane.b32.xlu0 %v3235, 127
      %v3242 = vpop.permute.xlu0 %3241
      %3243 = vrot.lane.b32.xlu0 %v3237, 127
      %v3244 = vpop.permute.xlu0 %3243
      %vm3245 = vcmp.lt.s32.totalorder %v2917, 127
      %v3246 = vsel %vm3245, %v3242, %v3244
      %v3247 = vsel %vm3245, %v3244, %v3242
      %s3248 = scalar_lea.vmem %s7, 10
      %v3249 = vld [vmem:[%s3248] sm:$0x3]
      %v3251 = vlaneseq
      %v3252 = vshrl.u32 %v3251, 7
      %v3253 = vsub.s32 0, %v3252
      %v3254 = vrot.slane %v3249, %v3253
      %v3255 = vlaneseq
      %v3256 = vshrl.u32 %v3255, 7
      %v3257 = vsub.s32 1, %v3256
      %v3258 = vrot.slane %v3249, %v3257
      %v3261 = vmul.f32 %v3246, %v3254
      %v3262 = vmul.f32 %v3247, %v3258
      %v3263 = vadd.f32 %v3193, %v3261
      %v3264 = vadd.f32 %v3194, %v3262
      %s3265 = scalar_lea.vmem %s5, 12
      %v3266 = vld [vmem:[%s3265] sm:$0x3]
      %v3268 = vsel %vm2867, %v3266, 0
      %3270 = vmatprep.subr.bf16.mxu0 %v2859
      %3271 = vmatpush1.bf16.msra.mxu0 %v2858
      %3272 = vmatprep.subr.bf16.mxu0 %v2861
      %3273 = vmatpush1.bf16.msra.mxu0 %v2860
      %3274 = vmatprep.subr.bf16.mxu0 %v2863
      %3275 = vmatpush1.bf16.msra.mxu0 %v2862
      %3276 = vmatprep.subr.bf16.mxu0 %v2865
      %3277 = vmatpush1.bf16.msra.mxu0 %v2864
      %3278 = vmatprep.subr.bf16.mxu0 0
      %3279 = vmatpush1.bf16.msra.mxu0 0
      %3280 = vmatprep.subr.bf16.mxu0 0
      %3281 = vmatpush1.bf16.msra.mxu0 0
      %3282 = vmatprep.subr.bf16.mxu0 0
      %3283 = vmatpush1.bf16.msra.mxu0 0
      %3284 = vmatprep.subr.bf16.mxu0 0
      %3285 = vmatpush1.bf16.msra.mxu0 0
      %3286 = vmatprep.subr.bf16.mxu0 0
      %3287 = vmatpush1.bf16.msra.mxu0 0
      %3288 = vmatprep.subr.bf16.mxu0 0
      %3289 = vmatpush1.bf16.msra.mxu0 0
      %3290 = vmatprep.subr.bf16.mxu0 0
      %3291 = vmatpush1.bf16.msra.mxu0 0
      %3292 = vmatprep.subr.bf16.mxu0 0
      %3293 = vmatpush1.bf16.msra.mxu0 0
      %3294 = vmatprep.subr.bf16.mxu0 0
      %3295 = vmatpush1.bf16.msra.mxu0 0
      %3296 = vmatprep.subr.bf16.mxu0 0
      %3297 = vmatpush1.bf16.msra.mxu0 0
      %3298 = vmatprep.subr.bf16.mxu0 0
      %3299 = vmatpush1.bf16.msra.mxu0 0
      %3300 = vmatprep.subr.bf16.mxu0 0
      %3301 = vmatpush1.bf16.msra.mxu0 0
      %3302 = vmatprep.mubr.bf16.mxu0 0
      %3303 = vmatmul.mubr.bf16.gmra.mrb[0].mxu0 %v3268
      %v3304 = vpop.f32.mrb[0].mxu0
      %v3305 = vadd.f32 0.0, %v3304
      %v3306 = vpop.f32.mrb[0].mxu0
      %v3307 = vadd.f32 0.0, %v3306
      %v3308 = vpop.f32.mrb[0].mxu0
      %v3309 = vpop.f32.mrb[0].mxu0
      %3310 = vdwg.mxu0
      %3311 = vrot.lane.b32.xlu0 %v3305, 113
      %v3312 = vpop.permute.xlu0 %3311
      %3313 = vrot.lane.b32.xlu0 %v3307, 113
      %v3314 = vpop.permute.xlu0 %3313
      %vm3315 = vcmp.lt.s32.totalorder %v2917, 113
      %v3316 = vsel %vm3315, %v3312, %v3314
      %v3317 = vsel %vm3315, %v3314, %v3312
      %s3318 = scalar_lea.vmem %s7, 12
      %v3319 = vld [vmem:[%s3318] sm:$0x3]
      %v3321 = vlaneseq
      %v3322 = vshrl.u32 %v3321, 7
      %v3323 = vsub.s32 0, %v3322
      %v3324 = vrot.slane %v3319, %v3323
      %v3325 = vlaneseq
      %v3326 = vshrl.u32 %v3325, 7
      %v3327 = vsub.s32 1, %v3326
      %v3328 = vrot.slane %v3319, %v3327
      %v3331 = vmul.f32 %v3316, %v3324
      %v3332 = vmul.f32 %v3317, %v3328
      %v3333 = vadd.f32 %v3263, %v3331
      %v3334 = vadd.f32 %v3264, %v3332
      %s3335 = scalar_lea.vmem %s5, 14
      %v3336 = vld [vmem:[%s3335] sm:$0x3]
      %v3338 = vsel %vm2867, %v3336, 0
      %3340 = vmatprep.subr.bf16.mxu0 %v2859
      %3341 = vmatpush1.bf16.msra.mxu0 %v2858
      %3342 = vmatprep.subr.bf16.mxu0 %v2861
      %3343 = vmatpush1.bf16.msra.mxu0 %v2860
      %3344 = vmatprep.subr.bf16.mxu0 %v2863
      %3345 = vmatpush1.bf16.msra.mxu0 %v2862
      %3346 = vmatprep.subr.bf16.mxu0 %v2865
      %3347 = vmatpush1.bf16.msra.mxu0 %v2864
      %3348 = vmatprep.subr.bf16.mxu0 0
      %3349 = vmatpush1.bf16.msra.mxu0 0
      %3350 = vmatprep.subr.bf16.mxu0 0
      %3351 = vmatpush1.bf16.msra.mxu0 0
      %3352 = vmatprep.subr.bf16.mxu0 0
      %3353 = vmatpush1.bf16.msra.mxu0 0
      %3354 = vmatprep.subr.bf16.mxu0 0
      %3355 = vmatpush1.bf16.msra.mxu0 0
      %3356 = vmatprep.subr.bf16.mxu0 0
      %3357 = vmatpush1.bf16.msra.mxu0 0
      %3358 = vmatprep.subr.bf16.mxu0 0
      %3359 = vmatpush1.bf16.msra.mxu0 0
      %3360 = vmatprep.subr.bf16.mxu0 0
      %3361 = vmatpush1.bf16.msra.mxu0 0
      %3362 = vmatprep.subr.bf16.mxu0 0
      %3363 = vmatpush1.bf16.msra.mxu0 0
      %3364 = vmatprep.subr.bf16.mxu0 0
      %3365 = vmatpush1.bf16.msra.mxu0 0
      %3366 = vmatprep.subr.bf16.mxu0 0
      %3367 = vmatpush1.bf16.msra.mxu0 0
      %3368 = vmatprep.subr.bf16.mxu0 0
      %3369 = vmatpush1.bf16.msra.mxu0 0
      %3370 = vmatprep.subr.bf16.mxu0 0
      %3371 = vmatpush1.bf16.msra.mxu0 0
      %3372 = vmatprep.mubr.bf16.mxu0 0
      %3373 = vmatmul.mubr.bf16.gmra.mrb[0].mxu0 %v3338
      %v3374 = vpop.f32.mrb[0].mxu0
      %v3375 = vadd.f32 0.0, %v3374
      %v3376 = vpop.f32.mrb[0].mxu0
      %v3377 = vadd.f32 0.0, %v3376
      %v3378 = vpop.f32.mrb[0].mxu0
      %v3379 = vpop.f32.mrb[0].mxu0
      %3380 = vdwg.mxu0
      %3381 = vrot.lane.b32.xlu0 %v3375, 112
      %v3382 = vpop.permute.xlu0 %3381
      %3383 = vrot.lane.b32.xlu0 %v3377, 112
      %v3384 = vpop.permute.xlu0 %3383
      %vm3385 = vcmp.lt.s32.totalorder %v2917, 112
      %v3386 = vsel %vm3385, %v3382, %v3384
      %v3387 = vsel %vm3385, %v3384, %v3382
      %s3388 = scalar_lea.vmem %s7, 14
      %v3389 = vld [vmem:[%s3388] sm:$0x3]
      %v3391 = vlaneseq
      %v3392 = vshrl.u32 %v3391, 7
      %v3393 = vsub.s32 0, %v3392
      %v3394 = vrot.slane %v3389, %v3393
      %v3395 = vlaneseq
      %v3396 = vshrl.u32 %v3395, 7
      %v3397 = vsub.s32 1, %v3396
      %v3398 = vrot.slane %v3389, %v3397
      %v3401 = vmul.f32 %v3386, %v3394
      %v3402 = vmul.f32 %v3387, %v3398
      %v3403 = vadd.f32 %v3333, %v3401
      %v3404 = vadd.f32 %v3334, %v3402
      %s3405 = scalar_lea.vmem %s5, 16
      %v3406 = vld [vmem:[%s3405] sm:$0x3]
      %v3408 = vsel %vm2867, %v3406, 0
      %3410 = vmatprep.subr.bf16.mxu0 %v2859
      %3411 = vmatpush1.bf16.msra.mxu0 %v2858
      %3412 = vmatprep.subr.bf16.mxu0 %v2861
      %3413 = vmatpush1.bf16.msra.mxu0 %v2860
      %3414 = vmatprep.subr.bf16.mxu0 %v2863
      %3415 = vmatpush1.bf16.msra.mxu0 %v2862
      %3416 = vmatprep.subr.bf16.mxu0 %v2865
      %3417 = vmatpush1.bf16.msra.mxu0 %v2864
      %3418 = vmatprep.subr.bf16.mxu0 0
      %3419 = vmatpush1.bf16.msra.mxu0 0
      %3420 = vmatprep.subr.bf16.mxu0 0
      %3421 = vmatpush1.bf16.msra.mxu0 0
      %3422 = vmatprep.subr.bf16.mxu0 0
      %3423 = vmatpush1.bf16.msra.mxu0 0
      %3424 = vmatprep.subr.bf16.mxu0 0
      %3425 = vmatpush1.bf16.msra.mxu0 0
      %3426 = vmatprep.subr.bf16.mxu0 0
      %3427 = vmatpush1.bf16.msra.mxu0 0
      %3428 = vmatprep.subr.bf16.mxu0 0
      %3429 = vmatpush1.bf16.msra.mxu0 0
      %3430 = vmatprep.subr.bf16.mxu0 0
      %3431 = vmatpush1.bf16.msra.mxu0 0
      %3432 = vmatprep.subr.bf16.mxu0 0
      %3433 = vmatpush1.bf16.msra.mxu0 0
      %3434 = vmatprep.subr.bf16.mxu0 0
      %3435 = vmatpush1.bf16.msra.mxu0 0
      %3436 = vmatprep.subr.bf16.mxu0 0
      %3437 = vmatpush1.bf16.msra.mxu0 0
      %3438 = vmatprep.subr.bf16.mxu0 0
      %3439 = vmatpush1.bf16.msra.mxu0 0
      %3440 = vmatprep.subr.bf16.mxu0 0
      %3441 = vmatpush1.bf16.msra.mxu0 0
      %3442 = vmatprep.mubr.bf16.mxu0 0
      %3443 = vmatmul.mubr.bf16.gmra.mrb[0].mxu0 %v3408
      %v3444 = vpop.f32.mrb[0].mxu0
      %v3445 = vadd.f32 0.0, %v3444
      %v3446 = vpop.f32.mrb[0].mxu0
      %v3447 = vadd.f32 0.0, %v3446
      %v3448 = vpop.f32.mrb[0].mxu0
      %v3449 = vpop.f32.mrb[0].mxu0
      %3450 = vdwg.mxu0
      %3451 = vrot.lane.b32.xlu0 %v3445, 111
      %v3452 = vpop.permute.xlu0 %3451
      %3453 = vrot.lane.b32.xlu0 %v3447, 111
      %v3454 = vpop.permute.xlu0 %3453
      %vm3455 = vcmp.lt.s32.totalorder %v2917, 111
      %v3456 = vsel %vm3455, %v3452, %v3454
      %v3457 = vsel %vm3455, %v3454, %v3452
      %s3458 = scalar_lea.vmem %s7, 16
      %v3459 = vld [vmem:[%s3458] sm:$0x3]
      %v3461 = vlaneseq
      %v3462 = vshrl.u32 %v3461, 7
      %v3463 = vsub.s32 0, %v3462
      %v3464 = vrot.slane %v3459, %v3463
      %v3465 = vlaneseq
      %v3466 = vshrl.u32 %v3465, 7
      %v3467 = vsub.s32 1, %v3466
      %v3468 = vrot.slane %v3459, %v3467
      %v3471 = vmul.f32 %v3456, %v3464
      %v3472 = vmul.f32 %v3457, %v3468
      %v3473 = vadd.f32 %v3403, %v3471
      %v3474 = vadd.f32 %v3404, %v3472
      %v3475 = vld [vmem:[%s6] sm:$0x7]
      %3477 = vset.pattern.permute.xlu0 0
      %3478 = vperm.xlu0 %3477, %v3475
      %v3479 = vpop.permute.xlu0 %3478
      %v3481 = vadd.f32 %v3473, %v3479
      %v3482 = vadd.f32 %v3474, %v3479
      %v3485 = vcombine.low %v3481, %v3482
      %3487 = vst [vmem:[%s305] sm:$0x77] %v3485
      %p3488 = scmp.lt.s32.totalorder %s19, 1
      %s3489 = scalar_select %p3488, %s19, 1
      %s3490 = smul.addr %s3489, 2
      %s3491 = smul.addr %s3490, 4
      %s3492 = scalar_lea.vmem %s8, %s3491
      // Predicated region
      $region53: #{lift_project_block.1} parent=51 // pred_check
        %p3493 = pneg %p210
      $region54: #{lift_project_block.1} parent=51 // pred_check_branch
        %3495 = sbr.rel (%p3493) target = $region56
      $region55: #{lift_project_block.1} parent=51 // pred_region
        _
      $region56: #{lift_project_block.1} parent=51 // pred_fallthru
        _
    $region52: #{lift_project_block.1} parent=5 // pred_fallthru
      _
    %p3496 = scmp.le.s32.totalorder 2, %s14
    // Predicated region
    $region57: #{lift_project_block.1} parent=5 // pred_check
      %p3497 = pneg %p3496
    $region58: #{lift_project_block.1} parent=5 // pred_check_branch
      %3499 = sbr.rel (%p3497) target = $region60
    $region59: #{lift_project_block.1} parent=5 // pred_region
      %s3500 = ssub.s32 %s14, 2
      // Predicated region
      $region61: #{lift_project_block.1} parent=59 // pred_check
        %p3501 = pneg %p216
      $region62: #{lift_project_block.1} parent=59 // pred_check_branch
        %3503 = sbr.rel (%p3501) target = $region64
      $region63: #{lift_project_block.1} parent=59 // pred_region
        %p3504 = scmp.lt.s32.totalorder %s20, 1
        %s3505 = scalar_select %p3504, %s20, 1
        %s3506 = smul.addr %s3505, 2
        %s3507 = smul.addr %s3506, 4
        %s3508 = scalar_lea.vmem %s8, %s3507
      $region64: #{lift_project_block.1} parent=59 // pred_fallthru
        _
    $region60: #{lift_project_block.1} parent=5 // pred_fallthru
      _
  $region6: #{lift_project_block.1} parent=0 // loop_footer
    %s18 = sadd.s32 1, %s14
  $region7: #{lift_project_block.1} parent=0 // loop_footer_branch
    %13 = sbr.rel target = $region3
  $region8: #{lift_project_block.1} parent=0 // loop_exit
    _

</llo_original>
